<compile_context>
chip_gen: v5e
topology: v5e:2x2
jax: 0.10.0
libtpu: 0.0.40
codegen_flags: <defaults>
</compile_context>

<pallas_src>
import functools

import jax
import jax.numpy as jnp
from jax.experimental import pallas as pl
from jax.experimental.pallas import tpu as pltpu

IN_DIM = 6400
HID_DIM = 200
HID_PAD = 256    # hidden padded to an MXU/lane-aligned width (zero pad, exact)
OUT_DIM = 3
OUT_PAD = 128    # lane-dense padded width for the (200 -> 3) output head


def policy_kernel(x_ref, w1_ref, b1_ref, w2_ref, b2_ref, out_ref, *, total_rows):
    tb = out_ref.shape[0]

    # ---- affine1: (TB, 6400) @ (6400, 256) + b1 ----
    # Cast the streamed x tile to bf16 for a single-pass MXU matmul; accumulate
    # in f32.  (Feeding x as bf16 from the caller also halves its HBM traffic.)
    xb = x_ref[...].astype(jnp.bfloat16)
    h = jnp.dot(xb, w1_ref[...], preferred_element_type=jnp.float32)
    h = h + b1_ref[...]

    # ---- dropout(p=0.6): identity in eval mode ----
    # TODO(synk): train-mode dropout (Bernoulli mask via pltpu.prng_*) not emitted.

    # ---- relu (f32) ----
    h = jnp.maximum(h, 0.0)

    # ---- affine2: (TB, 256) @ (256, 128-padded) + b2 ----
    scores = jnp.dot(h.astype(jnp.bfloat16), w2_ref[...],
                     preferred_element_type=jnp.float32)
    scores = scores + b2_ref[...]

    # ---- softmax over dim=1 ----
    # Mask (a) lanes beyond the real 3-wide head and (b) rows of a ragged last
    # batch tile that lie beyond the true batch size (those VMEM rows may hold
    # garbage; Pallas discards their output writes, but we keep them finite).
    col = jax.lax.broadcasted_iota(jnp.int32, scores.shape, 1)
    row = (jax.lax.broadcasted_iota(jnp.int32, scores.shape, 0)
           + pl.program_id(0) * tb)
    valid = jnp.logical_and(col < OUT_DIM, row < total_rows)
    scores = jnp.where(valid, scores, -1e30)
    m = jnp.max(scores, axis=1, keepdims=True)
    e = jnp.exp(scores - m)                      # masked lanes underflow to 0
    denom = jnp.sum(e, axis=1, keepdims=True)
    out_ref[...] = e * pl.reciprocal(denom, approx=True)


def prepare_params(w1, b1, w2, b2):
    """One-time parameter prep (do at model-setup time, not per forward):
      * zero-pad hidden 200 -> 256 (numerically exact: padded units stay 0
        through ReLU and multiply zero rows of W2),
      * pad the 3-wide head to a lane-dense 128,
      * store the matmul weights in bf16 (halves W1 DMA + VMEM),
      * keep biases in f32 (bias add / softmax stay f32)."""
    w1p = (jnp.zeros((IN_DIM, HID_PAD), jnp.float32)
           .at[:, :HID_DIM].set(w1).astype(jnp.bfloat16))
    b1p = jnp.zeros((1, HID_PAD), jnp.float32).at[:, :HID_DIM].set(b1)
    w2p = (jnp.zeros((HID_PAD, OUT_PAD), jnp.float32)
           .at[:HID_DIM, :OUT_DIM].set(w2).astype(jnp.bfloat16))
    b2p = jnp.zeros((1, OUT_PAD), jnp.float32).at[:, :OUT_DIM].set(b2)
    return w1p, b1p, w2p, b2p


def _tile_budget():
    """Pick (max batch tile, vmem_limit_bytes) from the chip's VMEM capacity.
    v5e/v6e have 128 MiB per TensorCore -> big tiles; v7x has 64 MiB."""
    try:
        vmem = pltpu.get_tpu_info().vmem_capacity_bytes
    except Exception:
        vmem = 64 << 20  # conservative default (v7x per-core VMEM)
    if vmem >= (96 << 20):
        return 512, 56 << 20          # v5e / v6e
    return 384, 40 << 20              # v7x (re-derived for 64 MiB VMEM)


def _pick_tile(B, max_tb):
    if B <= 16:
        return B                      # one tiny whole-batch block (== full dim)
    if B <= max_tb:
        # Split moderate batches into >= 2 grid steps so the "parallel" batch
        # axis can be megacore-sharded on v7x (harmless on 1-TC v5e/v6e).
        return max(8, ((pl.cdiv(B, 2) + 7) // 8) * 8)
    return max_tb


def policy_forward(x, params):
    """x: (B, 6400), f32 or bf16.  params: output of prepare_params.
    Returns (B, 3) f32 softmax probabilities."""
    w1, b1, w2, b2 = params
    B = x.shape[0]
    max_tb, vmem_limit = _tile_budget()
    TB = _pick_tile(B, max_tb)
    n_tiles = pl.cdiv(B, TB)          # ragged last block handled by Pallas

    kernel = functools.partial(policy_kernel, total_rows=B)
    out = pl.pallas_call(
        kernel,
        out_shape=jax.ShapeDtypeStruct((B, OUT_PAD), jnp.float32),
        grid=(n_tiles,),
        in_specs=[
            pl.BlockSpec((TB, IN_DIM), lambda i: (i, 0)),         # x: batch-tiled
            pl.BlockSpec((IN_DIM, HID_PAD), lambda i: (0, 0)),    # W1: resident
            pl.BlockSpec((1, HID_PAD), lambda i: (0, 0)),         # b1: resident
            pl.BlockSpec((HID_PAD, OUT_PAD), lambda i: (0, 0)),   # W2: resident
            pl.BlockSpec((1, OUT_PAD), lambda i: (0, 0)),         # b2: resident
        ],
        out_specs=pl.BlockSpec((TB, OUT_PAD), lambda i: (i, 0)),
        compiler_params=pltpu.CompilerParams(
            dimension_semantics=("parallel",),    # megacore-shard batch on v7x
            vmem_limit_bytes=vmem_limit,
        ),
    )(x, w1, b1, w2, b2)
    return out[:, :OUT_DIM]


def reference_forward_f32(x, w1, b1, w2, b2):
    """Full-precision f32 reference (PyTorch eval-mode semantics)."""
    h = jnp.maximum(
        jnp.dot(x, w1, precision=jax.lax.Precision.HIGHEST) + b1, 0.0)
    s = jnp.dot(h, w2, precision=jax.lax.Precision.HIGHEST) + b2
    return jax.nn.softmax(s, axis=1)


def reference_forward_bf16(x, params):
    """Reference that emulates the kernel's bf16-matmul / f32-accumulate math."""
    w1p, b1p, w2p, b2p = params
    xb = x.astype(jnp.bfloat16)
    h = jnp.dot(xb, w1p, preferred_element_type=jnp.float32) + b1p
    h = jnp.maximum(h, 0.0)
    s = jnp.dot(h.astype(jnp.bfloat16), w2p,
                preferred_element_type=jnp.float32) + b2p
    return jax.nn.softmax(s[:, :OUT_DIM], axis=1)


if __name__ == "__main__":
    key = jax.random.PRNGKey(0)
    kx, k1, kb1, k2, kb2 = jax.random.split(key, 5)

    # Deterministic synthetic parameters (shapes from Policy.__init__),
    # stored as (in_features, out_features).
    w1 = jax.random.normal(k1, (IN_DIM, HID_DIM), dtype=jnp.float32) * 0.01
    b1 = jax.random.normal(kb1, (HID_DIM,), dtype=jnp.float32) * 0.01
    w2 = jax.random.normal(k2, (HID_DIM, OUT_DIM), dtype=jnp.float32) * 0.05
    b2 = jax.random.normal(kb2, (OUT_DIM,), dtype=jnp.float32) * 0.05
    params = prepare_params(w1, b1, w2, b2)

    # Small batch (single whole-batch tile).
    B = 2
    x = jax.random.normal(kx, (B, IN_DIM), dtype=jnp.float32)
    out = jax.block_until_ready(policy_forward(x, params))
    assert out.shape == (B, OUT_DIM)
    ref_bf16 = reference_forward_bf16(x, params)
    ref_f32 = reference_forward_f32(x, w1, b1, w2, b2)
    assert jnp.allclose(out, ref_bf16, atol=2e-2), (out, ref_bf16)
    assert jnp.allclose(out, ref_f32, atol=5e-2), (out, ref_f32)
    assert jnp.allclose(jnp.sum(out, axis=1), 1.0, atol=2e-2)

    # Ragged multi-tile batch (B not a multiple of the tile; no jnp.pad copy).
    B2 = 300
    x2 = jax.random.normal(kx, (B2, IN_DIM), dtype=jnp.float32)
    out2 = jax.block_until_ready(policy_forward(x2, params))
    assert out2.shape == (B2, OUT_DIM)
    ref2_bf16 = reference_forward_bf16(x2, params)
    ref2_f32 = reference_forward_f32(x2, w1, b1, w2, b2)
    assert jnp.allclose(out2, ref2_bf16, atol=2e-2)
    assert jnp.allclose(out2, ref2_f32, atol=5e-2)
    assert jnp.allclose(jnp.sum(out2, axis=1), 1.0, atol=2e-2)

    print("KERNEL_OK")
</pallas_src>

<mosaic_0001>
module attributes {stable_mosaic.version = 11 : i64} {
  func.func @policy_kernel(%arg0: i32, %arg1: memref<2x6400xf32, #tpu.memory_space<vmem>>, %arg2: memref<6400x256xbf16, #tpu.memory_space<vmem>>, %arg3: memref<1x256xf32, #tpu.memory_space<vmem>>, %arg4: memref<256x128xbf16, #tpu.memory_space<vmem>>, %arg5: memref<1x128xf32, #tpu.memory_space<vmem>>, %arg6: memref<2x128xf32, #tpu.memory_space<vmem>>) attributes {dimension_semantics = [#tpu.dimension_semantics<parallel>], iteration_bounds = array<i64: 1>, scalar_prefetch = 0 : i64, scratch_operands = 0 : i64, tpu.core_type = #tpu.core_type<tc>, window_params = [{transform_indices = @transform_0, window_bounds = array<i64: 2, 6400>}, {pipeline_mode = #tpu.pipeline_mode<synchronous>, transform_indices = @transform_1, window_bounds = array<i64: 6400, 256>}, {pipeline_mode = #tpu.pipeline_mode<synchronous>, transform_indices = @transform_2, window_bounds = array<i64: 1, 256>}, {pipeline_mode = #tpu.pipeline_mode<synchronous>, transform_indices = @transform_3, window_bounds = array<i64: 256, 128>}, {pipeline_mode = #tpu.pipeline_mode<synchronous>, transform_indices = @transform_4, window_bounds = array<i64: 1, 128>}, {transform_indices = @transform_5, window_bounds = array<i64: 2, 128>}]} {
    %c0 = arith.constant 0 : index
    %c0_0 = arith.constant 0 : index
    %0 = vector.load %arg1[%c0, %c0_0] : memref<2x6400xf32, #tpu.memory_space<vmem>>, vector<2x6400xf32>
    %1 = arith.truncf %0 : vector<2x6400xf32> to vector<2x6400xbf16>
    %c0_1 = arith.constant 0 : index
    %c0_2 = arith.constant 0 : index
    %2 = vector.load %arg2[%c0_1, %c0_2] : memref<6400x256xbf16, #tpu.memory_space<vmem>>, vector<6400x256xbf16>
    %cst = arith.constant dense<0.000000e+00> : vector<2x256xf32>
    %3 = tpu.matmul %1, %2, %cst {dimension_numbers = #tpu.dot_dimension_numbers<[1], [0], [0], [1], [0, 0, 1, 1], [], []>} : vector<2x6400xbf16>, vector<6400x256xbf16>, vector<2x256xf32> -> vector<2x256xf32>
    %c0_3 = arith.constant 0 : index
    %c0_4 = arith.constant 0 : index
    %4 = vector.load %arg3[%c0_3, %c0_4] : memref<1x256xf32, #tpu.memory_space<vmem>>, vector<1x256xf32>
    %5 = vector.broadcast %4 : vector<1x256xf32> to vector<2x256xf32>
    %6 = arith.addf %3, %5 : vector<2x256xf32>
    %cst_5 = arith.constant 0.000000e+00 : f32
    %7 = vector.broadcast %cst_5 : f32 to vector<2x256xf32>
    %8 = arith.maximumf %6, %7 : vector<2x256xf32>
    %9 = arith.truncf %8 : vector<2x256xf32> to vector<2x256xbf16>
    %c0_6 = arith.constant 0 : index
    %c0_7 = arith.constant 0 : index
    %10 = vector.load %arg4[%c0_6, %c0_7] : memref<256x128xbf16, #tpu.memory_space<vmem>>, vector<256x128xbf16>
    %cst_8 = arith.constant dense<0.000000e+00> : vector<2x128xf32>
    %11 = tpu.matmul %9, %10, %cst_8 {dimension_numbers = #tpu.dot_dimension_numbers<[1], [0], [0], [1], [0, 0, 1, 1], [], []>} : vector<2x256xbf16>, vector<256x128xbf16>, vector<2x128xf32> -> vector<2x128xf32>
    %c0_9 = arith.constant 0 : index
    %c0_10 = arith.constant 0 : index
    %12 = vector.load %arg5[%c0_9, %c0_10] : memref<1x128xf32, #tpu.memory_space<vmem>>, vector<1x128xf32>
    %13 = vector.broadcast %12 : vector<1x128xf32> to vector<2x128xf32>
    %14 = arith.addf %11, %13 : vector<2x128xf32>
    %15 = tpu.iota {dimensions = array<i32: 1>} : vector<2x128xi32>
    %16 = tpu.iota {dimensions = array<i32: 0>} : vector<2x128xi32>
    %c2_i32 = arith.constant 2 : i32
    %17 = arith.muli %arg0, %c2_i32 : i32
    %18 = vector.broadcast %17 : i32 to vector<2x128xi32>
    %19 = arith.addi %16, %18 : vector<2x128xi32>
    %c3_i32 = arith.constant 3 : i32
    %20 = vector.broadcast %c3_i32 : i32 to vector<2x128xi32>
    %21 = arith.cmpi slt, %15, %20 : vector<2x128xi32>
    %c2_i32_11 = arith.constant 2 : i32
    %22 = vector.broadcast %c2_i32_11 : i32 to vector<2x128xi32>
    %23 = arith.cmpi slt, %19, %22 : vector<2x128xi32>
    %24 = arith.andi %21, %23 : vector<2x128xi1>
    %cst_12 = arith.constant -1.000000e+30 : f32
    %25 = vector.broadcast %cst_12 : f32 to vector<2x128xf32>
    %26 = arith.select %24, %14, %25 : vector<2x128xi1>, vector<2x128xf32>
    %cst_13 = arith.constant dense<0xFF800000> : vector<2xf32>
    %27 = vector.multi_reduction <maximumf>, %26, %cst_13 [1] : vector<2x128xf32> to vector<2xf32>
    %28 = vector.shape_cast %27 : vector<2xf32> to vector<2x1xf32>
    %29 = vector.broadcast %28 : vector<2x1xf32> to vector<2x128xf32>
    %30 = arith.subf %26, %29 : vector<2x128xf32>
    %31 = math.exp %30 : vector<2x128xf32>
    %cst_14 = arith.constant dense<0.000000e+00> : vector<2xf32>
    %32 = vector.multi_reduction <add>, %31, %cst_14 [1] : vector<2x128xf32> to vector<2xf32>
    %33 = vector.shape_cast %32 : vector<2xf32> to vector<2x1xf32>
    %34 = tpu.reciprocal %33 {approx = true} : vector<2x1xf32> -> vector<2x1xf32>
    %35 = vector.broadcast %34 : vector<2x1xf32> to vector<2x128xf32>
    %36 = arith.mulf %31, %35 : vector<2x128xf32>
    %c0_15 = arith.constant 0 : index
    %c0_16 = arith.constant 0 : index
    %37 = vector.load %arg6[%c0_15, %c0_16] : memref<2x128xf32, #tpu.memory_space<vmem>>, vector<2x128xf32>
    tpu.vector_store %arg6[%c0_15, %c0_16], %36 {strides = array<i32>} : memref<2x128xf32, #tpu.memory_space<vmem>>, vector<2x128xf32>,
    return
  }
  func.func @transform_0(%arg0: i32) -> (i32, i32) {
    %c0_i32 = arith.constant 0 : i32
    %c0_i32_0 = arith.constant 0 : i32
    return %arg0, %c0_i32 : i32, i32
  }
  func.func @transform_1(%arg0: i32) -> (i32, i32) {
    %c0_i32 = arith.constant 0 : i32
    %c0_i32_0 = arith.constant 0 : i32
    %c0_i32_1 = arith.constant 0 : i32
    return %c0_i32, %c0_i32_0 : i32, i32
  }
  func.func @transform_2(%arg0: i32) -> (i32, i32) {
    %c0_i32 = arith.constant 0 : i32
    %c0_i32_0 = arith.constant 0 : i32
    %c0_i32_1 = arith.constant 0 : i32
    return %c0_i32, %c0_i32_0 : i32, i32
  }
  func.func @transform_3(%arg0: i32) -> (i32, i32) {
    %c0_i32 = arith.constant 0 : i32
    %c0_i32_0 = arith.constant 0 : i32
    %c0_i32_1 = arith.constant 0 : i32
    return %c0_i32, %c0_i32_0 : i32, i32
  }
  func.func @transform_4(%arg0: i32) -> (i32, i32) {
    %c0_i32 = arith.constant 0 : i32
    %c0_i32_0 = arith.constant 0 : i32
    %c0_i32_1 = arith.constant 0 : i32
    return %c0_i32, %c0_i32_0 : i32, i32
  }
  func.func @transform_5(%arg0: i32) -> (i32, i32) {
    %c0_i32 = arith.constant 0 : i32
    %c0_i32_0 = arith.constant 0 : i32
    return %arg0, %c0_i32 : i32, i32
  }
}

</mosaic_0001>

<llo_original>
// kernel: tpu_custom_call.1
$region0: #{tpu_custom_call.1}
  #allocation0 [shape = 'u32[]', space=smem, size = 0x4, offset = 0x4, fixed_abs, tag = 'smem constant byte address 0x4 - core index']
  #allocation1 [shape = 'u32[72,128]{1,0:T(1,128)}', space=vmem, size = 0x9000, scoped, tag = 'internal scratch']
  %s0 = inlined_call_operand.hbm [shape: f32[2,6400], index: 0, kind: input, shape index: {}]
  %s1 = inlined_call_operand.hbm [shape: bf16[6400,256], index: 1, kind: input, shape index: {}]
  %s2 = inlined_call_operand.hbm [shape: f32[1,256], index: 2, kind: input, shape index: {}]
  %s3 = inlined_call_operand.hbm [shape: bf16[256,128], index: 3, kind: input, shape index: {}]
  %s4 = inlined_call_operand.hbm [shape: f32[1,128], index: 4, kind: input, shape index: {}]
  %s5 = inlined_call_operand.hbm [shape: f32[2,128], index: 5, kind: output, shape index: {}]
  %s6 = sld [smem:[#allocation0]]
  $region50: #{tpu_custom_call.1} parent=0
    _
  %s8 = ssub.s32 1, %s6
  %s9 = scalar_select 0, %s8, %s6
  $region1: #{tpu_custom_call.1} parent=0
    #allocation2 [shape = 'u8[51200]{0}', space=vmem, size = 0xc800, scoped, tag = 'input window, operand 0, single buffered']
    #allocation3 [shape = 's32[1]{0}', space=sflag, size = 0x4, scoped, tag = 'scoped memory for tpu_custom_call.1']
    #allocation4 [shape = 's32[1]{0}', space=sflag, size = 0x4, scoped, tag = 'scoped memory for tpu_custom_call.1']
    #allocation5 [shape = 'u8[3276800]{0}', space=vmem, size = 0x320000, scoped, tag = 'input window, operand 1, single buffered']
    #allocation6 [shape = 's32[1]{0}', space=sflag, size = 0x4, scoped, tag = 'scoped memory for tpu_custom_call.1']
    #allocation7 [shape = 'u8[1024]{0}', space=vmem, size = 0x400, scoped, tag = 'input window, operand 2, single buffered']
    #allocation8 [shape = 'u8[65536]{0}', space=vmem, size = 0x10000, scoped, tag = 'input window, operand 3, single buffered']
    #allocation9 [shape = 's32[1]{0}', space=sflag, size = 0x4, scoped, tag = 'scoped memory for tpu_custom_call.1']
    #allocation10 [shape = 'u8[512]{0}', space=vmem, size = 0x400, scoped, tag = 'input window, operand 4, single buffered']
    #allocation11 [shape = 'u8[1024]{0}', space=vmem, size = 0x400, scoped, tag = 'output window, operand 0, single buffered']
    %10 = vsyncpa [#allocation3], 0
    %11 = vsyncpa [#allocation6], 0
    %12 = vsyncpa [#allocation9], 0
    %13 = vsyncpa [#allocation4], 0
    // Predicated region
    $region2: #{tpu_custom_call.1} parent=1 // pred_check
      _
    $region3: #{tpu_custom_call.1} parent=1 // pred_check_branch
      %15 = sbr.rel (0) target = $region5
    $region4: #{tpu_custom_call.1} parent=1 // pred_region
      %17 = vsyncadd [#allocation3], 0
      %s19 = sshll.u32 %s0, 4
      %s20 = int_to_ptr.hbm [resolvable:$true] %s19
      %s21 = sshll.u32 [#allocation2], 4
      %s22 = int_to_ptr.vmem [resolvable:$true] %s21
      %24 = dma.hbm_to_vmem [thread:$0]  %s20, 1600, %s22, [#allocation3]
    $region5: #{tpu_custom_call.1} parent=1 // pred_fallthru
      _
    // Predicated region
    $region6: #{tpu_custom_call.1} parent=1 // pred_check
      _
    $region7: #{tpu_custom_call.1} parent=1 // pred_check_branch
      %26 = sbr.rel (0) target = $region9
    $region8: #{tpu_custom_call.1} parent=1 // pred_region
      %28 = vsyncadd [#allocation6], 0
      %s29 = sshll.u32 %s1, 4
      %s30 = int_to_ptr.hbm [resolvable:$true] %s29
      %s31 = sshll.u32 [#allocation5], 4
      %s32 = int_to_ptr.vmem [resolvable:$true] %s31
      %37 = dma.hbm_to_vmem [thread:$0]  %s30, 102400, %s32, [#allocation6], 128, 128, 8
    $region9: #{tpu_custom_call.1} parent=1 // pred_fallthru
      _
    // Predicated region
    $region10: #{tpu_custom_call.1} parent=1 // pred_check
      _
    $region11: #{tpu_custom_call.1} parent=1 // pred_check_branch
      %39 = sbr.rel (0) target = $region13
    $region12: #{tpu_custom_call.1} parent=1 // pred_region
      %41 = vsyncadd [#allocation6], 0
      %s43 = sshll.u32 %s2, 4
      %s44 = int_to_ptr.hbm [resolvable:$true] %s43
      %s45 = sshll.u32 [#allocation7], 4
      %s46 = int_to_ptr.vmem [resolvable:$true] %s45
      %48 = dma.hbm_to_vmem [thread:$0]  %s44, 32, %s46, [#allocation6]
    $region13: #{tpu_custom_call.1} parent=1 // pred_fallthru
      _
    // Predicated region
    $region14: #{tpu_custom_call.1} parent=1 // pred_check
      _
    $region15: #{tpu_custom_call.1} parent=1 // pred_check_branch
      %50 = sbr.rel (0) target = $region17
    $region16: #{tpu_custom_call.1} parent=1 // pred_region
      %52 = vsyncadd [#allocation9], 0
      %s53 = sshll.u32 %s3, 4
      %s54 = int_to_ptr.hbm [resolvable:$true] %s53
      %s55 = sshll.u32 [#allocation8], 4
      %s56 = int_to_ptr.vmem [resolvable:$true] %s55
      %61 = dma.hbm_to_vmem [thread:$0]  %s54, 2048, %s56, [#allocation9], 64, 64, 4
    $region17: #{tpu_custom_call.1} parent=1 // pred_fallthru
      _
    // Predicated region
    $region18: #{tpu_custom_call.1} parent=1 // pred_check
      _
    $region19: #{tpu_custom_call.1} parent=1 // pred_check_branch
      %63 = sbr.rel (0) target = $region21
    $region20: #{tpu_custom_call.1} parent=1 // pred_region
      %65 = vsyncadd [#allocation9], 0
      %s67 = sshll.u32 %s4, 4
      %s68 = int_to_ptr.hbm [resolvable:$true] %s67
      %s69 = sshll.u32 [#allocation10], 4
      %s70 = int_to_ptr.vmem [resolvable:$true] %s69
      %72 = dma.hbm_to_vmem [thread:$0]  %s68, 16, %s70, [#allocation9]
    $region21: #{tpu_custom_call.1} parent=1 // pred_fallthru
      _
    // Predicated region
    $region22: #{tpu_custom_call.1} parent=1 // pred_check
      _
    $region23: #{tpu_custom_call.1} parent=1 // pred_check_branch
      %74 = sbr.rel (0) target = $region25
    $region24: #{tpu_custom_call.1} parent=1 // pred_region
      %76 = dma.done [#allocation3], 1600
    $region25: #{tpu_custom_call.1} parent=1 // pred_fallthru
      _
    // Predicated region
    $region26: #{tpu_custom_call.1} parent=1 // pred_check
      _
    $region27: #{tpu_custom_call.1} parent=1 // pred_check_branch
      %78 = sbr.rel (0) target = $region29
    $region28: #{tpu_custom_call.1} parent=1 // pred_region
      %80 = dma.done [#allocation6], 102400
    $region29: #{tpu_custom_call.1} parent=1 // pred_fallthru
      _
    // Predicated region
    $region30: #{tpu_custom_call.1} parent=1 // pred_check
      _
    $region31: #{tpu_custom_call.1} parent=1 // pred_check_branch
      %82 = sbr.rel (0) target = $region33
    $region32: #{tpu_custom_call.1} parent=1 // pred_region
      %84 = dma.done [#allocation6], 32
    $region33: #{tpu_custom_call.1} parent=1 // pred_fallthru
      _
    // Predicated region
    $region34: #{tpu_custom_call.1} parent=1 // pred_check
      _
    $region35: #{tpu_custom_call.1} parent=1 // pred_check_branch
      %86 = sbr.rel (0) target = $region37
    $region36: #{tpu_custom_call.1} parent=1 // pred_region
      %88 = dma.done [#allocation9], 2048
    $region37: #{tpu_custom_call.1} parent=1 // pred_fallthru
      _
    // Predicated region
    $region38: #{tpu_custom_call.1} parent=1 // pred_check
      _
    $region39: #{tpu_custom_call.1} parent=1 // pred_check_branch
      %90 = sbr.rel (0) target = $region41
    $region40: #{tpu_custom_call.1} parent=1 // pred_region
      %92 = dma.done [#allocation9], 16
    $region41: #{tpu_custom_call.1} parent=1 // pred_fallthru
      _
    %v93 = vld [vmem:[#allocation2] sm:$0xff]
    %v94 = vld [vmem:[#allocation2 + $0x8] sm:$0xff]
    %v95 = vld [vmem:[#allocation2 + $0x10] sm:$0xff]
    %v96 = vld [vmem:[#allocation2 + $0x18] sm:$0xff]
    %v97 = vld [vmem:[#allocation2 + $0x20] sm:$0xff]
    %v98 = vld [vmem:[#allocation2 + $0x28] sm:$0xff]
    %v99 = vld [vmem:[#allocation2 + $0x30] sm:$0xff]
    %v100 = vld [vmem:[#allocation2 + $0x38] sm:$0xff]
    %v101 = vld [vmem:[#allocation2 + $0x40] sm:$0xff]
    %v102 = vld [vmem:[#allocation2 + $0x48] sm:$0xff]
    %v103 = vld [vmem:[#allocation2 + $0x50] sm:$0xff]
    %v104 = vld [vmem:[#allocation2 + $0x58] sm:$0xff]
    %v105 = vld [vmem:[#allocation2 + $0x60] sm:$0xf]
    %119 = vst [vmem:[#allocation1] ss:$4 sm:$0xff] %v93
    %s120 = scalar_lea.vmem [#allocation1], 32
    %121 = vst [vmem:[%s120] ss:$4 sm:$0xff] %v94
    %v122 = vld.sshfl [vmem:[#allocation1] sm:$0xff pattern:$0x73625140]
    %v123 = vld.sshfl [vmem:[#allocation1 + $0x8] sm:$0xff pattern:$0x73625140]
    %v124 = vld.sshfl [vmem:[#allocation1 + $0x10] sm:$0xff pattern:$0x73625140]
    %v125 = vld.sshfl [vmem:[#allocation1 + $0x18] sm:$0xff pattern:$0x73625140]
    %v126 = vld.sshfl [vmem:[#allocation1 + $0x20] sm:$0xff pattern:$0x73625140]
    %v127 = vld.sshfl [vmem:[#allocation1 + $0x28] sm:$0xff pattern:$0x73625140]
    %v128 = vld.sshfl [vmem:[#allocation1 + $0x30] sm:$0xff pattern:$0x73625140]
    %v129 = vld.sshfl [vmem:[#allocation1 + $0x38] sm:$0xff pattern:$0x73625140]
    %130 = vst [vmem:[#allocation1] ss:$4 sm:$0xff] %v95
    %131 = vst [vmem:[%s120] ss:$4 sm:$0xff] %v96
    %v132 = vld.sshfl [vmem:[#allocation1] sm:$0xff pattern:$0x73625140]
    %v133 = vld.sshfl [vmem:[#allocation1 + $0x8] sm:$0xff pattern:$0x73625140]
    %v134 = vld.sshfl [vmem:[#allocation1 + $0x10] sm:$0xff pattern:$0x73625140]
    %v135 = vld.sshfl [vmem:[#allocation1 + $0x18] sm:$0xff pattern:$0x73625140]
    %v136 = vld.sshfl [vmem:[#allocation1 + $0x20] sm:$0xff pattern:$0x73625140]
    %v137 = vld.sshfl [vmem:[#allocation1 + $0x28] sm:$0xff pattern:$0x73625140]
    %v138 = vld.sshfl [vmem:[#allocation1 + $0x30] sm:$0xff pattern:$0x73625140]
    %v139 = vld.sshfl [vmem:[#allocation1 + $0x38] sm:$0xff pattern:$0x73625140]
    %140 = vst [vmem:[#allocation1] ss:$4 sm:$0xff] %v97
    %141 = vst [vmem:[%s120] ss:$4 sm:$0xff] %v98
    %v142 = vld.sshfl [vmem:[#allocation1] sm:$0xff pattern:$0x73625140]
    %v143 = vld.sshfl [vmem:[#allocation1 + $0x8] sm:$0xff pattern:$0x73625140]
    %v144 = vld.sshfl [vmem:[#allocation1 + $0x10] sm:$0xff pattern:$0x73625140]
    %v145 = vld.sshfl [vmem:[#allocation1 + $0x18] sm:$0xff pattern:$0x73625140]
    %v146 = vld.sshfl [vmem:[#allocation1 + $0x20] sm:$0xff pattern:$0x73625140]
    %v147 = vld.sshfl [vmem:[#allocation1 + $0x28] sm:$0xff pattern:$0x73625140]
    %v148 = vld.sshfl [vmem:[#allocation1 + $0x30] sm:$0xff pattern:$0x73625140]
    %v149 = vld.sshfl [vmem:[#allocation1 + $0x38] sm:$0xff pattern:$0x73625140]
    %150 = vst [vmem:[#allocation1] ss:$4 sm:$0xff] %v99
    %151 = vst [vmem:[%s120] ss:$4 sm:$0xff] %v100
    %v152 = vld.sshfl [vmem:[#allocation1] sm:$0xff pattern:$0x73625140]
    %v153 = vld.sshfl [vmem:[#allocation1 + $0x8] sm:$0xff pattern:$0x73625140]
    %v154 = vld.sshfl [vmem:[#allocation1 + $0x10] sm:$0xff pattern:$0x73625140]
    %v155 = vld.sshfl [vmem:[#allocation1 + $0x18] sm:$0xff pattern:$0x73625140]
    %v156 = vld.sshfl [vmem:[#allocation1 + $0x20] sm:$0xff pattern:$0x73625140]
    %v157 = vld.sshfl [vmem:[#allocation1 + $0x28] sm:$0xff pattern:$0x73625140]
    %v158 = vld.sshfl [vmem:[#allocation1 + $0x30] sm:$0xff pattern:$0x73625140]
    %v159 = vld.sshfl [vmem:[#allocation1 + $0x38] sm:$0xff pattern:$0x73625140]
    %160 = vst [vmem:[#allocation1] ss:$4 sm:$0xff] %v101
    %161 = vst [vmem:[%s120] ss:$4 sm:$0xff] %v102
    %v162 = vld.sshfl [vmem:[#allocation1] sm:$0xff pattern:$0x73625140]
    %v163 = vld.sshfl [vmem:[#allocation1 + $0x8] sm:$0xff pattern:$0x73625140]
    %v164 = vld.sshfl [vmem:[#allocation1 + $0x10] sm:$0xff pattern:$0x73625140]
    %v165 = vld.sshfl [vmem:[#allocation1 + $0x18] sm:$0xff pattern:$0x73625140]
    %v166 = vld.sshfl [vmem:[#allocation1 + $0x20] sm:$0xff pattern:$0x73625140]
    %v167 = vld.sshfl [vmem:[#allocation1 + $0x28] sm:$0xff pattern:$0x73625140]
    %v168 = vld.sshfl [vmem:[#allocation1 + $0x30] sm:$0xff pattern:$0x73625140]
    %v169 = vld.sshfl [vmem:[#allocation1 + $0x38] sm:$0xff pattern:$0x73625140]
    %170 = vst [vmem:[#allocation1] ss:$4 sm:$0xff] %v103
    %171 = vst [vmem:[%s120] ss:$4 sm:$0xff] %v104
    %v172 = vld.sshfl [vmem:[#allocation1] sm:$0xff pattern:$0x73625140]
    %v173 = vld.sshfl [vmem:[#allocation1 + $0x8] sm:$0xff pattern:$0x73625140]
    %v174 = vld.sshfl [vmem:[#allocation1 + $0x10] sm:$0xff pattern:$0x73625140]
    %v175 = vld.sshfl [vmem:[#allocation1 + $0x18] sm:$0xff pattern:$0x73625140]
    %v176 = vld.sshfl [vmem:[#allocation1 + $0x20] sm:$0xff pattern:$0x73625140]
    %v177 = vld.sshfl [vmem:[#allocation1 + $0x28] sm:$0xff pattern:$0x73625140]
    %v178 = vld.sshfl [vmem:[#allocation1 + $0x30] sm:$0xff pattern:$0x73625140]
    %v179 = vld.sshfl [vmem:[#allocation1 + $0x38] sm:$0xff pattern:$0x73625140]
    %180 = vst [vmem:[#allocation1] ss:$4 sm:$0xff] %v105
    %v181 = vld.sshfl [vmem:[#allocation1] sm:$0xff pattern:$0x73625140]
    %v182 = vld.sshfl [vmem:[#allocation1 + $0x8] sm:$0xff pattern:$0x73625140]
    %v233 = vpack.c.bf16 %v122, %v122
    %v234 = vpack.c.bf16 %v123, %v123
    %v235 = vpack.c.bf16 %v124, %v124
    %v236 = vpack.c.bf16 %v125, %v125
    %v237 = vpack.c.bf16 %v126, %v126
    %v238 = vpack.c.bf16 %v127, %v127
    %v239 = vpack.c.bf16 %v128, %v128
    %v240 = vpack.c.bf16 %v129, %v129
    %v241 = vpack.c.bf16 %v132, %v132
    %v242 = vpack.c.bf16 %v133, %v133
    %v243 = vpack.c.bf16 %v134, %v134
    %v244 = vpack.c.bf16 %v135, %v135
    %v245 = vpack.c.bf16 %v136, %v136
    %v246 = vpack.c.bf16 %v137, %v137
    %v247 = vpack.c.bf16 %v138, %v138
    %v248 = vpack.c.bf16 %v139, %v139
    %v249 = vpack.c.bf16 %v142, %v142
    %v250 = vpack.c.bf16 %v143, %v143
    %v251 = vpack.c.bf16 %v144, %v144
    %v252 = vpack.c.bf16 %v145, %v145
    %v253 = vpack.c.bf16 %v146, %v146
    %v254 = vpack.c.bf16 %v147, %v147
    %v255 = vpack.c.bf16 %v148, %v148
    %v256 = vpack.c.bf16 %v149, %v149
    %v257 = vpack.c.bf16 %v152, %v152
    %v258 = vpack.c.bf16 %v153, %v153
    %v259 = vpack.c.bf16 %v154, %v154
    %v260 = vpack.c.bf16 %v155, %v155
    %v261 = vpack.c.bf16 %v156, %v156
    %v262 = vpack.c.bf16 %v157, %v157
    %v263 = vpack.c.bf16 %v158, %v158
    %v264 = vpack.c.bf16 %v159, %v159
    %v265 = vpack.c.bf16 %v162, %v162
    %v266 = vpack.c.bf16 %v163, %v163
    %v267 = vpack.c.bf16 %v164, %v164
    %v268 = vpack.c.bf16 %v165, %v165
    %v269 = vpack.c.bf16 %v166, %v166
    %v270 = vpack.c.bf16 %v167, %v167
    %v271 = vpack.c.bf16 %v168, %v168
    %v272 = vpack.c.bf16 %v169, %v169
    %v273 = vpack.c.bf16 %v172, %v172
    %v274 = vpack.c.bf16 %v173, %v173
    %v275 = vpack.c.bf16 %v174, %v174
    %v276 = vpack.c.bf16 %v175, %v175
    %v277 = vpack.c.bf16 %v176, %v176
    %v278 = vpack.c.bf16 %v177, %v177
    %v279 = vpack.c.bf16 %v178, %v178
    %v280 = vpack.c.bf16 %v179, %v179
    %v281 = vpack.c.bf16 %v181, %v181
    %v282 = vpack.c.bf16 %v182, %v182
    %v283 = vld [vmem:[#allocation5] sm:$0xff]
    %v284 = vld [vmem:[#allocation5 + $0x8] sm:$0xff]
    %v285 = vld [vmem:[#allocation5 + $0x10] sm:$0xff]
    %v286 = vld [vmem:[#allocation5 + $0x18] sm:$0xff]
    %v287 = vld [vmem:[#allocation5 + $0x20] sm:$0xff]
    %v288 = vld [vmem:[#allocation5 + $0x28] sm:$0xff]
    %v289 = vld [vmem:[#allocation5 + $0x30] sm:$0xff]
    %v290 = vld [vmem:[#allocation5 + $0x38] sm:$0xff]
    %v291 = vld [vmem:[#allocation5 + $0x40] sm:$0xff]
    %v292 = vld [vmem:[#allocation5 + $0x48] sm:$0xff]
    %v293 = vld [vmem:[#allocation5 + $0x50] sm:$0xff]
    %v294 = vld [vmem:[#allocation5 + $0x58] sm:$0xff]
    %v295 = vld [vmem:[#allocation5 + $0x60] sm:$0xff]
    %v296 = vld [vmem:[#allocation5 + $0x68] sm:$0xff]
    %v297 = vld [vmem:[#allocation5 + $0x70] sm:$0xff]
    %v298 = vld [vmem:[#allocation5 + $0x78] sm:$0xff]
    %v299 = vld [vmem:[#allocation5 + $0x80] sm:$0xff]
    %v300 = vld [vmem:[#allocation5 + $0x88] sm:$0xff]
    %v301 = vld [vmem:[#allocation5 + $0x90] sm:$0xff]
    %v302 = vld [vmem:[#allocation5 + $0x98] sm:$0xff]
    %v303 = vld [vmem:[#allocation5 + $0xa0] sm:$0xff]
    %v304 = vld [vmem:[#allocation5 + $0xa8] sm:$0xff]
    %v305 = vld [vmem:[#allocation5 + $0xb0] sm:$0xff]
    %v306 = vld [vmem:[#allocation5 + $0xb8] sm:$0xff]
    %v307 = vld [vmem:[#allocation5 + $0xc0] sm:$0xff]
    %v308 = vld [vmem:[#allocation5 + $0xc8] sm:$0xff]
    %v309 = vld [vmem:[#allocation5 + $0xd0] sm:$0xff]
    %v310 = vld [vmem:[#allocation5 + $0xd8] sm:$0xff]
    %v311 = vld [vmem:[#allocation5 + $0xe0] sm:$0xff]
    %v312 = vld [vmem:[#allocation5 + $0xe8] sm:$0xff]
    %v313 = vld [vmem:[#allocation5 + $0xf0] sm:$0xff]
    %v314 = vld [vmem:[#allocation5 + $0xf8] sm:$0xff]
    %v315 = vld [vmem:[#allocation5 + $0x100] sm:$0xff]
    %v316 = vld [vmem:[#allocation5 + $0x108] sm:$0xff]
    %v317 = vld [vmem:[#allocation5 + $0x110] sm:$0xff]
    %v318 = vld [vmem:[#allocation5 + $0x118] sm:$0xff]
    %v319 = vld [vmem:[#allocation5 + $0x120] sm:$0xff]
    %v320 = vld [vmem:[#allocation5 + $0x128] sm:$0xff]
    %v321 = vld [vmem:[#allocation5 + $0x130] sm:$0xff]
    %v322 = vld [vmem:[#allocation5 + $0x138] sm:$0xff]
    %v323 = vld [vmem:[#allocation5 + $0x140] sm:$0xff]
    %v324 = vld [vmem:[#allocation5 + $0x148] sm:$0xff]
    %v325 = vld [vmem:[#allocation5 + $0x150] sm:$0xff]
    %v326 = vld [vmem:[#allocation5 + $0x158] sm:$0xff]
    %v327 = vld [vmem:[#allocation5 + $0x160] sm:$0xff]
    %v328 = vld [vmem:[#allocation5 + $0x168] sm:$0xff]
    %v329 = vld [vmem:[#allocation5 + $0x170] sm:$0xff]
    %v330 = vld [vmem:[#allocation5 + $0x178] sm:$0xff]
    %v331 = vld [vmem:[#allocation5 + $0x180] sm:$0xff]
    %v332 = vld [vmem:[#allocation5 + $0x188] sm:$0xff]
    %v333 = vld [vmem:[#allocation5 + $0x190] sm:$0xff]
    %v334 = vld [vmem:[#allocation5 + $0x198] sm:$0xff]
    %v335 = vld [vmem:[#allocation5 + $0x1a0] sm:$0xff]
    %v336 = vld [vmem:[#allocation5 + $0x1a8] sm:$0xff]
    %v337 = vld [vmem:[#allocation5 + $0x1b0] sm:$0xff]
    %v338 = vld [vmem:[#allocation5 + $0x1b8] sm:$0xff]
    %v339 = vld [vmem:[#allocation5 + $0x1c0] sm:$0xff]
    %v340 = vld [vmem:[#allocation5 + $0x1c8] sm:$0xff]
    %v341 = vld [vmem:[#allocation5 + $0x1d0] sm:$0xff]
    %v342 = vld [vmem:[#allocation5 + $0x1d8] sm:$0xff]
    %v343 = vld [vmem:[#allocation5 + $0x1e0] sm:$0xff]
    %v344 = vld [vmem:[#allocation5 + $0x1e8] sm:$0xff]
    %v345 = vld [vmem:[#allocation5 + $0x1f0] sm:$0xff]
    %v346 = vld [vmem:[#allocation5 + $0x1f8] sm:$0xff]
    %v347 = vld [vmem:[#allocation5 + $0x200] sm:$0xff]
    %v348 = vld [vmem:[#allocation5 + $0x208] sm:$0xff]
    %v349 = vld [vmem:[#allocation5 + $0x210] sm:$0xff]
    %v350 = vld [vmem:[#allocation5 + $0x218] sm:$0xff]
    %v351 = vld [vmem:[#allocation5 + $0x220] sm:$0xff]
    %v352 = vld [vmem:[#allocation5 + $0x228] sm:$0xff]
    %v353 = vld [vmem:[#allocation5 + $0x230] sm:$0xff]
    %v354 = vld [vmem:[#allocation5 + $0x238] sm:$0xff]
    %v355 = vld [vmem:[#allocation5 + $0x240] sm:$0xff]
    %v356 = vld [vmem:[#allocation5 + $0x248] sm:$0xff]
    %v357 = vld [vmem:[#allocation5 + $0x250] sm:$0xff]
    %v358 = vld [vmem:[#allocation5 + $0x258] sm:$0xff]
    %v359 = vld [vmem:[#allocation5 + $0x260] sm:$0xff]
    %v360 = vld [vmem:[#allocation5 + $0x268] sm:$0xff]
    %v361 = vld [vmem:[#allocation5 + $0x270] sm:$0xff]
    %v362 = vld [vmem:[#allocation5 + $0x278] sm:$0xff]
    %v363 = vld [vmem:[#allocation5 + $0x280] sm:$0xff]
    %v364 = vld [vmem:[#allocation5 + $0x288] sm:$0xff]
    %v365 = vld [vmem:[#allocation5 + $0x290] sm:$0xff]
    %v366 = vld [vmem:[#allocation5 + $0x298] sm:$0xff]
    %v367 = vld [vmem:[#allocation5 + $0x2a0] sm:$0xff]
    %v368 = vld [vmem:[#allocation5 + $0x2a8] sm:$0xff]
    %v369 = vld [vmem:[#allocation5 + $0x2b0] sm:$0xff]
    %v370 = vld [vmem:[#allocation5 + $0x2b8] sm:$0xff]
    %v371 = vld [vmem:[#allocation5 + $0x2c0] sm:$0xff]
    %v372 = vld [vmem:[#allocation5 + $0x2c8] sm:$0xff]
    %v373 = vld [vmem:[#allocation5 + $0x2d0] sm:$0xff]
    %v374 = vld [vmem:[#allocation5 + $0x2d8] sm:$0xff]
    %v375 = vld [vmem:[#allocation5 + $0x2e0] sm:$0xff]
    %v376 = vld [vmem:[#allocation5 + $0x2e8] sm:$0xff]
    %v377 = vld [vmem:[#allocation5 + $0x2f0] sm:$0xff]
    %v378 = vld [vmem:[#allocation5 + $0x2f8] sm:$0xff]
    %v379 = vld [vmem:[#allocation5 + $0x300] sm:$0xff]
    %v380 = vld [vmem:[#allocation5 + $0x308] sm:$0xff]
    %v381 = vld [vmem:[#allocation5 + $0x310] sm:$0xff]
    %v382 = vld [vmem:[#allocation5 + $0x318] sm:$0xff]
    %v383 = vld [vmem:[#allocation5 + $0x320] sm:$0xff]
    %v384 = vld [vmem:[#allocation5 + $0x328] sm:$0xff]
    %v385 = vld [vmem:[#allocation5 + $0x330] sm:$0xff]
    %v386 = vld [vmem:[#allocation5 + $0x338] sm:$0xff]
    %v387 = vld [vmem:[#allocation5 + $0x340] sm:$0xff]
    %v388 = vld [vmem:[#allocation5 + $0x348] sm:$0xff]
    %v389 = vld [vmem:[#allocation5 + $0x350] sm:$0xff]
    %v390 = vld [vmem:[#allocation5 + $0x358] sm:$0xff]
    %v391 = vld [vmem:[#allocation5 + $0x360] sm:$0xff]
    %v392 = vld [vmem:[#allocation5 + $0x368] sm:$0xff]
    %v393 = vld [vmem:[#allocation5 + $0x370] sm:$0xff]
    %v394 = vld [vmem:[#allocation5 + $0x378] sm:$0xff]
    %v395 = vld [vmem:[#allocation5 + $0x380] sm:$0xff]
    %v396 = vld [vmem:[#allocation5 + $0x388] sm:$0xff]
    %v397 = vld [vmem:[#allocation5 + $0x390] sm:$0xff]
    %v398 = vld [vmem:[#allocation5 + $0x398] sm:$0xff]
    %v399 = vld [vmem:[#allocation5 + $0x3a0] sm:$0xff]
    %v400 = vld [vmem:[#allocation5 + $0x3a8] sm:$0xff]
    %v401 = vld [vmem:[#allocation5 + $0x3b0] sm:$0xff]
    %v402 = vld [vmem:[#allocation5 + $0x3b8] sm:$0xff]
    %v403 = vld [vmem:[#allocation5 + $0x3c0] sm:$0xff]
    %v404 = vld [vmem:[#allocation5 + $0x3c8] sm:$0xff]
    %v405 = vld [vmem:[#allocation5 + $0x3d0] sm:$0xff]
    %v406 = vld [vmem:[#allocation5 + $0x3d8] sm:$0xff]
    %v407 = vld [vmem:[#allocation5 + $0x3e0] sm:$0xff]
    %v408 = vld [vmem:[#allocation5 + $0x3e8] sm:$0xff]
    %v409 = vld [vmem:[#allocation5 + $0x3f0] sm:$0xff]
    %v410 = vld [vmem:[#allocation5 + $0x3f8] sm:$0xff]
    %v411 = vld [vmem:[#allocation5 + $0x400] sm:$0xff]
    %v412 = vld [vmem:[#allocation5 + $0x408] sm:$0xff]
    %v413 = vld [vmem:[#allocation5 + $0x410] sm:$0xff]
    %v414 = vld [vmem:[#allocation5 + $0x418] sm:$0xff]
    %v415 = vld [vmem:[#allocation5 + $0x420] sm:$0xff]
    %v416 = vld [vmem:[#allocation5 + $0x428] sm:$0xff]
    %v417 = vld [vmem:[#allocation5 + $0x430] sm:$0xff]
    %v418 = vld [vmem:[#allocation5 + $0x438] sm:$0xff]
    %v419 = vld [vmem:[#allocation5 + $0x440] sm:$0xff]
    %v420 = vld [vmem:[#allocation5 + $0x448] sm:$0xff]
    %v421 = vld [vmem:[#allocation5 + $0x450] sm:$0xff]
    %v422 = vld [vmem:[#allocation5 + $0x458] sm:$0xff]
    %v423 = vld [vmem:[#allocation5 + $0x460] sm:$0xff]
    %v424 = vld [vmem:[#allocation5 + $0x468] sm:$0xff]
    %v425 = vld [vmem:[#allocation5 + $0x470] sm:$0xff]
    %v426 = vld [vmem:[#allocation5 + $0x478] sm:$0xff]
    %v427 = vld [vmem:[#allocation5 + $0x480] sm:$0xff]
    %v428 = vld [vmem:[#allocation5 + $0x488] sm:$0xff]
    %v429 = vld [vmem:[#allocation5 + $0x490] sm:$0xff]
    %v430 = vld [vmem:[#allocation5 + $0x498] sm:$0xff]
    %v431 = vld [vmem:[#allocation5 + $0x4a0] sm:$0xff]
    %v432 = vld [vmem:[#allocation5 + $0x4a8] sm:$0xff]
    %v433 = vld [vmem:[#allocation5 + $0x4b0] sm:$0xff]
    %v434 = vld [vmem:[#allocation5 + $0x4b8] sm:$0xff]
    %v435 = vld [vmem:[#allocation5 + $0x4c0] sm:$0xff]
    %v436 = vld [vmem:[#allocation5 + $0x4c8] sm:$0xff]
    %v437 = vld [vmem:[#allocation5 + $0x4d0] sm:$0xff]
    %v438 = vld [vmem:[#allocation5 + $0x4d8] sm:$0xff]
    %v439 = vld [vmem:[#allocation5 + $0x4e0] sm:$0xff]
    %v440 = vld [vmem:[#allocation5 + $0x4e8] sm:$0xff]
    %v441 = vld [vmem:[#allocation5 + $0x4f0] sm:$0xff]
    %v442 = vld [vmem:[#allocation5 + $0x4f8] sm:$0xff]
    %v443 = vld [vmem:[#allocation5 + $0x500] sm:$0xff]
    %v444 = vld [vmem:[#allocation5 + $0x508] sm:$0xff]
    %v445 = vld [vmem:[#allocation5 + $0x510] sm:$0xff]
    %v446 = vld [vmem:[#allocation5 + $0x518] sm:$0xff]
    %v447 = vld [vmem:[#allocation5 + $0x520] sm:$0xff]
    %v448 = vld [vmem:[#allocation5 + $0x528] sm:$0xff]
    %v449 = vld [vmem:[#allocation5 + $0x530] sm:$0xff]
    %v450 = vld [vmem:[#allocation5 + $0x538] sm:$0xff]
    %v451 = vld [vmem:[#allocation5 + $0x540] sm:$0xff]
    %v452 = vld [vmem:[#allocation5 + $0x548] sm:$0xff]
    %v453 = vld [vmem:[#allocation5 + $0x550] sm:$0xff]
    %v454 = vld [vmem:[#allocation5 + $0x558] sm:$0xff]
    %v455 = vld [vmem:[#allocation5 + $0x560] sm:$0xff]
    %v456 = vld [vmem:[#allocation5 + $0x568] sm:$0xff]
    %v457 = vld [vmem:[#allocation5 + $0x570] sm:$0xff]
    %v458 = vld [vmem:[#allocation5 + $0x578] sm:$0xff]
    %v459 = vld [vmem:[#allocation5 + $0x580] sm:$0xff]
    %v460 = vld [vmem:[#allocation5 + $0x588] sm:$0xff]
    %v461 = vld [vmem:[#allocation5 + $0x590] sm:$0xff]
    %v462 = vld [vmem:[#allocation5 + $0x598] sm:$0xff]
    %v463 = vld [vmem:[#allocation5 + $0x5a0] sm:$0xff]
    %v464 = vld [vmem:[#allocation5 + $0x5a8] sm:$0xff]
    %v465 = vld [vmem:[#allocation5 + $0x5b0] sm:$0xff]
    %v466 = vld [vmem:[#allocation5 + $0x5b8] sm:$0xff]
    %v467 = vld [vmem:[#allocation5 + $0x5c0] sm:$0xff]
    %v468 = vld [vmem:[#allocation5 + $0x5c8] sm:$0xff]
    %v469 = vld [vmem:[#allocation5 + $0x5d0] sm:$0xff]
    %v470 = vld [vmem:[#allocation5 + $0x5d8] sm:$0xff]
    %v471 = vld [vmem:[#allocation5 + $0x5e0] sm:$0xff]
    %v472 = vld [vmem:[#allocation5 + $0x5e8] sm:$0xff]
    %v473 = vld [vmem:[#allocation5 + $0x5f0] sm:$0xff]
    %v474 = vld [vmem:[#allocation5 + $0x5f8] sm:$0xff]
    %v475 = vld [vmem:[#allocation5 + $0x600] sm:$0xff]
    %v476 = vld [vmem:[#allocation5 + $0x608] sm:$0xff]
    %v477 = vld [vmem:[#allocation5 + $0x610] sm:$0xff]
    %v478 = vld [vmem:[#allocation5 + $0x618] sm:$0xff]
    %v479 = vld [vmem:[#allocation5 + $0x620] sm:$0xff]
    %v480 = vld [vmem:[#allocation5 + $0x628] sm:$0xff]
    %v481 = vld [vmem:[#allocation5 + $0x630] sm:$0xff]
    %v482 = vld [vmem:[#allocation5 + $0x638] sm:$0xff]
    %v483 = vld [vmem:[#allocation5 + $0x640] sm:$0xff]
    %v484 = vld [vmem:[#allocation5 + $0x648] sm:$0xff]
    %v485 = vld [vmem:[#allocation5 + $0x650] sm:$0xff]
    %v486 = vld [vmem:[#allocation5 + $0x658] sm:$0xff]
    %v487 = vld [vmem:[#allocation5 + $0x660] sm:$0xff]
    %v488 = vld [vmem:[#allocation5 + $0x668] sm:$0xff]
    %v489 = vld [vmem:[#allocation5 + $0x670] sm:$0xff]
    %v490 = vld [vmem:[#allocation5 + $0x678] sm:$0xff]
    %v491 = vld [vmem:[#allocation5 + $0x680] sm:$0xff]
    %v492 = vld [vmem:[#allocation5 + $0x688] sm:$0xff]
    %v493 = vld [vmem:[#allocation5 + $0x690] sm:$0xff]
    %v494 = vld [vmem:[#allocation5 + $0x698] sm:$0xff]
    %v495 = vld [vmem:[#allocation5 + $0x6a0] sm:$0xff]
    %v496 = vld [vmem:[#allocation5 + $0x6a8] sm:$0xff]
    %v497 = vld [vmem:[#allocation5 + $0x6b0] sm:$0xff]
    %v498 = vld [vmem:[#allocation5 + $0x6b8] sm:$0xff]
    %v499 = vld [vmem:[#allocation5 + $0x6c0] sm:$0xff]
    %v500 = vld [vmem:[#allocation5 + $0x6c8] sm:$0xff]
    %v501 = vld [vmem:[#allocation5 + $0x6d0] sm:$0xff]
    %v502 = vld [vmem:[#allocation5 + $0x6d8] sm:$0xff]
    %v503 = vld [vmem:[#allocation5 + $0x6e0] sm:$0xff]
    %v504 = vld [vmem:[#allocation5 + $0x6e8] sm:$0xff]
    %v505 = vld [vmem:[#allocation5 + $0x6f0] sm:$0xff]
    %v506 = vld [vmem:[#allocation5 + $0x6f8] sm:$0xff]
    %v507 = vld [vmem:[#allocation5 + $0x700] sm:$0xff]
    %v508 = vld [vmem:[#allocation5 + $0x708] sm:$0xff]
    %v509 = vld [vmem:[#allocation5 + $0x710] sm:$0xff]
    %v510 = vld [vmem:[#allocation5 + $0x718] sm:$0xff]
    %v511 = vld [vmem:[#allocation5 + $0x720] sm:$0xff]
    %v512 = vld [vmem:[#allocation5 + $0x728] sm:$0xff]
    %v513 = vld [vmem:[#allocation5 + $0x730] sm:$0xff]
    %v514 = vld [vmem:[#allocation5 + $0x738] sm:$0xff]
    %v515 = vld [vmem:[#allocation5 + $0x740] sm:$0xff]
    %v516 = vld [vmem:[#allocation5 + $0x748] sm:$0xff]
    %v517 = vld [vmem:[#allocation5 + $0x750] sm:$0xff]
    %v518 = vld [vmem:[#allocation5 + $0x758] sm:$0xff]
    %v519 = vld [vmem:[#allocation5 + $0x760] sm:$0xff]
    %v520 = vld [vmem:[#allocation5 + $0x768] sm:$0xff]
    %v521 = vld [vmem:[#allocation5 + $0x770] sm:$0xff]
    %v522 = vld [vmem:[#allocation5 + $0x778] sm:$0xff]
    %v523 = vld [vmem:[#allocation5 + $0x780] sm:$0xff]
    %v524 = vld [vmem:[#allocation5 + $0x788] sm:$0xff]
    %v525 = vld [vmem:[#allocation5 + $0x790] sm:$0xff]
    %v526 = vld [vmem:[#allocation5 + $0x798] sm:$0xff]
    %v527 = vld [vmem:[#allocation5 + $0x7a0] sm:$0xff]
    %v528 = vld [vmem:[#allocation5 + $0x7a8] sm:$0xff]
    %v529 = vld [vmem:[#allocation5 + $0x7b0] sm:$0xff]
    %v530 = vld [vmem:[#allocation5 + $0x7b8] sm:$0xff]
    %v531 = vld [vmem:[#allocation5 + $0x7c0] sm:$0xff]
    %v532 = vld [vmem:[#allocation5 + $0x7c8] sm:$0xff]
    %v533 = vld [vmem:[#allocation5 + $0x7d0] sm:$0xff]
    %v534 = vld [vmem:[#allocation5 + $0x7d8] sm:$0xff]
    %v535 = vld [vmem:[#allocation5 + $0x7e0] sm:$0xff]
    %v536 = vld [vmem:[#allocation5 + $0x7e8] sm:$0xff]
    %v537 = vld [vmem:[#allocation5 + $0x7f0] sm:$0xff]
    %v538 = vld [vmem:[#allocation5 + $0x7f8] sm:$0xff]
    %v539 = vld [vmem:[#allocation5 + $0x800] sm:$0xff]
    %v540 = vld [vmem:[#allocation5 + $0x808] sm:$0xff]
    %v541 = vld [vmem:[#allocation5 + $0x810] sm:$0xff]
    %v542 = vld [vmem:[#allocation5 + $0x818] sm:$0xff]
    %v543 = vld [vmem:[#allocation5 + $0x820] sm:$0xff]
    %v544 = vld [vmem:[#allocation5 + $0x828] sm:$0xff]
    %v545 = vld [vmem:[#allocation5 + $0x830] sm:$0xff]
    %v546 = vld [vmem:[#allocation5 + $0x838] sm:$0xff]
    %v547 = vld [vmem:[#allocation5 + $0x840] sm:$0xff]
    %v548 = vld [vmem:[#allocation5 + $0x848] sm:$0xff]
    %v549 = vld [vmem:[#allocation5 + $0x850] sm:$0xff]
    %v550 = vld [vmem:[#allocation5 + $0x858] sm:$0xff]
    %v551 = vld [vmem:[#allocation5 + $0x860] sm:$0xff]
    %v552 = vld [vmem:[#allocation5 + $0x868] sm:$0xff]
    %v553 = vld [vmem:[#allocation5 + $0x870] sm:$0xff]
    %v554 = vld [vmem:[#allocation5 + $0x878] sm:$0xff]
    %v555 = vld [vmem:[#allocation5 + $0x880] sm:$0xff]
    %v556 = vld [vmem:[#allocation5 + $0x888] sm:$0xff]
    %v557 = vld [vmem:[#allocation5 + $0x890] sm:$0xff]
    %v558 = vld [vmem:[#allocation5 + $0x898] sm:$0xff]
    %v559 = vld [vmem:[#allocation5 + $0x8a0] sm:$0xff]
    %v560 = vld [vmem:[#allocation5 + $0x8a8] sm:$0xff]
    %v561 = vld [vmem:[#allocation5 + $0x8b0] sm:$0xff]
    %v562 = vld [vmem:[#allocation5 + $0x8b8] sm:$0xff]
    %v563 = vld [vmem:[#allocation5 + $0x8c0] sm:$0xff]
    %v564 = vld [vmem:[#allocation5 + $0x8c8] sm:$0xff]
    %v565 = vld [vmem:[#allocation5 + $0x8d0] sm:$0xff]
    %v566 = vld [vmem:[#allocation5 + $0x8d8] sm:$0xff]
    %v567 = vld [vmem:[#allocation5 + $0x8e0] sm:$0xff]
    %v568 = vld [vmem:[#allocation5 + $0x8e8] sm:$0xff]
    %v569 = vld [vmem:[#allocation5 + $0x8f0] sm:$0xff]
    %v570 = vld [vmem:[#allocation5 + $0x8f8] sm:$0xff]
    %v571 = vld [vmem:[#allocation5 + $0x900] sm:$0xff]
    %v572 = vld [vmem:[#allocation5 + $0x908] sm:$0xff]
    %v573 = vld [vmem:[#allocation5 + $0x910] sm:$0xff]
    %v574 = vld [vmem:[#allocation5 + $0x918] sm:$0xff]
    %v575 = vld [vmem:[#allocation5 + $0x920] sm:$0xff]
    %v576 = vld [vmem:[#allocation5 + $0x928] sm:$0xff]
    %v577 = vld [vmem:[#allocation5 + $0x930] sm:$0xff]
    %v578 = vld [vmem:[#allocation5 + $0x938] sm:$0xff]
    %v579 = vld [vmem:[#allocation5 + $0x940] sm:$0xff]
    %v580 = vld [vmem:[#allocation5 + $0x948] sm:$0xff]
    %v581 = vld [vmem:[#allocation5 + $0x950] sm:$0xff]
    %v582 = vld [vmem:[#allocation5 + $0x958] sm:$0xff]
    %v583 = vld [vmem:[#allocation5 + $0x960] sm:$0xff]
    %v584 = vld [vmem:[#allocation5 + $0x968] sm:$0xff]
    %v585 = vld [vmem:[#allocation5 + $0x970] sm:$0xff]
    %v586 = vld [vmem:[#allocation5 + $0x978] sm:$0xff]
    %v587 = vld [vmem:[#allocation5 + $0x980] sm:$0xff]
    %v588 = vld [vmem:[#allocation5 + $0x988] sm:$0xff]
    %v589 = vld [vmem:[#allocation5 + $0x990] sm:$0xff]
    %v590 = vld [vmem:[#allocation5 + $0x998] sm:$0xff]
    %v591 = vld [vmem:[#allocation5 + $0x9a0] sm:$0xff]
    %v592 = vld [vmem:[#allocation5 + $0x9a8] sm:$0xff]
    %v593 = vld [vmem:[#allocation5 + $0x9b0] sm:$0xff]
    %v594 = vld [vmem:[#allocation5 + $0x9b8] sm:$0xff]
    %v595 = vld [vmem:[#allocation5 + $0x9c0] sm:$0xff]
    %v596 = vld [vmem:[#allocation5 + $0x9c8] sm:$0xff]
    %v597 = vld [vmem:[#allocation5 + $0x9d0] sm:$0xff]
    %v598 = vld [vmem:[#allocation5 + $0x9d8] sm:$0xff]
    %v599 = vld [vmem:[#allocation5 + $0x9e0] sm:$0xff]
    %v600 = vld [vmem:[#allocation5 + $0x9e8] sm:$0xff]
    %v601 = vld [vmem:[#allocation5 + $0x9f0] sm:$0xff]
    %v602 = vld [vmem:[#allocation5 + $0x9f8] sm:$0xff]
    %v603 = vld [vmem:[#allocation5 + $0xa00] sm:$0xff]
    %v604 = vld [vmem:[#allocation5 + $0xa08] sm:$0xff]
    %v605 = vld [vmem:[#allocation5 + $0xa10] sm:$0xff]
    %v606 = vld [vmem:[#allocation5 + $0xa18] sm:$0xff]
    %v607 = vld [vmem:[#allocation5 + $0xa20] sm:$0xff]
    %v608 = vld [vmem:[#allocation5 + $0xa28] sm:$0xff]
    %v609 = vld [vmem:[#allocation5 + $0xa30] sm:$0xff]
    %v610 = vld [vmem:[#allocation5 + $0xa38] sm:$0xff]
    %v611 = vld [vmem:[#allocation5 + $0xa40] sm:$0xff]
    %v612 = vld [vmem:[#allocation5 + $0xa48] sm:$0xff]
    %v613 = vld [vmem:[#allocation5 + $0xa50] sm:$0xff]
    %v614 = vld [vmem:[#allocation5 + $0xa58] sm:$0xff]
    %v615 = vld [vmem:[#allocation5 + $0xa60] sm:$0xff]
    %v616 = vld [vmem:[#allocation5 + $0xa68] sm:$0xff]
    %v617 = vld [vmem:[#allocation5 + $0xa70] sm:$0xff]
    %v618 = vld [vmem:[#allocation5 + $0xa78] sm:$0xff]
    %v619 = vld [vmem:[#allocation5 + $0xa80] sm:$0xff]
    %v620 = vld [vmem:[#allocation5 + $0xa88] sm:$0xff]
    %v621 = vld [vmem:[#allocation5 + $0xa90] sm:$0xff]
    %v622 = vld [vmem:[#allocation5 + $0xa98] sm:$0xff]
    %v623 = vld [vmem:[#allocation5 + $0xaa0] sm:$0xff]
    %v624 = vld [vmem:[#allocation5 + $0xaa8] sm:$0xff]
    %v625 = vld [vmem:[#allocation5 + $0xab0] sm:$0xff]
    %v626 = vld [vmem:[#allocation5 + $0xab8] sm:$0xff]
    %v627 = vld [vmem:[#allocation5 + $0xac0] sm:$0xff]
    %v628 = vld [vmem:[#allocation5 + $0xac8] sm:$0xff]
    %v629 = vld [vmem:[#allocation5 + $0xad0] sm:$0xff]
    %v630 = vld [vmem:[#allocation5 + $0xad8] sm:$0xff]
    %v631 = vld [vmem:[#allocation5 + $0xae0] sm:$0xff]
    %v632 = vld [vmem:[#allocation5 + $0xae8] sm:$0xff]
    %v633 = vld [vmem:[#allocation5 + $0xaf0] sm:$0xff]
    %v634 = vld [vmem:[#allocation5 + $0xaf8] sm:$0xff]
    %v635 = vld [vmem:[#allocation5 + $0xb00] sm:$0xff]
    %v636 = vld [vmem:[#allocation5 + $0xb08] sm:$0xff]
    %v637 = vld [vmem:[#allocation5 + $0xb10] sm:$0xff]
    %v638 = vld [vmem:[#allocation5 + $0xb18] sm:$0xff]
    %v639 = vld [vmem:[#allocation5 + $0xb20] sm:$0xff]
    %v640 = vld [vmem:[#allocation5 + $0xb28] sm:$0xff]
    %v641 = vld [vmem:[#allocation5 + $0xb30] sm:$0xff]
    %v642 = vld [vmem:[#allocation5 + $0xb38] sm:$0xff]
    %v643 = vld [vmem:[#allocation5 + $0xb40] sm:$0xff]
    %v644 = vld [vmem:[#allocation5 + $0xb48] sm:$0xff]
    %v645 = vld [vmem:[#allocation5 + $0xb50] sm:$0xff]
    %v646 = vld [vmem:[#allocation5 + $0xb58] sm:$0xff]
    %v647 = vld [vmem:[#allocation5 + $0xb60] sm:$0xff]
    %v648 = vld [vmem:[#allocation5 + $0xb68] sm:$0xff]
    %v649 = vld [vmem:[#allocation5 + $0xb70] sm:$0xff]
    %v650 = vld [vmem:[#allocation5 + $0xb78] sm:$0xff]
    %v651 = vld [vmem:[#allocation5 + $0xb80] sm:$0xff]
    %v652 = vld [vmem:[#allocation5 + $0xb88] sm:$0xff]
    %v653 = vld [vmem:[#allocation5 + $0xb90] sm:$0xff]
    %v654 = vld [vmem:[#allocation5 + $0xb98] sm:$0xff]
    %v655 = vld [vmem:[#allocation5 + $0xba0] sm:$0xff]
    %v656 = vld [vmem:[#allocation5 + $0xba8] sm:$0xff]
    %v657 = vld [vmem:[#allocation5 + $0xbb0] sm:$0xff]
    %v658 = vld [vmem:[#allocation5 + $0xbb8] sm:$0xff]
    %v659 = vld [vmem:[#allocation5 + $0xbc0] sm:$0xff]
    %v660 = vld [vmem:[#allocation5 + $0xbc8] sm:$0xff]
    %v661 = vld [vmem:[#allocation5 + $0xbd0] sm:$0xff]
    %v662 = vld [vmem:[#allocation5 + $0xbd8] sm:$0xff]
    %v663 = vld [vmem:[#allocation5 + $0xbe0] sm:$0xff]
    %v664 = vld [vmem:[#allocation5 + $0xbe8] sm:$0xff]
    %v665 = vld [vmem:[#allocation5 + $0xbf0] sm:$0xff]
    %v666 = vld [vmem:[#allocation5 + $0xbf8] sm:$0xff]
    %v667 = vld [vmem:[#allocation5 + $0xc00] sm:$0xff]
    %v668 = vld [vmem:[#allocation5 + $0xc08] sm:$0xff]
    %v669 = vld [vmem:[#allocation5 + $0xc10] sm:$0xff]
    %v670 = vld [vmem:[#allocation5 + $0xc18] sm:$0xff]
    %v671 = vld [vmem:[#allocation5 + $0xc20] sm:$0xff]
    %v672 = vld [vmem:[#allocation5 + $0xc28] sm:$0xff]
    %v673 = vld [vmem:[#allocation5 + $0xc30] sm:$0xff]
    %v674 = vld [vmem:[#allocation5 + $0xc38] sm:$0xff]
    %v675 = vld [vmem:[#allocation5 + $0xc40] sm:$0xff]
    %v676 = vld [vmem:[#allocation5 + $0xc48] sm:$0xff]
    %v677 = vld [vmem:[#allocation5 + $0xc50] sm:$0xff]
    %v678 = vld [vmem:[#allocation5 + $0xc58] sm:$0xff]
    %v679 = vld [vmem:[#allocation5 + $0xc60] sm:$0xff]
    %v680 = vld [vmem:[#allocation5 + $0xc68] sm:$0xff]
    %v681 = vld [vmem:[#allocation5 + $0xc70] sm:$0xff]
    %v682 = vld [vmem:[#allocation5 + $0xc78] sm:$0xff]
    %v683 = vld [vmem:[#allocation5 + $0xc80] sm:$0xff]
    %v684 = vld [vmem:[#allocation5 + $0xc88] sm:$0xff]
    %v685 = vld [vmem:[#allocation5 + $0xc90] sm:$0xff]
    %v686 = vld [vmem:[#allocation5 + $0xc98] sm:$0xff]
    %v687 = vld [vmem:[#allocation5 + $0xca0] sm:$0xff]
    %v688 = vld [vmem:[#allocation5 + $0xca8] sm:$0xff]
    %v689 = vld [vmem:[#allocation5 + $0xcb0] sm:$0xff]
    %v690 = vld [vmem:[#allocation5 + $0xcb8] sm:$0xff]
    %v691 = vld [vmem:[#allocation5 + $0xcc0] sm:$0xff]
    %v692 = vld [vmem:[#allocation5 + $0xcc8] sm:$0xff]
    %v693 = vld [vmem:[#allocation5 + $0xcd0] sm:$0xff]
    %v694 = vld [vmem:[#allocation5 + $0xcd8] sm:$0xff]
    %v695 = vld [vmem:[#allocation5 + $0xce0] sm:$0xff]
    %v696 = vld [vmem:[#allocation5 + $0xce8] sm:$0xff]
    %v697 = vld [vmem:[#allocation5 + $0xcf0] sm:$0xff]
    %v698 = vld [vmem:[#allocation5 + $0xcf8] sm:$0xff]
    %v699 = vld [vmem:[#allocation5 + $0xd00] sm:$0xff]
    %v700 = vld [vmem:[#allocation5 + $0xd08] sm:$0xff]
    %v701 = vld [vmem:[#allocation5 + $0xd10] sm:$0xff]
    %v702 = vld [vmem:[#allocation5 + $0xd18] sm:$0xff]
    %v703 = vld [vmem:[#allocation5 + $0xd20] sm:$0xff]
    %v704 = vld [vmem:[#allocation5 + $0xd28] sm:$0xff]
    %v705 = vld [vmem:[#allocation5 + $0xd30] sm:$0xff]
    %v706 = vld [vmem:[#allocation5 + $0xd38] sm:$0xff]
    %v707 = vld [vmem:[#allocation5 + $0xd40] sm:$0xff]
    %v708 = vld [vmem:[#allocation5 + $0xd48] sm:$0xff]
    %v709 = vld [vmem:[#allocation5 + $0xd50] sm:$0xff]
    %v710 = vld [vmem:[#allocation5 + $0xd58] sm:$0xff]
    %v711 = vld [vmem:[#allocation5 + $0xd60] sm:$0xff]
    %v712 = vld [vmem:[#allocation5 + $0xd68] sm:$0xff]
    %v713 = vld [vmem:[#allocation5 + $0xd70] sm:$0xff]
    %v714 = vld [vmem:[#allocation5 + $0xd78] sm:$0xff]
    %v715 = vld [vmem:[#allocation5 + $0xd80] sm:$0xff]
    %v716 = vld [vmem:[#allocation5 + $0xd88] sm:$0xff]
    %v717 = vld [vmem:[#allocation5 + $0xd90] sm:$0xff]
    %v718 = vld [vmem:[#allocation5 + $0xd98] sm:$0xff]
    %v719 = vld [vmem:[#allocation5 + $0xda0] sm:$0xff]
    %v720 = vld [vmem:[#allocation5 + $0xda8] sm:$0xff]
    %v721 = vld [vmem:[#allocation5 + $0xdb0] sm:$0xff]
    %v722 = vld [vmem:[#allocation5 + $0xdb8] sm:$0xff]
    %v723 = vld [vmem:[#allocation5 + $0xdc0] sm:$0xff]
    %v724 = vld [vmem:[#allocation5 + $0xdc8] sm:$0xff]
    %v725 = vld [vmem:[#allocation5 + $0xdd0] sm:$0xff]
    %v726 = vld [vmem:[#allocation5 + $0xdd8] sm:$0xff]
    %v727 = vld [vmem:[#allocation5 + $0xde0] sm:$0xff]
    %v728 = vld [vmem:[#allocation5 + $0xde8] sm:$0xff]
    %v729 = vld [vmem:[#allocation5 + $0xdf0] sm:$0xff]
    %v730 = vld [vmem:[#allocation5 + $0xdf8] sm:$0xff]
    %v731 = vld [vmem:[#allocation5 + $0xe00] sm:$0xff]
    %v732 = vld [vmem:[#allocation5 + $0xe08] sm:$0xff]
    %v733 = vld [vmem:[#allocation5 + $0xe10] sm:$0xff]
    %v734 = vld [vmem:[#allocation5 + $0xe18] sm:$0xff]
    %v735 = vld [vmem:[#allocation5 + $0xe20] sm:$0xff]
    %v736 = vld [vmem:[#allocation5 + $0xe28] sm:$0xff]
    %v737 = vld [vmem:[#allocation5 + $0xe30] sm:$0xff]
    %v738 = vld [vmem:[#allocation5 + $0xe38] sm:$0xff]
    %v739 = vld [vmem:[#allocation5 + $0xe40] sm:$0xff]
    %v740 = vld [vmem:[#allocation5 + $0xe48] sm:$0xff]
    %v741 = vld [vmem:[#allocation5 + $0xe50] sm:$0xff]
    %v742 = vld [vmem:[#allocation5 + $0xe58] sm:$0xff]
    %v743 = vld [vmem:[#allocation5 + $0xe60] sm:$0xff]
    %v744 = vld [vmem:[#allocation5 + $0xe68] sm:$0xff]
    %v745 = vld [vmem:[#allocation5 + $0xe70] sm:$0xff]
    %v746 = vld [vmem:[#allocation5 + $0xe78] sm:$0xff]
    %v747 = vld [vmem:[#allocation5 + $0xe80] sm:$0xff]
    %v748 = vld [vmem:[#allocation5 + $0xe88] sm:$0xff]
    %v749 = vld [vmem:[#allocation5 + $0xe90] sm:$0xff]
    %v750 = vld [vmem:[#allocation5 + $0xe98] sm:$0xff]
    %v751 = vld [vmem:[#allocation5 + $0xea0] sm:$0xff]
    %v752 = vld [vmem:[#allocation5 + $0xea8] sm:$0xff]
    %v753 = vld [vmem:[#allocation5 + $0xeb0] sm:$0xff]
    %v754 = vld [vmem:[#allocation5 + $0xeb8] sm:$0xff]
    %v755 = vld [vmem:[#allocation5 + $0xec0] sm:$0xff]
    %v756 = vld [vmem:[#allocation5 + $0xec8] sm:$0xff]
    %v757 = vld [vmem:[#allocation5 + $0xed0] sm:$0xff]
    %v758 = vld [vmem:[#allocation5 + $0xed8] sm:$0xff]
    %v759 = vld [vmem:[#allocation5 + $0xee0] sm:$0xff]
    %v760 = vld [vmem:[#allocation5 + $0xee8] sm:$0xff]
    %v761 = vld [vmem:[#allocation5 + $0xef0] sm:$0xff]
    %v762 = vld [vmem:[#allocation5 + $0xef8] sm:$0xff]
    %v763 = vld [vmem:[#allocation5 + $0xf00] sm:$0xff]
    %v764 = vld [vmem:[#allocation5 + $0xf08] sm:$0xff]
    %v765 = vld [vmem:[#allocation5 + $0xf10] sm:$0xff]
    %v766 = vld [vmem:[#allocation5 + $0xf18] sm:$0xff]
    %v767 = vld [vmem:[#allocation5 + $0xf20] sm:$0xff]
    %v768 = vld [vmem:[#allocation5 + $0xf28] sm:$0xff]
    %v769 = vld [vmem:[#allocation5 + $0xf30] sm:$0xff]
    %v770 = vld [vmem:[#allocation5 + $0xf38] sm:$0xff]
    %v771 = vld [vmem:[#allocation5 + $0xf40] sm:$0xff]
    %v772 = vld [vmem:[#allocation5 + $0xf48] sm:$0xff]
    %v773 = vld [vmem:[#allocation5 + $0xf50] sm:$0xff]
    %v774 = vld [vmem:[#allocation5 + $0xf58] sm:$0xff]
    %v775 = vld [vmem:[#allocation5 + $0xf60] sm:$0xff]
    %v776 = vld [vmem:[#allocation5 + $0xf68] sm:$0xff]
    %v777 = vld [vmem:[#allocation5 + $0xf70] sm:$0xff]
    %v778 = vld [vmem:[#allocation5 + $0xf78] sm:$0xff]
    %v779 = vld [vmem:[#allocation5 + $0xf80] sm:$0xff]
    %v780 = vld [vmem:[#allocation5 + $0xf88] sm:$0xff]
    %v781 = vld [vmem:[#allocation5 + $0xf90] sm:$0xff]
    %v782 = vld [vmem:[#allocation5 + $0xf98] sm:$0xff]
    %v783 = vld [vmem:[#allocation5 + $0xfa0] sm:$0xff]
    %v784 = vld [vmem:[#allocation5 + $0xfa8] sm:$0xff]
    %v785 = vld [vmem:[#allocation5 + $0xfb0] sm:$0xff]
    %v786 = vld [vmem:[#allocation5 + $0xfb8] sm:$0xff]
    %v787 = vld [vmem:[#allocation5 + $0xfc0] sm:$0xff]
    %v788 = vld [vmem:[#allocation5 + $0xfc8] sm:$0xff]
    %v789 = vld [vmem:[#allocation5 + $0xfd0] sm:$0xff]
    %v790 = vld [vmem:[#allocation5 + $0xfd8] sm:$0xff]
    %v791 = vld [vmem:[#allocation5 + $0xfe0] sm:$0xff]
    %v792 = vld [vmem:[#allocation5 + $0xfe8] sm:$0xff]
    %v793 = vld [vmem:[#allocation5 + $0xff0] sm:$0xff]
    %v794 = vld [vmem:[#allocation5 + $0xff8] sm:$0xff]
    %v795 = vld [vmem:[#allocation5 + $0x1000] sm:$0xff]
    %v796 = vld [vmem:[#allocation5 + $0x1008] sm:$0xff]
    %v797 = vld [vmem:[#allocation5 + $0x1010] sm:$0xff]
    %v798 = vld [vmem:[#allocation5 + $0x1018] sm:$0xff]
    %v799 = vld [vmem:[#allocation5 + $0x1020] sm:$0xff]
    %v800 = vld [vmem:[#allocation5 + $0x1028] sm:$0xff]
    %v801 = vld [vmem:[#allocation5 + $0x1030] sm:$0xff]
    %v802 = vld [vmem:[#allocation5 + $0x1038] sm:$0xff]
    %v803 = vld [vmem:[#allocation5 + $0x1040] sm:$0xff]
    %v804 = vld [vmem:[#allocation5 + $0x1048] sm:$0xff]
    %v805 = vld [vmem:[#allocation5 + $0x1050] sm:$0xff]
    %v806 = vld [vmem:[#allocation5 + $0x1058] sm:$0xff]
    %v807 = vld [vmem:[#allocation5 + $0x1060] sm:$0xff]
    %v808 = vld [vmem:[#allocation5 + $0x1068] sm:$0xff]
    %v809 = vld [vmem:[#allocation5 + $0x1070] sm:$0xff]
    %v810 = vld [vmem:[#allocation5 + $0x1078] sm:$0xff]
    %v811 = vld [vmem:[#allocation5 + $0x1080] sm:$0xff]
    %v812 = vld [vmem:[#allocation5 + $0x1088] sm:$0xff]
    %v813 = vld [vmem:[#allocation5 + $0x1090] sm:$0xff]
    %v814 = vld [vmem:[#allocation5 + $0x1098] sm:$0xff]
    %v815 = vld [vmem:[#allocation5 + $0x10a0] sm:$0xff]
    %v816 = vld [vmem:[#allocation5 + $0x10a8] sm:$0xff]
    %v817 = vld [vmem:[#allocation5 + $0x10b0] sm:$0xff]
    %v818 = vld [vmem:[#allocation5 + $0x10b8] sm:$0xff]
    %v819 = vld [vmem:[#allocation5 + $0x10c0] sm:$0xff]
    %v820 = vld [vmem:[#allocation5 + $0x10c8] sm:$0xff]
    %v821 = vld [vmem:[#allocation5 + $0x10d0] sm:$0xff]
    %v822 = vld [vmem:[#allocation5 + $0x10d8] sm:$0xff]
    %v823 = vld [vmem:[#allocation5 + $0x10e0] sm:$0xff]
    %v824 = vld [vmem:[#allocation5 + $0x10e8] sm:$0xff]
    %v825 = vld [vmem:[#allocation5 + $0x10f0] sm:$0xff]
    %v826 = vld [vmem:[#allocation5 + $0x10f8] sm:$0xff]
    %v827 = vld [vmem:[#allocation5 + $0x1100] sm:$0xff]
    %v828 = vld [vmem:[#allocation5 + $0x1108] sm:$0xff]
    %v829 = vld [vmem:[#allocation5 + $0x1110] sm:$0xff]
    %v830 = vld [vmem:[#allocation5 + $0x1118] sm:$0xff]
    %v831 = vld [vmem:[#allocation5 + $0x1120] sm:$0xff]
    %v832 = vld [vmem:[#allocation5 + $0x1128] sm:$0xff]
    %v833 = vld [vmem:[#allocation5 + $0x1130] sm:$0xff]
    %v834 = vld [vmem:[#allocation5 + $0x1138] sm:$0xff]
    %v835 = vld [vmem:[#allocation5 + $0x1140] sm:$0xff]
    %v836 = vld [vmem:[#allocation5 + $0x1148] sm:$0xff]
    %v837 = vld [vmem:[#allocation5 + $0x1150] sm:$0xff]
    %v838 = vld [vmem:[#allocation5 + $0x1158] sm:$0xff]
    %v839 = vld [vmem:[#allocation5 + $0x1160] sm:$0xff]
    %v840 = vld [vmem:[#allocation5 + $0x1168] sm:$0xff]
    %v841 = vld [vmem:[#allocation5 + $0x1170] sm:$0xff]
    %v842 = vld [vmem:[#allocation5 + $0x1178] sm:$0xff]
    %v843 = vld [vmem:[#allocation5 + $0x1180] sm:$0xff]
    %v844 = vld [vmem:[#allocation5 + $0x1188] sm:$0xff]
    %v845 = vld [vmem:[#allocation5 + $0x1190] sm:$0xff]
    %v846 = vld [vmem:[#allocation5 + $0x1198] sm:$0xff]
    %v847 = vld [vmem:[#allocation5 + $0x11a0] sm:$0xff]
    %v848 = vld [vmem:[#allocation5 + $0x11a8] sm:$0xff]
    %v849 = vld [vmem:[#allocation5 + $0x11b0] sm:$0xff]
    %v850 = vld [vmem:[#allocation5 + $0x11b8] sm:$0xff]
    %v851 = vld [vmem:[#allocation5 + $0x11c0] sm:$0xff]
    %v852 = vld [vmem:[#allocation5 + $0x11c8] sm:$0xff]
    %v853 = vld [vmem:[#allocation5 + $0x11d0] sm:$0xff]
    %v854 = vld [vmem:[#allocation5 + $0x11d8] sm:$0xff]
    %v855 = vld [vmem:[#allocation5 + $0x11e0] sm:$0xff]
    %v856 = vld [vmem:[#allocation5 + $0x11e8] sm:$0xff]
    %v857 = vld [vmem:[#allocation5 + $0x11f0] sm:$0xff]
    %v858 = vld [vmem:[#allocation5 + $0x11f8] sm:$0xff]
    %v859 = vld [vmem:[#allocation5 + $0x1200] sm:$0xff]
    %v860 = vld [vmem:[#allocation5 + $0x1208] sm:$0xff]
    %v861 = vld [vmem:[#allocation5 + $0x1210] sm:$0xff]
    %v862 = vld [vmem:[#allocation5 + $0x1218] sm:$0xff]
    %v863 = vld [vmem:[#allocation5 + $0x1220] sm:$0xff]
    %v864 = vld [vmem:[#allocation5 + $0x1228] sm:$0xff]
    %v865 = vld [vmem:[#allocation5 + $0x1230] sm:$0xff]
    %v866 = vld [vmem:[#allocation5 + $0x1238] sm:$0xff]
    %v867 = vld [vmem:[#allocation5 + $0x1240] sm:$0xff]
    %v868 = vld [vmem:[#allocation5 + $0x1248] sm:$0xff]
    %v869 = vld [vmem:[#allocation5 + $0x1250] sm:$0xff]
    %v870 = vld [vmem:[#allocation5 + $0x1258] sm:$0xff]
    %v871 = vld [vmem:[#allocation5 + $0x1260] sm:$0xff]
    %v872 = vld [vmem:[#allocation5 + $0x1268] sm:$0xff]
    %v873 = vld [vmem:[#allocation5 + $0x1270] sm:$0xff]
    %v874 = vld [vmem:[#allocation5 + $0x1278] sm:$0xff]
    %v875 = vld [vmem:[#allocation5 + $0x1280] sm:$0xff]
    %v876 = vld [vmem:[#allocation5 + $0x1288] sm:$0xff]
    %v877 = vld [vmem:[#allocation5 + $0x1290] sm:$0xff]
    %v878 = vld [vmem:[#allocation5 + $0x1298] sm:$0xff]
    %v879 = vld [vmem:[#allocation5 + $0x12a0] sm:$0xff]
    %v880 = vld [vmem:[#allocation5 + $0x12a8] sm:$0xff]
    %v881 = vld [vmem:[#allocation5 + $0x12b0] sm:$0xff]
    %v882 = vld [vmem:[#allocation5 + $0x12b8] sm:$0xff]
    %v883 = vld [vmem:[#allocation5 + $0x12c0] sm:$0xff]
    %v884 = vld [vmem:[#allocation5 + $0x12c8] sm:$0xff]
    %v885 = vld [vmem:[#allocation5 + $0x12d0] sm:$0xff]
    %v886 = vld [vmem:[#allocation5 + $0x12d8] sm:$0xff]
    %v887 = vld [vmem:[#allocation5 + $0x12e0] sm:$0xff]
    %v888 = vld [vmem:[#allocation5 + $0x12e8] sm:$0xff]
    %v889 = vld [vmem:[#allocation5 + $0x12f0] sm:$0xff]
    %v890 = vld [vmem:[#allocation5 + $0x12f8] sm:$0xff]
    %v891 = vld [vmem:[#allocation5 + $0x1300] sm:$0xff]
    %v892 = vld [vmem:[#allocation5 + $0x1308] sm:$0xff]
    %v893 = vld [vmem:[#allocation5 + $0x1310] sm:$0xff]
    %v894 = vld [vmem:[#allocation5 + $0x1318] sm:$0xff]
    %v895 = vld [vmem:[#allocation5 + $0x1320] sm:$0xff]
    %v896 = vld [vmem:[#allocation5 + $0x1328] sm:$0xff]
    %v897 = vld [vmem:[#allocation5 + $0x1330] sm:$0xff]
    %v898 = vld [vmem:[#allocation5 + $0x1338] sm:$0xff]
    %v899 = vld [vmem:[#allocation5 + $0x1340] sm:$0xff]
    %v900 = vld [vmem:[#allocation5 + $0x1348] sm:$0xff]
    %v901 = vld [vmem:[#allocation5 + $0x1350] sm:$0xff]
    %v902 = vld [vmem:[#allocation5 + $0x1358] sm:$0xff]
    %v903 = vld [vmem:[#allocation5 + $0x1360] sm:$0xff]
    %v904 = vld [vmem:[#allocation5 + $0x1368] sm:$0xff]
    %v905 = vld [vmem:[#allocation5 + $0x1370] sm:$0xff]
    %v906 = vld [vmem:[#allocation5 + $0x1378] sm:$0xff]
    %v907 = vld [vmem:[#allocation5 + $0x1380] sm:$0xff]
    %v908 = vld [vmem:[#allocation5 + $0x1388] sm:$0xff]
    %v909 = vld [vmem:[#allocation5 + $0x1390] sm:$0xff]
    %v910 = vld [vmem:[#allocation5 + $0x1398] sm:$0xff]
    %v911 = vld [vmem:[#allocation5 + $0x13a0] sm:$0xff]
    %v912 = vld [vmem:[#allocation5 + $0x13a8] sm:$0xff]
    %v913 = vld [vmem:[#allocation5 + $0x13b0] sm:$0xff]
    %v914 = vld [vmem:[#allocation5 + $0x13b8] sm:$0xff]
    %v915 = vld [vmem:[#allocation5 + $0x13c0] sm:$0xff]
    %v916 = vld [vmem:[#allocation5 + $0x13c8] sm:$0xff]
    %v917 = vld [vmem:[#allocation5 + $0x13d0] sm:$0xff]
    %v918 = vld [vmem:[#allocation5 + $0x13d8] sm:$0xff]
    %v919 = vld [vmem:[#allocation5 + $0x13e0] sm:$0xff]
    %v920 = vld [vmem:[#allocation5 + $0x13e8] sm:$0xff]
    %v921 = vld [vmem:[#allocation5 + $0x13f0] sm:$0xff]
    %v922 = vld [vmem:[#allocation5 + $0x13f8] sm:$0xff]
    %v923 = vld [vmem:[#allocation5 + $0x1400] sm:$0xff]
    %v924 = vld [vmem:[#allocation5 + $0x1408] sm:$0xff]
    %v925 = vld [vmem:[#allocation5 + $0x1410] sm:$0xff]
    %v926 = vld [vmem:[#allocation5 + $0x1418] sm:$0xff]
    %v927 = vld [vmem:[#allocation5 + $0x1420] sm:$0xff]
    %v928 = vld [vmem:[#allocation5 + $0x1428] sm:$0xff]
    %v929 = vld [vmem:[#allocation5 + $0x1430] sm:$0xff]
    %v930 = vld [vmem:[#allocation5 + $0x1438] sm:$0xff]
    %v931 = vld [vmem:[#allocation5 + $0x1440] sm:$0xff]
    %v932 = vld [vmem:[#allocation5 + $0x1448] sm:$0xff]
    %v933 = vld [vmem:[#allocation5 + $0x1450] sm:$0xff]
    %v934 = vld [vmem:[#allocation5 + $0x1458] sm:$0xff]
    %v935 = vld [vmem:[#allocation5 + $0x1460] sm:$0xff]
    %v936 = vld [vmem:[#allocation5 + $0x1468] sm:$0xff]
    %v937 = vld [vmem:[#allocation5 + $0x1470] sm:$0xff]
    %v938 = vld [vmem:[#allocation5 + $0x1478] sm:$0xff]
    %v939 = vld [vmem:[#allocation5 + $0x1480] sm:$0xff]
    %v940 = vld [vmem:[#allocation5 + $0x1488] sm:$0xff]
    %v941 = vld [vmem:[#allocation5 + $0x1490] sm:$0xff]
    %v942 = vld [vmem:[#allocation5 + $0x1498] sm:$0xff]
    %v943 = vld [vmem:[#allocation5 + $0x14a0] sm:$0xff]
    %v944 = vld [vmem:[#allocation5 + $0x14a8] sm:$0xff]
    %v945 = vld [vmem:[#allocation5 + $0x14b0] sm:$0xff]
    %v946 = vld [vmem:[#allocation5 + $0x14b8] sm:$0xff]
    %v947 = vld [vmem:[#allocation5 + $0x14c0] sm:$0xff]
    %v948 = vld [vmem:[#allocation5 + $0x14c8] sm:$0xff]
    %v949 = vld [vmem:[#allocation5 + $0x14d0] sm:$0xff]
    %v950 = vld [vmem:[#allocation5 + $0x14d8] sm:$0xff]
    %v951 = vld [vmem:[#allocation5 + $0x14e0] sm:$0xff]
    %v952 = vld [vmem:[#allocation5 + $0x14e8] sm:$0xff]
    %v953 = vld [vmem:[#allocation5 + $0x14f0] sm:$0xff]
    %v954 = vld [vmem:[#allocation5 + $0x14f8] sm:$0xff]
    %v955 = vld [vmem:[#allocation5 + $0x1500] sm:$0xff]
    %v956 = vld [vmem:[#allocation5 + $0x1508] sm:$0xff]
    %v957 = vld [vmem:[#allocation5 + $0x1510] sm:$0xff]
    %v958 = vld [vmem:[#allocation5 + $0x1518] sm:$0xff]
    %v959 = vld [vmem:[#allocation5 + $0x1520] sm:$0xff]
    %v960 = vld [vmem:[#allocation5 + $0x1528] sm:$0xff]
    %v961 = vld [vmem:[#allocation5 + $0x1530] sm:$0xff]
    %v962 = vld [vmem:[#allocation5 + $0x1538] sm:$0xff]
    %v963 = vld [vmem:[#allocation5 + $0x1540] sm:$0xff]
    %v964 = vld [vmem:[#allocation5 + $0x1548] sm:$0xff]
    %v965 = vld [vmem:[#allocation5 + $0x1550] sm:$0xff]
    %v966 = vld [vmem:[#allocation5 + $0x1558] sm:$0xff]
    %v967 = vld [vmem:[#allocation5 + $0x1560] sm:$0xff]
    %v968 = vld [vmem:[#allocation5 + $0x1568] sm:$0xff]
    %v969 = vld [vmem:[#allocation5 + $0x1570] sm:$0xff]
    %v970 = vld [vmem:[#allocation5 + $0x1578] sm:$0xff]
    %v971 = vld [vmem:[#allocation5 + $0x1580] sm:$0xff]
    %v972 = vld [vmem:[#allocation5 + $0x1588] sm:$0xff]
    %v973 = vld [vmem:[#allocation5 + $0x1590] sm:$0xff]
    %v974 = vld [vmem:[#allocation5 + $0x1598] sm:$0xff]
    %v975 = vld [vmem:[#allocation5 + $0x15a0] sm:$0xff]
    %v976 = vld [vmem:[#allocation5 + $0x15a8] sm:$0xff]
    %v977 = vld [vmem:[#allocation5 + $0x15b0] sm:$0xff]
    %v978 = vld [vmem:[#allocation5 + $0x15b8] sm:$0xff]
    %v979 = vld [vmem:[#allocation5 + $0x15c0] sm:$0xff]
    %v980 = vld [vmem:[#allocation5 + $0x15c8] sm:$0xff]
    %v981 = vld [vmem:[#allocation5 + $0x15d0] sm:$0xff]
    %v982 = vld [vmem:[#allocation5 + $0x15d8] sm:$0xff]
    %v983 = vld [vmem:[#allocation5 + $0x15e0] sm:$0xff]
    %v984 = vld [vmem:[#allocation5 + $0x15e8] sm:$0xff]
    %v985 = vld [vmem:[#allocation5 + $0x15f0] sm:$0xff]
    %v986 = vld [vmem:[#allocation5 + $0x15f8] sm:$0xff]
    %v987 = vld [vmem:[#allocation5 + $0x1600] sm:$0xff]
    %v988 = vld [vmem:[#allocation5 + $0x1608] sm:$0xff]
    %v989 = vld [vmem:[#allocation5 + $0x1610] sm:$0xff]
    %v990 = vld [vmem:[#allocation5 + $0x1618] sm:$0xff]
    %v991 = vld [vmem:[#allocation5 + $0x1620] sm:$0xff]
    %v992 = vld [vmem:[#allocation5 + $0x1628] sm:$0xff]
    %v993 = vld [vmem:[#allocation5 + $0x1630] sm:$0xff]
    %v994 = vld [vmem:[#allocation5 + $0x1638] sm:$0xff]
    %v995 = vld [vmem:[#allocation5 + $0x1640] sm:$0xff]
    %v996 = vld [vmem:[#allocation5 + $0x1648] sm:$0xff]
    %v997 = vld [vmem:[#allocation5 + $0x1650] sm:$0xff]
    %v998 = vld [vmem:[#allocation5 + $0x1658] sm:$0xff]
    %v999 = vld [vmem:[#allocation5 + $0x1660] sm:$0xff]
    %v1000 = vld [vmem:[#allocation5 + $0x1668] sm:$0xff]
    %v1001 = vld [vmem:[#allocation5 + $0x1670] sm:$0xff]
    %v1002 = vld [vmem:[#allocation5 + $0x1678] sm:$0xff]
    %v1003 = vld [vmem:[#allocation5 + $0x1680] sm:$0xff]
    %v1004 = vld [vmem:[#allocation5 + $0x1688] sm:$0xff]
    %v1005 = vld [vmem:[#allocation5 + $0x1690] sm:$0xff]
    %v1006 = vld [vmem:[#allocation5 + $0x1698] sm:$0xff]
    %v1007 = vld [vmem:[#allocation5 + $0x16a0] sm:$0xff]
    %v1008 = vld [vmem:[#allocation5 + $0x16a8] sm:$0xff]
    %v1009 = vld [vmem:[#allocation5 + $0x16b0] sm:$0xff]
    %v1010 = vld [vmem:[#allocation5 + $0x16b8] sm:$0xff]
    %v1011 = vld [vmem:[#allocation5 + $0x16c0] sm:$0xff]
    %v1012 = vld [vmem:[#allocation5 + $0x16c8] sm:$0xff]
    %v1013 = vld [vmem:[#allocation5 + $0x16d0] sm:$0xff]
    %v1014 = vld [vmem:[#allocation5 + $0x16d8] sm:$0xff]
    %v1015 = vld [vmem:[#allocation5 + $0x16e0] sm:$0xff]
    %v1016 = vld [vmem:[#allocation5 + $0x16e8] sm:$0xff]
    %v1017 = vld [vmem:[#allocation5 + $0x16f0] sm:$0xff]
    %v1018 = vld [vmem:[#allocation5 + $0x16f8] sm:$0xff]
    %v1019 = vld [vmem:[#allocation5 + $0x1700] sm:$0xff]
    %v1020 = vld [vmem:[#allocation5 + $0x1708] sm:$0xff]
    %v1021 = vld [vmem:[#allocation5 + $0x1710] sm:$0xff]
    %v1022 = vld [vmem:[#allocation5 + $0x1718] sm:$0xff]
    %v1023 = vld [vmem:[#allocation5 + $0x1720] sm:$0xff]
    %v1024 = vld [vmem:[#allocation5 + $0x1728] sm:$0xff]
    %v1025 = vld [vmem:[#allocation5 + $0x1730] sm:$0xff]
    %v1026 = vld [vmem:[#allocation5 + $0x1738] sm:$0xff]
    %v1027 = vld [vmem:[#allocation5 + $0x1740] sm:$0xff]
    %v1028 = vld [vmem:[#allocation5 + $0x1748] sm:$0xff]
    %v1029 = vld [vmem:[#allocation5 + $0x1750] sm:$0xff]
    %v1030 = vld [vmem:[#allocation5 + $0x1758] sm:$0xff]
    %v1031 = vld [vmem:[#allocation5 + $0x1760] sm:$0xff]
    %v1032 = vld [vmem:[#allocation5 + $0x1768] sm:$0xff]
    %v1033 = vld [vmem:[#allocation5 + $0x1770] sm:$0xff]
    %v1034 = vld [vmem:[#allocation5 + $0x1778] sm:$0xff]
    %v1035 = vld [vmem:[#allocation5 + $0x1780] sm:$0xff]
    %v1036 = vld [vmem:[#allocation5 + $0x1788] sm:$0xff]
    %v1037 = vld [vmem:[#allocation5 + $0x1790] sm:$0xff]
    %v1038 = vld [vmem:[#allocation5 + $0x1798] sm:$0xff]
    %v1039 = vld [vmem:[#allocation5 + $0x17a0] sm:$0xff]
    %v1040 = vld [vmem:[#allocation5 + $0x17a8] sm:$0xff]
    %v1041 = vld [vmem:[#allocation5 + $0x17b0] sm:$0xff]
    %v1042 = vld [vmem:[#allocation5 + $0x17b8] sm:$0xff]
    %v1043 = vld [vmem:[#allocation5 + $0x17c0] sm:$0xff]
    %v1044 = vld [vmem:[#allocation5 + $0x17c8] sm:$0xff]
    %v1045 = vld [vmem:[#allocation5 + $0x17d0] sm:$0xff]
    %v1046 = vld [vmem:[#allocation5 + $0x17d8] sm:$0xff]
    %v1047 = vld [vmem:[#allocation5 + $0x17e0] sm:$0xff]
    %v1048 = vld [vmem:[#allocation5 + $0x17e8] sm:$0xff]
    %v1049 = vld [vmem:[#allocation5 + $0x17f0] sm:$0xff]
    %v1050 = vld [vmem:[#allocation5 + $0x17f8] sm:$0xff]
    %v1051 = vld [vmem:[#allocation5 + $0x1800] sm:$0xff]
    %v1052 = vld [vmem:[#allocation5 + $0x1808] sm:$0xff]
    %v1053 = vld [vmem:[#allocation5 + $0x1810] sm:$0xff]
    %v1054 = vld [vmem:[#allocation5 + $0x1818] sm:$0xff]
    %v1055 = vld [vmem:[#allocation5 + $0x1820] sm:$0xff]
    %v1056 = vld [vmem:[#allocation5 + $0x1828] sm:$0xff]
    %v1057 = vld [vmem:[#allocation5 + $0x1830] sm:$0xff]
    %v1058 = vld [vmem:[#allocation5 + $0x1838] sm:$0xff]
    %v1059 = vld [vmem:[#allocation5 + $0x1840] sm:$0xff]
    %v1060 = vld [vmem:[#allocation5 + $0x1848] sm:$0xff]
    %v1061 = vld [vmem:[#allocation5 + $0x1850] sm:$0xff]
    %v1062 = vld [vmem:[#allocation5 + $0x1858] sm:$0xff]
    %v1063 = vld [vmem:[#allocation5 + $0x1860] sm:$0xff]
    %v1064 = vld [vmem:[#allocation5 + $0x1868] sm:$0xff]
    %v1065 = vld [vmem:[#allocation5 + $0x1870] sm:$0xff]
    %v1066 = vld [vmem:[#allocation5 + $0x1878] sm:$0xff]
    %v1067 = vld [vmem:[#allocation5 + $0x1880] sm:$0xff]
    %v1068 = vld [vmem:[#allocation5 + $0x1888] sm:$0xff]
    %v1069 = vld [vmem:[#allocation5 + $0x1890] sm:$0xff]
    %v1070 = vld [vmem:[#allocation5 + $0x1898] sm:$0xff]
    %v1071 = vld [vmem:[#allocation5 + $0x18a0] sm:$0xff]
    %v1072 = vld [vmem:[#allocation5 + $0x18a8] sm:$0xff]
    %v1073 = vld [vmem:[#allocation5 + $0x18b0] sm:$0xff]
    %v1074 = vld [vmem:[#allocation5 + $0x18b8] sm:$0xff]
    %v1075 = vld [vmem:[#allocation5 + $0x18c0] sm:$0xff]
    %v1076 = vld [vmem:[#allocation5 + $0x18c8] sm:$0xff]
    %v1077 = vld [vmem:[#allocation5 + $0x18d0] sm:$0xff]
    %v1078 = vld [vmem:[#allocation5 + $0x18d8] sm:$0xff]
    %v1079 = vld [vmem:[#allocation5 + $0x18e0] sm:$0xff]
    %v1080 = vld [vmem:[#allocation5 + $0x18e8] sm:$0xff]
    %v1081 = vld [vmem:[#allocation5 + $0x18f0] sm:$0xff]
    %v1082 = vld [vmem:[#allocation5 + $0x18f8] sm:$0xff]
    %v1083 = vld [vmem:[#allocation7] sm:$0x3]
    %v1085 = vperm.slane %v1083, 0
    %v1086 = vperm.slane %v1083, 1
    %v1889 = vunpack.c.l.b16 %v283
    %v1890 = vunpack.c.h.b16 %v283
    %v1891 = vunpack.c.l.b16 %v284
    %v1892 = vunpack.c.h.b16 %v284
    %v1893 = vunpack.c.l.b16 %v285
    %v1894 = vunpack.c.h.b16 %v285
    %v1895 = vunpack.c.l.b16 %v286
    %v1896 = vunpack.c.h.b16 %v286
    %v1897 = vunpack.c.l.b16 %v287
    %v1898 = vunpack.c.h.b16 %v287
    %v1899 = vunpack.c.l.b16 %v288
    %v1900 = vunpack.c.h.b16 %v288
    %v1901 = vunpack.c.l.b16 %v289
    %v1902 = vunpack.c.h.b16 %v289
    %v1903 = vunpack.c.l.b16 %v290
    %v1904 = vunpack.c.h.b16 %v290
    %v1905 = vunpack.c.l.b16 %v291
    %v1906 = vunpack.c.h.b16 %v291
    %v1907 = vunpack.c.l.b16 %v292
    %v1908 = vunpack.c.h.b16 %v292
    %v1909 = vunpack.c.l.b16 %v293
    %v1910 = vunpack.c.h.b16 %v293
    %v1911 = vunpack.c.l.b16 %v294
    %v1912 = vunpack.c.h.b16 %v294
    %v1913 = vunpack.c.l.b16 %v295
    %v1914 = vunpack.c.h.b16 %v295
    %v1915 = vunpack.c.l.b16 %v296
    %v1916 = vunpack.c.h.b16 %v296
    %v1917 = vunpack.c.l.b16 %v297
    %v1918 = vunpack.c.h.b16 %v297
    %v1919 = vunpack.c.l.b16 %v298
    %v1920 = vunpack.c.h.b16 %v298
    %v1921 = vunpack.c.l.b16 %v299
    %v1922 = vunpack.c.h.b16 %v299
    %v1923 = vunpack.c.l.b16 %v300
    %v1924 = vunpack.c.h.b16 %v300
    %v1925 = vunpack.c.l.b16 %v301
    %v1926 = vunpack.c.h.b16 %v301
    %v1927 = vunpack.c.l.b16 %v302
    %v1928 = vunpack.c.h.b16 %v302
    %v1929 = vunpack.c.l.b16 %v303
    %v1930 = vunpack.c.h.b16 %v303
    %v1931 = vunpack.c.l.b16 %v304
    %v1932 = vunpack.c.h.b16 %v304
    %v1933 = vunpack.c.l.b16 %v305
    %v1934 = vunpack.c.h.b16 %v305
    %v1935 = vunpack.c.l.b16 %v306
    %v1936 = vunpack.c.h.b16 %v306
    %v1937 = vunpack.c.l.b16 %v307
    %v1938 = vunpack.c.h.b16 %v307
    %v1939 = vunpack.c.l.b16 %v308
    %v1940 = vunpack.c.h.b16 %v308
    %v1941 = vunpack.c.l.b16 %v309
    %v1942 = vunpack.c.h.b16 %v309
    %v1943 = vunpack.c.l.b16 %v310
    %v1944 = vunpack.c.h.b16 %v310
    %v1945 = vunpack.c.l.b16 %v311
    %v1946 = vunpack.c.h.b16 %v311
    %v1947 = vunpack.c.l.b16 %v312
    %v1948 = vunpack.c.h.b16 %v312
    %v1949 = vunpack.c.l.b16 %v313
    %v1950 = vunpack.c.h.b16 %v313
    %v1951 = vunpack.c.l.b16 %v314
    %v1952 = vunpack.c.h.b16 %v314
    %v1953 = vunpack.c.l.b16 %v315
    %v1954 = vunpack.c.h.b16 %v315
    %v1955 = vunpack.c.l.b16 %v316
    %v1956 = vunpack.c.h.b16 %v316
    %v1957 = vunpack.c.l.b16 %v317
    %v1958 = vunpack.c.h.b16 %v317
    %v1959 = vunpack.c.l.b16 %v318
    %v1960 = vunpack.c.h.b16 %v318
    %v1961 = vunpack.c.l.b16 %v319
    %v1962 = vunpack.c.h.b16 %v319
    %v1963 = vunpack.c.l.b16 %v320
    %v1964 = vunpack.c.h.b16 %v320
    %v1965 = vunpack.c.l.b16 %v321
    %v1966 = vunpack.c.h.b16 %v321
    %v1967 = vunpack.c.l.b16 %v322
    %v1968 = vunpack.c.h.b16 %v322
    %v1969 = vunpack.c.l.b16 %v323
    %v1970 = vunpack.c.h.b16 %v323
    %v1971 = vunpack.c.l.b16 %v324
    %v1972 = vunpack.c.h.b16 %v324
    %v1973 = vunpack.c.l.b16 %v325
    %v1974 = vunpack.c.h.b16 %v325
    %v1975 = vunpack.c.l.b16 %v326
    %v1976 = vunpack.c.h.b16 %v326
    %v1977 = vunpack.c.l.b16 %v327
    %v1978 = vunpack.c.h.b16 %v327
    %v1979 = vunpack.c.l.b16 %v328
    %v1980 = vunpack.c.h.b16 %v328
    %v1981 = vunpack.c.l.b16 %v329
    %v1982 = vunpack.c.h.b16 %v329
    %v1983 = vunpack.c.l.b16 %v330
    %v1984 = vunpack.c.h.b16 %v330
    %v1985 = vunpack.c.l.b16 %v331
    %v1986 = vunpack.c.h.b16 %v331
    %v1987 = vunpack.c.l.b16 %v332
    %v1988 = vunpack.c.h.b16 %v332
    %v1989 = vunpack.c.l.b16 %v333
    %v1990 = vunpack.c.h.b16 %v333
    %v1991 = vunpack.c.l.b16 %v334
    %v1992 = vunpack.c.h.b16 %v334
    %v1993 = vunpack.c.l.b16 %v335
    %v1994 = vunpack.c.h.b16 %v335
    %v1995 = vunpack.c.l.b16 %v336
    %v1996 = vunpack.c.h.b16 %v336
    %v1997 = vunpack.c.l.b16 %v337
    %v1998 = vunpack.c.h.b16 %v337
    %v1999 = vunpack.c.l.b16 %v338
    %v2000 = vunpack.c.h.b16 %v338
    %v2001 = vunpack.c.l.b16 %v339
    %v2002 = vunpack.c.h.b16 %v339
    %v2003 = vunpack.c.l.b16 %v340
    %v2004 = vunpack.c.h.b16 %v340
    %v2005 = vunpack.c.l.b16 %v341
    %v2006 = vunpack.c.h.b16 %v341
    %v2007 = vunpack.c.l.b16 %v342
    %v2008 = vunpack.c.h.b16 %v342
    %v2009 = vunpack.c.l.b16 %v343
    %v2010 = vunpack.c.h.b16 %v343
    %v2011 = vunpack.c.l.b16 %v344
    %v2012 = vunpack.c.h.b16 %v344
    %v2013 = vunpack.c.l.b16 %v345
    %v2014 = vunpack.c.h.b16 %v345
    %v2015 = vunpack.c.l.b16 %v346
    %v2016 = vunpack.c.h.b16 %v346
    %v2017 = vunpack.c.l.b16 %v347
    %v2018 = vunpack.c.h.b16 %v347
    %v2019 = vunpack.c.l.b16 %v348
    %v2020 = vunpack.c.h.b16 %v348
    %v2021 = vunpack.c.l.b16 %v349
    %v2022 = vunpack.c.h.b16 %v349
    %v2023 = vunpack.c.l.b16 %v350
    %v2024 = vunpack.c.h.b16 %v350
    %v2025 = vunpack.c.l.b16 %v351
    %v2026 = vunpack.c.h.b16 %v351
    %v2027 = vunpack.c.l.b16 %v352
    %v2028 = vunpack.c.h.b16 %v352
    %v2029 = vunpack.c.l.b16 %v353
    %v2030 = vunpack.c.h.b16 %v353
    %v2031 = vunpack.c.l.b16 %v354
    %v2032 = vunpack.c.h.b16 %v354
    %v2033 = vunpack.c.l.b16 %v355
    %v2034 = vunpack.c.h.b16 %v355
    %v2035 = vunpack.c.l.b16 %v356
    %v2036 = vunpack.c.h.b16 %v356
    %v2037 = vunpack.c.l.b16 %v357
    %v2038 = vunpack.c.h.b16 %v357
    %v2039 = vunpack.c.l.b16 %v358
    %v2040 = vunpack.c.h.b16 %v358
    %v2041 = vunpack.c.l.b16 %v359
    %v2042 = vunpack.c.h.b16 %v359
    %v2043 = vunpack.c.l.b16 %v360
    %v2044 = vunpack.c.h.b16 %v360
    %v2045 = vunpack.c.l.b16 %v361
    %v2046 = vunpack.c.h.b16 %v361
    %v2047 = vunpack.c.l.b16 %v362
    %v2048 = vunpack.c.h.b16 %v362
    %v2049 = vunpack.c.l.b16 %v363
    %v2050 = vunpack.c.h.b16 %v363
    %v2051 = vunpack.c.l.b16 %v364
    %v2052 = vunpack.c.h.b16 %v364
    %v2053 = vunpack.c.l.b16 %v365
    %v2054 = vunpack.c.h.b16 %v365
    %v2055 = vunpack.c.l.b16 %v366
    %v2056 = vunpack.c.h.b16 %v366
    %v2057 = vunpack.c.l.b16 %v367
    %v2058 = vunpack.c.h.b16 %v367
    %v2059 = vunpack.c.l.b16 %v368
    %v2060 = vunpack.c.h.b16 %v368
    %v2061 = vunpack.c.l.b16 %v369
    %v2062 = vunpack.c.h.b16 %v369
    %v2063 = vunpack.c.l.b16 %v370
    %v2064 = vunpack.c.h.b16 %v370
    %v2065 = vunpack.c.l.b16 %v371
    %v2066 = vunpack.c.h.b16 %v371
    %v2067 = vunpack.c.l.b16 %v372
    %v2068 = vunpack.c.h.b16 %v372
    %v2069 = vunpack.c.l.b16 %v373
    %v2070 = vunpack.c.h.b16 %v373
    %v2071 = vunpack.c.l.b16 %v374
    %v2072 = vunpack.c.h.b16 %v374
    %v2073 = vunpack.c.l.b16 %v375
    %v2074 = vunpack.c.h.b16 %v375
    %v2075 = vunpack.c.l.b16 %v376
    %v2076 = vunpack.c.h.b16 %v376
    %v2077 = vunpack.c.l.b16 %v377
    %v2078 = vunpack.c.h.b16 %v377
    %v2079 = vunpack.c.l.b16 %v378
    %v2080 = vunpack.c.h.b16 %v378
    %v2081 = vunpack.c.l.b16 %v379
    %v2082 = vunpack.c.h.b16 %v379
    %v2083 = vunpack.c.l.b16 %v380
    %v2084 = vunpack.c.h.b16 %v380
    %v2085 = vunpack.c.l.b16 %v381
    %v2086 = vunpack.c.h.b16 %v381
    %v2087 = vunpack.c.l.b16 %v382
    %v2088 = vunpack.c.h.b16 %v382
    %v2089 = vunpack.c.l.b16 %v383
    %v2090 = vunpack.c.h.b16 %v383
    %v2091 = vunpack.c.l.b16 %v384
    %v2092 = vunpack.c.h.b16 %v384
    %v2093 = vunpack.c.l.b16 %v385
    %v2094 = vunpack.c.h.b16 %v385
    %v2095 = vunpack.c.l.b16 %v386
    %v2096 = vunpack.c.h.b16 %v386
    %v2097 = vunpack.c.l.b16 %v387
    %v2098 = vunpack.c.h.b16 %v387
    %v2099 = vunpack.c.l.b16 %v388
    %v2100 = vunpack.c.h.b16 %v388
    %v2101 = vunpack.c.l.b16 %v389
    %v2102 = vunpack.c.h.b16 %v389
    %v2103 = vunpack.c.l.b16 %v390
    %v2104 = vunpack.c.h.b16 %v390
    %v2105 = vunpack.c.l.b16 %v391
    %v2106 = vunpack.c.h.b16 %v391
    %v2107 = vunpack.c.l.b16 %v392
    %v2108 = vunpack.c.h.b16 %v392
    %v2109 = vunpack.c.l.b16 %v393
    %v2110 = vunpack.c.h.b16 %v393
    %v2111 = vunpack.c.l.b16 %v394
    %v2112 = vunpack.c.h.b16 %v394
    %v2113 = vunpack.c.l.b16 %v395
    %v2114 = vunpack.c.h.b16 %v395
    %v2115 = vunpack.c.l.b16 %v396
    %v2116 = vunpack.c.h.b16 %v396
    %v2117 = vunpack.c.l.b16 %v397
    %v2118 = vunpack.c.h.b16 %v397
    %v2119 = vunpack.c.l.b16 %v398
    %v2120 = vunpack.c.h.b16 %v398
    %v2121 = vunpack.c.l.b16 %v399
    %v2122 = vunpack.c.h.b16 %v399
    %v2123 = vunpack.c.l.b16 %v400
    %v2124 = vunpack.c.h.b16 %v400
    %v2125 = vunpack.c.l.b16 %v401
    %v2126 = vunpack.c.h.b16 %v401
    %v2127 = vunpack.c.l.b16 %v402
    %v2128 = vunpack.c.h.b16 %v402
    %v2129 = vunpack.c.l.b16 %v403
    %v2130 = vunpack.c.h.b16 %v403
    %v2131 = vunpack.c.l.b16 %v404
    %v2132 = vunpack.c.h.b16 %v404
    %v2133 = vunpack.c.l.b16 %v405
    %v2134 = vunpack.c.h.b16 %v405
    %v2135 = vunpack.c.l.b16 %v406
    %v2136 = vunpack.c.h.b16 %v406
    %v2137 = vunpack.c.l.b16 %v407
    %v2138 = vunpack.c.h.b16 %v407
    %v2139 = vunpack.c.l.b16 %v408
    %v2140 = vunpack.c.h.b16 %v408
    %v2141 = vunpack.c.l.b16 %v409
    %v2142 = vunpack.c.h.b16 %v409
    %v2143 = vunpack.c.l.b16 %v410
    %v2144 = vunpack.c.h.b16 %v410
    %v2145 = vunpack.c.l.b16 %v411
    %v2146 = vunpack.c.h.b16 %v411
    %v2147 = vunpack.c.l.b16 %v412
    %v2148 = vunpack.c.h.b16 %v412
    %v2149 = vunpack.c.l.b16 %v413
    %v2150 = vunpack.c.h.b16 %v413
    %v2151 = vunpack.c.l.b16 %v414
    %v2152 = vunpack.c.h.b16 %v414
    %v2153 = vunpack.c.l.b16 %v415
    %v2154 = vunpack.c.h.b16 %v415
    %v2155 = vunpack.c.l.b16 %v416
    %v2156 = vunpack.c.h.b16 %v416
    %v2157 = vunpack.c.l.b16 %v417
    %v2158 = vunpack.c.h.b16 %v417
    %v2159 = vunpack.c.l.b16 %v418
    %v2160 = vunpack.c.h.b16 %v418
    %v2161 = vunpack.c.l.b16 %v419
    %v2162 = vunpack.c.h.b16 %v419
    %v2163 = vunpack.c.l.b16 %v420
    %v2164 = vunpack.c.h.b16 %v420
    %v2165 = vunpack.c.l.b16 %v421
    %v2166 = vunpack.c.h.b16 %v421
    %v2167 = vunpack.c.l.b16 %v422
    %v2168 = vunpack.c.h.b16 %v422
    %v2169 = vunpack.c.l.b16 %v423
    %v2170 = vunpack.c.h.b16 %v423
    %v2171 = vunpack.c.l.b16 %v424
    %v2172 = vunpack.c.h.b16 %v424
    %v2173 = vunpack.c.l.b16 %v425
    %v2174 = vunpack.c.h.b16 %v425
    %v2175 = vunpack.c.l.b16 %v426
    %v2176 = vunpack.c.h.b16 %v426
    %v2177 = vunpack.c.l.b16 %v427
    %v2178 = vunpack.c.h.b16 %v427
    %v2179 = vunpack.c.l.b16 %v428
    %v2180 = vunpack.c.h.b16 %v428
    %v2181 = vunpack.c.l.b16 %v429
    %v2182 = vunpack.c.h.b16 %v429
    %v2183 = vunpack.c.l.b16 %v430
    %v2184 = vunpack.c.h.b16 %v430
    %v2185 = vunpack.c.l.b16 %v431
    %v2186 = vunpack.c.h.b16 %v431
    %v2187 = vunpack.c.l.b16 %v432
    %v2188 = vunpack.c.h.b16 %v432
    %v2189 = vunpack.c.l.b16 %v433
    %v2190 = vunpack.c.h.b16 %v433
    %v2191 = vunpack.c.l.b16 %v434
    %v2192 = vunpack.c.h.b16 %v434
    %v2193 = vunpack.c.l.b16 %v435
    %v2194 = vunpack.c.h.b16 %v435
    %v2195 = vunpack.c.l.b16 %v436
    %v2196 = vunpack.c.h.b16 %v436
    %v2197 = vunpack.c.l.b16 %v437
    %v2198 = vunpack.c.h.b16 %v437
    %v2199 = vunpack.c.l.b16 %v438
    %v2200 = vunpack.c.h.b16 %v438
    %v2201 = vunpack.c.l.b16 %v439
    %v2202 = vunpack.c.h.b16 %v439
    %v2203 = vunpack.c.l.b16 %v440
    %v2204 = vunpack.c.h.b16 %v440
    %v2205 = vunpack.c.l.b16 %v441
    %v2206 = vunpack.c.h.b16 %v441
    %v2207 = vunpack.c.l.b16 %v442
    %v2208 = vunpack.c.h.b16 %v442
    %v2209 = vunpack.c.l.b16 %v443
    %v2210 = vunpack.c.h.b16 %v443
    %v2211 = vunpack.c.l.b16 %v444
    %v2212 = vunpack.c.h.b16 %v444
    %v2213 = vunpack.c.l.b16 %v445
    %v2214 = vunpack.c.h.b16 %v445
    %v2215 = vunpack.c.l.b16 %v446
    %v2216 = vunpack.c.h.b16 %v446
    %v2217 = vunpack.c.l.b16 %v447
    %v2218 = vunpack.c.h.b16 %v447
    %v2219 = vunpack.c.l.b16 %v448
    %v2220 = vunpack.c.h.b16 %v448
    %v2221 = vunpack.c.l.b16 %v449
    %v2222 = vunpack.c.h.b16 %v449
    %v2223 = vunpack.c.l.b16 %v450
    %v2224 = vunpack.c.h.b16 %v450
    %v2225 = vunpack.c.l.b16 %v451
    %v2226 = vunpack.c.h.b16 %v451
    %v2227 = vunpack.c.l.b16 %v452
    %v2228 = vunpack.c.h.b16 %v452
    %v2229 = vunpack.c.l.b16 %v453
    %v2230 = vunpack.c.h.b16 %v453
    %v2231 = vunpack.c.l.b16 %v454
    %v2232 = vunpack.c.h.b16 %v454
    %v2233 = vunpack.c.l.b16 %v455
    %v2234 = vunpack.c.h.b16 %v455
    %v2235 = vunpack.c.l.b16 %v456
    %v2236 = vunpack.c.h.b16 %v456
    %v2237 = vunpack.c.l.b16 %v457
    %v2238 = vunpack.c.h.b16 %v457
    %v2239 = vunpack.c.l.b16 %v458
    %v2240 = vunpack.c.h.b16 %v458
    %v2241 = vunpack.c.l.b16 %v459
    %v2242 = vunpack.c.h.b16 %v459
    %v2243 = vunpack.c.l.b16 %v460
    %v2244 = vunpack.c.h.b16 %v460
    %v2245 = vunpack.c.l.b16 %v461
    %v2246 = vunpack.c.h.b16 %v461
    %v2247 = vunpack.c.l.b16 %v462
    %v2248 = vunpack.c.h.b16 %v462
    %v2249 = vunpack.c.l.b16 %v463
    %v2250 = vunpack.c.h.b16 %v463
    %v2251 = vunpack.c.l.b16 %v464
    %v2252 = vunpack.c.h.b16 %v464
    %v2253 = vunpack.c.l.b16 %v465
    %v2254 = vunpack.c.h.b16 %v465
    %v2255 = vunpack.c.l.b16 %v466
    %v2256 = vunpack.c.h.b16 %v466
    %v2257 = vunpack.c.l.b16 %v467
    %v2258 = vunpack.c.h.b16 %v467
    %v2259 = vunpack.c.l.b16 %v468
    %v2260 = vunpack.c.h.b16 %v468
    %v2261 = vunpack.c.l.b16 %v469
    %v2262 = vunpack.c.h.b16 %v469
    %v2263 = vunpack.c.l.b16 %v470
    %v2264 = vunpack.c.h.b16 %v470
    %v2265 = vunpack.c.l.b16 %v471
    %v2266 = vunpack.c.h.b16 %v471
    %v2267 = vunpack.c.l.b16 %v472
    %v2268 = vunpack.c.h.b16 %v472
    %v2269 = vunpack.c.l.b16 %v473
    %v2270 = vunpack.c.h.b16 %v473
    %v2271 = vunpack.c.l.b16 %v474
    %v2272 = vunpack.c.h.b16 %v474
    %v2273 = vunpack.c.l.b16 %v475
    %v2274 = vunpack.c.h.b16 %v475
    %v2275 = vunpack.c.l.b16 %v476
    %v2276 = vunpack.c.h.b16 %v476
    %v2277 = vunpack.c.l.b16 %v477
    %v2278 = vunpack.c.h.b16 %v477
    %v2279 = vunpack.c.l.b16 %v478
    %v2280 = vunpack.c.h.b16 %v478
    %v2281 = vunpack.c.l.b16 %v479
    %v2282 = vunpack.c.h.b16 %v479
    %v2283 = vunpack.c.l.b16 %v480
    %v2284 = vunpack.c.h.b16 %v480
    %v2285 = vunpack.c.l.b16 %v481
    %v2286 = vunpack.c.h.b16 %v481
    %v2287 = vunpack.c.l.b16 %v482
    %v2288 = vunpack.c.h.b16 %v482
    %v2289 = vunpack.c.l.b16 %v483
    %v2290 = vunpack.c.h.b16 %v483
    %v2291 = vunpack.c.l.b16 %v484
    %v2292 = vunpack.c.h.b16 %v484
    %v2293 = vunpack.c.l.b16 %v485
    %v2294 = vunpack.c.h.b16 %v485
    %v2295 = vunpack.c.l.b16 %v486
    %v2296 = vunpack.c.h.b16 %v486
    %v2297 = vunpack.c.l.b16 %v487
    %v2298 = vunpack.c.h.b16 %v487
    %v2299 = vunpack.c.l.b16 %v488
    %v2300 = vunpack.c.h.b16 %v488
    %v2301 = vunpack.c.l.b16 %v489
    %v2302 = vunpack.c.h.b16 %v489
    %v2303 = vunpack.c.l.b16 %v490
    %v2304 = vunpack.c.h.b16 %v490
    %v2305 = vunpack.c.l.b16 %v491
    %v2306 = vunpack.c.h.b16 %v491
    %v2307 = vunpack.c.l.b16 %v492
    %v2308 = vunpack.c.h.b16 %v492
    %v2309 = vunpack.c.l.b16 %v493
    %v2310 = vunpack.c.h.b16 %v493
    %v2311 = vunpack.c.l.b16 %v494
    %v2312 = vunpack.c.h.b16 %v494
    %v2313 = vunpack.c.l.b16 %v495
    %v2314 = vunpack.c.h.b16 %v495
    %v2315 = vunpack.c.l.b16 %v496
    %v2316 = vunpack.c.h.b16 %v496
    %v2317 = vunpack.c.l.b16 %v497
    %v2318 = vunpack.c.h.b16 %v497
    %v2319 = vunpack.c.l.b16 %v498
    %v2320 = vunpack.c.h.b16 %v498
    %v2321 = vunpack.c.l.b16 %v499
    %v2322 = vunpack.c.h.b16 %v499
    %v2323 = vunpack.c.l.b16 %v500
    %v2324 = vunpack.c.h.b16 %v500
    %v2325 = vunpack.c.l.b16 %v501
    %v2326 = vunpack.c.h.b16 %v501
    %v2327 = vunpack.c.l.b16 %v502
    %v2328 = vunpack.c.h.b16 %v502
    %v2329 = vunpack.c.l.b16 %v503
    %v2330 = vunpack.c.h.b16 %v503
    %v2331 = vunpack.c.l.b16 %v504
    %v2332 = vunpack.c.h.b16 %v504
    %v2333 = vunpack.c.l.b16 %v505
    %v2334 = vunpack.c.h.b16 %v505
    %v2335 = vunpack.c.l.b16 %v506
    %v2336 = vunpack.c.h.b16 %v506
    %v2337 = vunpack.c.l.b16 %v507
    %v2338 = vunpack.c.h.b16 %v507
    %v2339 = vunpack.c.l.b16 %v508
    %v2340 = vunpack.c.h.b16 %v508
    %v2341 = vunpack.c.l.b16 %v509
    %v2342 = vunpack.c.h.b16 %v509
    %v2343 = vunpack.c.l.b16 %v510
    %v2344 = vunpack.c.h.b16 %v510
    %v2345 = vunpack.c.l.b16 %v511
    %v2346 = vunpack.c.h.b16 %v511
    %v2347 = vunpack.c.l.b16 %v512
    %v2348 = vunpack.c.h.b16 %v512
    %v2349 = vunpack.c.l.b16 %v513
    %v2350 = vunpack.c.h.b16 %v513
    %v2351 = vunpack.c.l.b16 %v514
    %v2352 = vunpack.c.h.b16 %v514
    %v2353 = vunpack.c.l.b16 %v515
    %v2354 = vunpack.c.h.b16 %v515
    %v2355 = vunpack.c.l.b16 %v516
    %v2356 = vunpack.c.h.b16 %v516
    %v2357 = vunpack.c.l.b16 %v517
    %v2358 = vunpack.c.h.b16 %v517
    %v2359 = vunpack.c.l.b16 %v518
    %v2360 = vunpack.c.h.b16 %v518
    %v2361 = vunpack.c.l.b16 %v519
    %v2362 = vunpack.c.h.b16 %v519
    %v2363 = vunpack.c.l.b16 %v520
    %v2364 = vunpack.c.h.b16 %v520
    %v2365 = vunpack.c.l.b16 %v521
    %v2366 = vunpack.c.h.b16 %v521
    %v2367 = vunpack.c.l.b16 %v522
    %v2368 = vunpack.c.h.b16 %v522
    %v2369 = vunpack.c.l.b16 %v523
    %v2370 = vunpack.c.h.b16 %v523
    %v2371 = vunpack.c.l.b16 %v524
    %v2372 = vunpack.c.h.b16 %v524
    %v2373 = vunpack.c.l.b16 %v525
    %v2374 = vunpack.c.h.b16 %v525
    %v2375 = vunpack.c.l.b16 %v526
    %v2376 = vunpack.c.h.b16 %v526
    %v2377 = vunpack.c.l.b16 %v527
    %v2378 = vunpack.c.h.b16 %v527
    %v2379 = vunpack.c.l.b16 %v528
    %v2380 = vunpack.c.h.b16 %v528
    %v2381 = vunpack.c.l.b16 %v529
    %v2382 = vunpack.c.h.b16 %v529
    %v2383 = vunpack.c.l.b16 %v530
    %v2384 = vunpack.c.h.b16 %v530
    %v2385 = vunpack.c.l.b16 %v531
    %v2386 = vunpack.c.h.b16 %v531
    %v2387 = vunpack.c.l.b16 %v532
    %v2388 = vunpack.c.h.b16 %v532
    %v2389 = vunpack.c.l.b16 %v533
    %v2390 = vunpack.c.h.b16 %v533
    %v2391 = vunpack.c.l.b16 %v534
    %v2392 = vunpack.c.h.b16 %v534
    %v2393 = vunpack.c.l.b16 %v535
    %v2394 = vunpack.c.h.b16 %v535
    %v2395 = vunpack.c.l.b16 %v536
    %v2396 = vunpack.c.h.b16 %v536
    %v2397 = vunpack.c.l.b16 %v537
    %v2398 = vunpack.c.h.b16 %v537
    %v2399 = vunpack.c.l.b16 %v538
    %v2400 = vunpack.c.h.b16 %v538
    %v2401 = vunpack.c.l.b16 %v539
    %v2402 = vunpack.c.h.b16 %v539
    %v2403 = vunpack.c.l.b16 %v540
    %v2404 = vunpack.c.h.b16 %v540
    %v2405 = vunpack.c.l.b16 %v541
    %v2406 = vunpack.c.h.b16 %v541
    %v2407 = vunpack.c.l.b16 %v542
    %v2408 = vunpack.c.h.b16 %v542
    %v2409 = vunpack.c.l.b16 %v543
    %v2410 = vunpack.c.h.b16 %v543
    %v2411 = vunpack.c.l.b16 %v544
    %v2412 = vunpack.c.h.b16 %v544
    %v2413 = vunpack.c.l.b16 %v545
    %v2414 = vunpack.c.h.b16 %v545
    %v2415 = vunpack.c.l.b16 %v546
    %v2416 = vunpack.c.h.b16 %v546
    %v2417 = vunpack.c.l.b16 %v547
    %v2418 = vunpack.c.h.b16 %v547
    %v2419 = vunpack.c.l.b16 %v548
    %v2420 = vunpack.c.h.b16 %v548
    %v2421 = vunpack.c.l.b16 %v549
    %v2422 = vunpack.c.h.b16 %v549
    %v2423 = vunpack.c.l.b16 %v550
    %v2424 = vunpack.c.h.b16 %v550
    %v2425 = vunpack.c.l.b16 %v551
    %v2426 = vunpack.c.h.b16 %v551
    %v2427 = vunpack.c.l.b16 %v552
    %v2428 = vunpack.c.h.b16 %v552
    %v2429 = vunpack.c.l.b16 %v553
    %v2430 = vunpack.c.h.b16 %v553
    %v2431 = vunpack.c.l.b16 %v554
    %v2432 = vunpack.c.h.b16 %v554
    %v2433 = vunpack.c.l.b16 %v555
    %v2434 = vunpack.c.h.b16 %v555
    %v2435 = vunpack.c.l.b16 %v556
    %v2436 = vunpack.c.h.b16 %v556
    %v2437 = vunpack.c.l.b16 %v557
    %v2438 = vunpack.c.h.b16 %v557
    %v2439 = vunpack.c.l.b16 %v558
    %v2440 = vunpack.c.h.b16 %v558
    %v2441 = vunpack.c.l.b16 %v559
    %v2442 = vunpack.c.h.b16 %v559
    %v2443 = vunpack.c.l.b16 %v560
    %v2444 = vunpack.c.h.b16 %v560
    %v2445 = vunpack.c.l.b16 %v561
    %v2446 = vunpack.c.h.b16 %v561
    %v2447 = vunpack.c.l.b16 %v562
    %v2448 = vunpack.c.h.b16 %v562
    %v2449 = vunpack.c.l.b16 %v563
    %v2450 = vunpack.c.h.b16 %v563
    %v2451 = vunpack.c.l.b16 %v564
    %v2452 = vunpack.c.h.b16 %v564
    %v2453 = vunpack.c.l.b16 %v565
    %v2454 = vunpack.c.h.b16 %v565
    %v2455 = vunpack.c.l.b16 %v566
    %v2456 = vunpack.c.h.b16 %v566
    %v2457 = vunpack.c.l.b16 %v567
    %v2458 = vunpack.c.h.b16 %v567
    %v2459 = vunpack.c.l.b16 %v568
    %v2460 = vunpack.c.h.b16 %v568
    %v2461 = vunpack.c.l.b16 %v569
    %v2462 = vunpack.c.h.b16 %v569
    %v2463 = vunpack.c.l.b16 %v570
    %v2464 = vunpack.c.h.b16 %v570
    %v2465 = vunpack.c.l.b16 %v571
    %v2466 = vunpack.c.h.b16 %v571
    %v2467 = vunpack.c.l.b16 %v572
    %v2468 = vunpack.c.h.b16 %v572
    %v2469 = vunpack.c.l.b16 %v573
    %v2470 = vunpack.c.h.b16 %v573
    %v2471 = vunpack.c.l.b16 %v574
    %v2472 = vunpack.c.h.b16 %v574
    %v2473 = vunpack.c.l.b16 %v575
    %v2474 = vunpack.c.h.b16 %v575
    %v2475 = vunpack.c.l.b16 %v576
    %v2476 = vunpack.c.h.b16 %v576
    %v2477 = vunpack.c.l.b16 %v577
    %v2478 = vunpack.c.h.b16 %v577
    %v2479 = vunpack.c.l.b16 %v578
    %v2480 = vunpack.c.h.b16 %v578
    %v2481 = vunpack.c.l.b16 %v579
    %v2482 = vunpack.c.h.b16 %v579
    %v2483 = vunpack.c.l.b16 %v580
    %v2484 = vunpack.c.h.b16 %v580
    %v2485 = vunpack.c.l.b16 %v581
    %v2486 = vunpack.c.h.b16 %v581
    %v2487 = vunpack.c.l.b16 %v582
    %v2488 = vunpack.c.h.b16 %v582
    %v2489 = vunpack.c.l.b16 %v583
    %v2490 = vunpack.c.h.b16 %v583
    %v2491 = vunpack.c.l.b16 %v584
    %v2492 = vunpack.c.h.b16 %v584
    %v2493 = vunpack.c.l.b16 %v585
    %v2494 = vunpack.c.h.b16 %v585
    %v2495 = vunpack.c.l.b16 %v586
    %v2496 = vunpack.c.h.b16 %v586
    %v2497 = vunpack.c.l.b16 %v587
    %v2498 = vunpack.c.h.b16 %v587
    %v2499 = vunpack.c.l.b16 %v588
    %v2500 = vunpack.c.h.b16 %v588
    %v2501 = vunpack.c.l.b16 %v589
    %v2502 = vunpack.c.h.b16 %v589
    %v2503 = vunpack.c.l.b16 %v590
    %v2504 = vunpack.c.h.b16 %v590
    %v2505 = vunpack.c.l.b16 %v591
    %v2506 = vunpack.c.h.b16 %v591
    %v2507 = vunpack.c.l.b16 %v592
    %v2508 = vunpack.c.h.b16 %v592
    %v2509 = vunpack.c.l.b16 %v593
    %v2510 = vunpack.c.h.b16 %v593
    %v2511 = vunpack.c.l.b16 %v594
    %v2512 = vunpack.c.h.b16 %v594
    %v2513 = vunpack.c.l.b16 %v595
    %v2514 = vunpack.c.h.b16 %v595
    %v2515 = vunpack.c.l.b16 %v596
    %v2516 = vunpack.c.h.b16 %v596
    %v2517 = vunpack.c.l.b16 %v597
    %v2518 = vunpack.c.h.b16 %v597
    %v2519 = vunpack.c.l.b16 %v598
    %v2520 = vunpack.c.h.b16 %v598
    %v2521 = vunpack.c.l.b16 %v599
    %v2522 = vunpack.c.h.b16 %v599
    %v2523 = vunpack.c.l.b16 %v600
    %v2524 = vunpack.c.h.b16 %v600
    %v2525 = vunpack.c.l.b16 %v601
    %v2526 = vunpack.c.h.b16 %v601
    %v2527 = vunpack.c.l.b16 %v602
    %v2528 = vunpack.c.h.b16 %v602
    %v2529 = vunpack.c.l.b16 %v603
    %v2530 = vunpack.c.h.b16 %v603
    %v2531 = vunpack.c.l.b16 %v604
    %v2532 = vunpack.c.h.b16 %v604
    %v2533 = vunpack.c.l.b16 %v605
    %v2534 = vunpack.c.h.b16 %v605
    %v2535 = vunpack.c.l.b16 %v606
    %v2536 = vunpack.c.h.b16 %v606
    %v2537 = vunpack.c.l.b16 %v607
    %v2538 = vunpack.c.h.b16 %v607
    %v2539 = vunpack.c.l.b16 %v608
    %v2540 = vunpack.c.h.b16 %v608
    %v2541 = vunpack.c.l.b16 %v609
    %v2542 = vunpack.c.h.b16 %v609
    %v2543 = vunpack.c.l.b16 %v610
    %v2544 = vunpack.c.h.b16 %v610
    %v2545 = vunpack.c.l.b16 %v611
    %v2546 = vunpack.c.h.b16 %v611
    %v2547 = vunpack.c.l.b16 %v612
    %v2548 = vunpack.c.h.b16 %v612
    %v2549 = vunpack.c.l.b16 %v613
    %v2550 = vunpack.c.h.b16 %v613
    %v2551 = vunpack.c.l.b16 %v614
    %v2552 = vunpack.c.h.b16 %v614
    %v2553 = vunpack.c.l.b16 %v615
    %v2554 = vunpack.c.h.b16 %v615
    %v2555 = vunpack.c.l.b16 %v616
    %v2556 = vunpack.c.h.b16 %v616
    %v2557 = vunpack.c.l.b16 %v617
    %v2558 = vunpack.c.h.b16 %v617
    %v2559 = vunpack.c.l.b16 %v618
    %v2560 = vunpack.c.h.b16 %v618
    %v2561 = vunpack.c.l.b16 %v619
    %v2562 = vunpack.c.h.b16 %v619
    %v2563 = vunpack.c.l.b16 %v620
    %v2564 = vunpack.c.h.b16 %v620
    %v2565 = vunpack.c.l.b16 %v621
    %v2566 = vunpack.c.h.b16 %v621
    %v2567 = vunpack.c.l.b16 %v622
    %v2568 = vunpack.c.h.b16 %v622
    %v2569 = vunpack.c.l.b16 %v623
    %v2570 = vunpack.c.h.b16 %v623
    %v2571 = vunpack.c.l.b16 %v624
    %v2572 = vunpack.c.h.b16 %v624
    %v2573 = vunpack.c.l.b16 %v625
    %v2574 = vunpack.c.h.b16 %v625
    %v2575 = vunpack.c.l.b16 %v626
    %v2576 = vunpack.c.h.b16 %v626
    %v2577 = vunpack.c.l.b16 %v627
    %v2578 = vunpack.c.h.b16 %v627
    %v2579 = vunpack.c.l.b16 %v628
    %v2580 = vunpack.c.h.b16 %v628
    %v2581 = vunpack.c.l.b16 %v629
    %v2582 = vunpack.c.h.b16 %v629
    %v2583 = vunpack.c.l.b16 %v630
    %v2584 = vunpack.c.h.b16 %v630
    %v2585 = vunpack.c.l.b16 %v631
    %v2586 = vunpack.c.h.b16 %v631
    %v2587 = vunpack.c.l.b16 %v632
    %v2588 = vunpack.c.h.b16 %v632
    %v2589 = vunpack.c.l.b16 %v633
    %v2590 = vunpack.c.h.b16 %v633
    %v2591 = vunpack.c.l.b16 %v634
    %v2592 = vunpack.c.h.b16 %v634
    %v2593 = vunpack.c.l.b16 %v635
    %v2594 = vunpack.c.h.b16 %v635
    %v2595 = vunpack.c.l.b16 %v636
    %v2596 = vunpack.c.h.b16 %v636
    %v2597 = vunpack.c.l.b16 %v637
    %v2598 = vunpack.c.h.b16 %v637
    %v2599 = vunpack.c.l.b16 %v638
    %v2600 = vunpack.c.h.b16 %v638
    %v2601 = vunpack.c.l.b16 %v639
    %v2602 = vunpack.c.h.b16 %v639
    %v2603 = vunpack.c.l.b16 %v640
    %v2604 = vunpack.c.h.b16 %v640
    %v2605 = vunpack.c.l.b16 %v641
    %v2606 = vunpack.c.h.b16 %v641
    %v2607 = vunpack.c.l.b16 %v642
    %v2608 = vunpack.c.h.b16 %v642
    %v2609 = vunpack.c.l.b16 %v643
    %v2610 = vunpack.c.h.b16 %v643
    %v2611 = vunpack.c.l.b16 %v644
    %v2612 = vunpack.c.h.b16 %v644
    %v2613 = vunpack.c.l.b16 %v645
    %v2614 = vunpack.c.h.b16 %v645
    %v2615 = vunpack.c.l.b16 %v646
    %v2616 = vunpack.c.h.b16 %v646
    %v2617 = vunpack.c.l.b16 %v647
    %v2618 = vunpack.c.h.b16 %v647
    %v2619 = vunpack.c.l.b16 %v648
    %v2620 = vunpack.c.h.b16 %v648
    %v2621 = vunpack.c.l.b16 %v649
    %v2622 = vunpack.c.h.b16 %v649
    %v2623 = vunpack.c.l.b16 %v650
    %v2624 = vunpack.c.h.b16 %v650
    %v2625 = vunpack.c.l.b16 %v651
    %v2626 = vunpack.c.h.b16 %v651
    %v2627 = vunpack.c.l.b16 %v652
    %v2628 = vunpack.c.h.b16 %v652
    %v2629 = vunpack.c.l.b16 %v653
    %v2630 = vunpack.c.h.b16 %v653
    %v2631 = vunpack.c.l.b16 %v654
    %v2632 = vunpack.c.h.b16 %v654
    %v2633 = vunpack.c.l.b16 %v655
    %v2634 = vunpack.c.h.b16 %v655
    %v2635 = vunpack.c.l.b16 %v656
    %v2636 = vunpack.c.h.b16 %v656
    %v2637 = vunpack.c.l.b16 %v657
    %v2638 = vunpack.c.h.b16 %v657
    %v2639 = vunpack.c.l.b16 %v658
    %v2640 = vunpack.c.h.b16 %v658
    %v2641 = vunpack.c.l.b16 %v659
    %v2642 = vunpack.c.h.b16 %v659
    %v2643 = vunpack.c.l.b16 %v660
    %v2644 = vunpack.c.h.b16 %v660
    %v2645 = vunpack.c.l.b16 %v661
    %v2646 = vunpack.c.h.b16 %v661
    %v2647 = vunpack.c.l.b16 %v662
    %v2648 = vunpack.c.h.b16 %v662
    %v2649 = vunpack.c.l.b16 %v663
    %v2650 = vunpack.c.h.b16 %v663
    %v2651 = vunpack.c.l.b16 %v664
    %v2652 = vunpack.c.h.b16 %v664
    %v2653 = vunpack.c.l.b16 %v665
    %v2654 = vunpack.c.h.b16 %v665
    %v2655 = vunpack.c.l.b16 %v666
    %v2656 = vunpack.c.h.b16 %v666
    %v2657 = vunpack.c.l.b16 %v667
    %v2658 = vunpack.c.h.b16 %v667
    %v2659 = vunpack.c.l.b16 %v668
    %v2660 = vunpack.c.h.b16 %v668
    %v2661 = vunpack.c.l.b16 %v669
    %v2662 = vunpack.c.h.b16 %v669
    %v2663 = vunpack.c.l.b16 %v670
    %v2664 = vunpack.c.h.b16 %v670
    %v2665 = vunpack.c.l.b16 %v671
    %v2666 = vunpack.c.h.b16 %v671
    %v2667 = vunpack.c.l.b16 %v672
    %v2668 = vunpack.c.h.b16 %v672
    %v2669 = vunpack.c.l.b16 %v673
    %v2670 = vunpack.c.h.b16 %v673
    %v2671 = vunpack.c.l.b16 %v674
    %v2672 = vunpack.c.h.b16 %v674
    %v2673 = vunpack.c.l.b16 %v675
    %v2674 = vunpack.c.h.b16 %v675
    %v2675 = vunpack.c.l.b16 %v676
    %v2676 = vunpack.c.h.b16 %v676
    %v2677 = vunpack.c.l.b16 %v677
    %v2678 = vunpack.c.h.b16 %v677
    %v2679 = vunpack.c.l.b16 %v678
    %v2680 = vunpack.c.h.b16 %v678
    %v2681 = vunpack.c.l.b16 %v679
    %v2682 = vunpack.c.h.b16 %v679
    %v2683 = vunpack.c.l.b16 %v680
    %v2684 = vunpack.c.h.b16 %v680
    %v2685 = vunpack.c.l.b16 %v681
    %v2686 = vunpack.c.h.b16 %v681
    %v2687 = vunpack.c.l.b16 %v682
    %v2688 = vunpack.c.h.b16 %v682
    %v2689 = vunpack.c.l.b16 %v683
    %v2690 = vunpack.c.h.b16 %v683
    %v2691 = vunpack.c.l.b16 %v684
    %v2692 = vunpack.c.h.b16 %v684
    %v2693 = vunpack.c.l.b16 %v685
    %v2694 = vunpack.c.h.b16 %v685
    %v2695 = vunpack.c.l.b16 %v686
    %v2696 = vunpack.c.h.b16 %v686
    %v2697 = vunpack.c.l.b16 %v687
    %v2698 = vunpack.c.h.b16 %v687
    %v2699 = vunpack.c.l.b16 %v688
    %v2700 = vunpack.c.h.b16 %v688
    %v2701 = vunpack.c.l.b16 %v689
    %v2702 = vunpack.c.h.b16 %v689
    %v2703 = vunpack.c.l.b16 %v690
    %v2704 = vunpack.c.h.b16 %v690
    %v2705 = vunpack.c.l.b16 %v691
    %v2706 = vunpack.c.h.b16 %v691
    %v2707 = vunpack.c.l.b16 %v692
    %v2708 = vunpack.c.h.b16 %v692
    %v2709 = vunpack.c.l.b16 %v693
    %v2710 = vunpack.c.h.b16 %v693
    %v2711 = vunpack.c.l.b16 %v694
    %v2712 = vunpack.c.h.b16 %v694
    %v2713 = vunpack.c.l.b16 %v695
    %v2714 = vunpack.c.h.b16 %v695
    %v2715 = vunpack.c.l.b16 %v696
    %v2716 = vunpack.c.h.b16 %v696
    %v2717 = vunpack.c.l.b16 %v697
    %v2718 = vunpack.c.h.b16 %v697
    %v2719 = vunpack.c.l.b16 %v698
    %v2720 = vunpack.c.h.b16 %v698
    %v2721 = vunpack.c.l.b16 %v699
    %v2722 = vunpack.c.h.b16 %v699
    %v2723 = vunpack.c.l.b16 %v700
    %v2724 = vunpack.c.h.b16 %v700
    %v2725 = vunpack.c.l.b16 %v701
    %v2726 = vunpack.c.h.b16 %v701
    %v2727 = vunpack.c.l.b16 %v702
    %v2728 = vunpack.c.h.b16 %v702
    %v2729 = vunpack.c.l.b16 %v703
    %v2730 = vunpack.c.h.b16 %v703
    %v2731 = vunpack.c.l.b16 %v704
    %v2732 = vunpack.c.h.b16 %v704
    %v2733 = vunpack.c.l.b16 %v705
    %v2734 = vunpack.c.h.b16 %v705
    %v2735 = vunpack.c.l.b16 %v706
    %v2736 = vunpack.c.h.b16 %v706
    %v2737 = vunpack.c.l.b16 %v707
    %v2738 = vunpack.c.h.b16 %v707
    %v2739 = vunpack.c.l.b16 %v708
    %v2740 = vunpack.c.h.b16 %v708
    %v2741 = vunpack.c.l.b16 %v709
    %v2742 = vunpack.c.h.b16 %v709
    %v2743 = vunpack.c.l.b16 %v710
    %v2744 = vunpack.c.h.b16 %v710
    %v2745 = vunpack.c.l.b16 %v711
    %v2746 = vunpack.c.h.b16 %v711
    %v2747 = vunpack.c.l.b16 %v712
    %v2748 = vunpack.c.h.b16 %v712
    %v2749 = vunpack.c.l.b16 %v713
    %v2750 = vunpack.c.h.b16 %v713
    %v2751 = vunpack.c.l.b16 %v714
    %v2752 = vunpack.c.h.b16 %v714
    %v2753 = vunpack.c.l.b16 %v715
    %v2754 = vunpack.c.h.b16 %v715
    %v2755 = vunpack.c.l.b16 %v716
    %v2756 = vunpack.c.h.b16 %v716
    %v2757 = vunpack.c.l.b16 %v717
    %v2758 = vunpack.c.h.b16 %v717
    %v2759 = vunpack.c.l.b16 %v718
    %v2760 = vunpack.c.h.b16 %v718
    %v2761 = vunpack.c.l.b16 %v719
    %v2762 = vunpack.c.h.b16 %v719
    %v2763 = vunpack.c.l.b16 %v720
    %v2764 = vunpack.c.h.b16 %v720
    %v2765 = vunpack.c.l.b16 %v721
    %v2766 = vunpack.c.h.b16 %v721
    %v2767 = vunpack.c.l.b16 %v722
    %v2768 = vunpack.c.h.b16 %v722
    %v2769 = vunpack.c.l.b16 %v723
    %v2770 = vunpack.c.h.b16 %v723
    %v2771 = vunpack.c.l.b16 %v724
    %v2772 = vunpack.c.h.b16 %v724
    %v2773 = vunpack.c.l.b16 %v725
    %v2774 = vunpack.c.h.b16 %v725
    %v2775 = vunpack.c.l.b16 %v726
    %v2776 = vunpack.c.h.b16 %v726
    %v2777 = vunpack.c.l.b16 %v727
    %v2778 = vunpack.c.h.b16 %v727
    %v2779 = vunpack.c.l.b16 %v728
    %v2780 = vunpack.c.h.b16 %v728
    %v2781 = vunpack.c.l.b16 %v729
    %v2782 = vunpack.c.h.b16 %v729
    %v2783 = vunpack.c.l.b16 %v730
    %v2784 = vunpack.c.h.b16 %v730
    %v2785 = vunpack.c.l.b16 %v731
    %v2786 = vunpack.c.h.b16 %v731
    %v2787 = vunpack.c.l.b16 %v732
    %v2788 = vunpack.c.h.b16 %v732
    %v2789 = vunpack.c.l.b16 %v733
    %v2790 = vunpack.c.h.b16 %v733
    %v2791 = vunpack.c.l.b16 %v734
    %v2792 = vunpack.c.h.b16 %v734
    %v2793 = vunpack.c.l.b16 %v735
    %v2794 = vunpack.c.h.b16 %v735
    %v2795 = vunpack.c.l.b16 %v736
    %v2796 = vunpack.c.h.b16 %v736
    %v2797 = vunpack.c.l.b16 %v737
    %v2798 = vunpack.c.h.b16 %v737
    %v2799 = vunpack.c.l.b16 %v738
    %v2800 = vunpack.c.h.b16 %v738
    %v2801 = vunpack.c.l.b16 %v739
    %v2802 = vunpack.c.h.b16 %v739
    %v2803 = vunpack.c.l.b16 %v740
    %v2804 = vunpack.c.h.b16 %v740
    %v2805 = vunpack.c.l.b16 %v741
    %v2806 = vunpack.c.h.b16 %v741
    %v2807 = vunpack.c.l.b16 %v742
    %v2808 = vunpack.c.h.b16 %v742
    %v2809 = vunpack.c.l.b16 %v743
    %v2810 = vunpack.c.h.b16 %v743
    %v2811 = vunpack.c.l.b16 %v744
    %v2812 = vunpack.c.h.b16 %v744
    %v2813 = vunpack.c.l.b16 %v745
    %v2814 = vunpack.c.h.b16 %v745
    %v2815 = vunpack.c.l.b16 %v746
    %v2816 = vunpack.c.h.b16 %v746
    %v2817 = vunpack.c.l.b16 %v747
    %v2818 = vunpack.c.h.b16 %v747
    %v2819 = vunpack.c.l.b16 %v748
    %v2820 = vunpack.c.h.b16 %v748
    %v2821 = vunpack.c.l.b16 %v749
    %v2822 = vunpack.c.h.b16 %v749
    %v2823 = vunpack.c.l.b16 %v750
    %v2824 = vunpack.c.h.b16 %v750
    %v2825 = vunpack.c.l.b16 %v751
    %v2826 = vunpack.c.h.b16 %v751
    %v2827 = vunpack.c.l.b16 %v752
    %v2828 = vunpack.c.h.b16 %v752
    %v2829 = vunpack.c.l.b16 %v753
    %v2830 = vunpack.c.h.b16 %v753
    %v2831 = vunpack.c.l.b16 %v754
    %v2832 = vunpack.c.h.b16 %v754
    %v2833 = vunpack.c.l.b16 %v755
    %v2834 = vunpack.c.h.b16 %v755
    %v2835 = vunpack.c.l.b16 %v756
    %v2836 = vunpack.c.h.b16 %v756
    %v2837 = vunpack.c.l.b16 %v757
    %v2838 = vunpack.c.h.b16 %v757
    %v2839 = vunpack.c.l.b16 %v758
    %v2840 = vunpack.c.h.b16 %v758
    %v2841 = vunpack.c.l.b16 %v759
    %v2842 = vunpack.c.h.b16 %v759
    %v2843 = vunpack.c.l.b16 %v760
    %v2844 = vunpack.c.h.b16 %v760
    %v2845 = vunpack.c.l.b16 %v761
    %v2846 = vunpack.c.h.b16 %v761
    %v2847 = vunpack.c.l.b16 %v762
    %v2848 = vunpack.c.h.b16 %v762
    %v2849 = vunpack.c.l.b16 %v763
    %v2850 = vunpack.c.h.b16 %v763
    %v2851 = vunpack.c.l.b16 %v764
    %v2852 = vunpack.c.h.b16 %v764
    %v2853 = vunpack.c.l.b16 %v765
    %v2854 = vunpack.c.h.b16 %v765
    %v2855 = vunpack.c.l.b16 %v766
    %v2856 = vunpack.c.h.b16 %v766
    %v2857 = vunpack.c.l.b16 %v767
    %v2858 = vunpack.c.h.b16 %v767
    %v2859 = vunpack.c.l.b16 %v768
    %v2860 = vunpack.c.h.b16 %v768
    %v2861 = vunpack.c.l.b16 %v769
    %v2862 = vunpack.c.h.b16 %v769
    %v2863 = vunpack.c.l.b16 %v770
    %v2864 = vunpack.c.h.b16 %v770
    %v2865 = vunpack.c.l.b16 %v771
    %v2866 = vunpack.c.h.b16 %v771
    %v2867 = vunpack.c.l.b16 %v772
    %v2868 = vunpack.c.h.b16 %v772
    %v2869 = vunpack.c.l.b16 %v773
    %v2870 = vunpack.c.h.b16 %v773
    %v2871 = vunpack.c.l.b16 %v774
    %v2872 = vunpack.c.h.b16 %v774
    %v2873 = vunpack.c.l.b16 %v775
    %v2874 = vunpack.c.h.b16 %v775
    %v2875 = vunpack.c.l.b16 %v776
    %v2876 = vunpack.c.h.b16 %v776
    %v2877 = vunpack.c.l.b16 %v777
    %v2878 = vunpack.c.h.b16 %v777
    %v2879 = vunpack.c.l.b16 %v778
    %v2880 = vunpack.c.h.b16 %v778
    %v2881 = vunpack.c.l.b16 %v779
    %v2882 = vunpack.c.h.b16 %v779
    %v2883 = vunpack.c.l.b16 %v780
    %v2884 = vunpack.c.h.b16 %v780
    %v2885 = vunpack.c.l.b16 %v781
    %v2886 = vunpack.c.h.b16 %v781
    %v2887 = vunpack.c.l.b16 %v782
    %v2888 = vunpack.c.h.b16 %v782
    %v2889 = vunpack.c.l.b16 %v783
    %v2890 = vunpack.c.h.b16 %v783
    %v2891 = vunpack.c.l.b16 %v784
    %v2892 = vunpack.c.h.b16 %v784
    %v2893 = vunpack.c.l.b16 %v785
    %v2894 = vunpack.c.h.b16 %v785
    %v2895 = vunpack.c.l.b16 %v786
    %v2896 = vunpack.c.h.b16 %v786
    %v2897 = vunpack.c.l.b16 %v787
    %v2898 = vunpack.c.h.b16 %v787
    %v2899 = vunpack.c.l.b16 %v788
    %v2900 = vunpack.c.h.b16 %v788
    %v2901 = vunpack.c.l.b16 %v789
    %v2902 = vunpack.c.h.b16 %v789
    %v2903 = vunpack.c.l.b16 %v790
    %v2904 = vunpack.c.h.b16 %v790
    %v2905 = vunpack.c.l.b16 %v791
    %v2906 = vunpack.c.h.b16 %v791
    %v2907 = vunpack.c.l.b16 %v792
    %v2908 = vunpack.c.h.b16 %v792
    %v2909 = vunpack.c.l.b16 %v793
    %v2910 = vunpack.c.h.b16 %v793
    %v2911 = vunpack.c.l.b16 %v794
    %v2912 = vunpack.c.h.b16 %v794
    %v2913 = vunpack.c.l.b16 %v795
    %v2914 = vunpack.c.h.b16 %v795
    %v2915 = vunpack.c.l.b16 %v796
    %v2916 = vunpack.c.h.b16 %v796
    %v2917 = vunpack.c.l.b16 %v797
    %v2918 = vunpack.c.h.b16 %v797
    %v2919 = vunpack.c.l.b16 %v798
    %v2920 = vunpack.c.h.b16 %v798
    %v2921 = vunpack.c.l.b16 %v799
    %v2922 = vunpack.c.h.b16 %v799
    %v2923 = vunpack.c.l.b16 %v800
    %v2924 = vunpack.c.h.b16 %v800
    %v2925 = vunpack.c.l.b16 %v801
    %v2926 = vunpack.c.h.b16 %v801
    %v2927 = vunpack.c.l.b16 %v802
    %v2928 = vunpack.c.h.b16 %v802
    %v2929 = vunpack.c.l.b16 %v803
    %v2930 = vunpack.c.h.b16 %v803
    %v2931 = vunpack.c.l.b16 %v804
    %v2932 = vunpack.c.h.b16 %v804
    %v2933 = vunpack.c.l.b16 %v805
    %v2934 = vunpack.c.h.b16 %v805
    %v2935 = vunpack.c.l.b16 %v806
    %v2936 = vunpack.c.h.b16 %v806
    %v2937 = vunpack.c.l.b16 %v807
    %v2938 = vunpack.c.h.b16 %v807
    %v2939 = vunpack.c.l.b16 %v808
    %v2940 = vunpack.c.h.b16 %v808
    %v2941 = vunpack.c.l.b16 %v809
    %v2942 = vunpack.c.h.b16 %v809
    %v2943 = vunpack.c.l.b16 %v810
    %v2944 = vunpack.c.h.b16 %v810
    %v2945 = vunpack.c.l.b16 %v811
    %v2946 = vunpack.c.h.b16 %v811
    %v2947 = vunpack.c.l.b16 %v812
    %v2948 = vunpack.c.h.b16 %v812
    %v2949 = vunpack.c.l.b16 %v813
    %v2950 = vunpack.c.h.b16 %v813
    %v2951 = vunpack.c.l.b16 %v814
    %v2952 = vunpack.c.h.b16 %v814
    %v2953 = vunpack.c.l.b16 %v815
    %v2954 = vunpack.c.h.b16 %v815
    %v2955 = vunpack.c.l.b16 %v816
    %v2956 = vunpack.c.h.b16 %v816
    %v2957 = vunpack.c.l.b16 %v817
    %v2958 = vunpack.c.h.b16 %v817
    %v2959 = vunpack.c.l.b16 %v818
    %v2960 = vunpack.c.h.b16 %v818
    %v2961 = vunpack.c.l.b16 %v819
    %v2962 = vunpack.c.h.b16 %v819
    %v2963 = vunpack.c.l.b16 %v820
    %v2964 = vunpack.c.h.b16 %v820
    %v2965 = vunpack.c.l.b16 %v821
    %v2966 = vunpack.c.h.b16 %v821
    %v2967 = vunpack.c.l.b16 %v822
    %v2968 = vunpack.c.h.b16 %v822
    %v2969 = vunpack.c.l.b16 %v823
    %v2970 = vunpack.c.h.b16 %v823
    %v2971 = vunpack.c.l.b16 %v824
    %v2972 = vunpack.c.h.b16 %v824
    %v2973 = vunpack.c.l.b16 %v825
    %v2974 = vunpack.c.h.b16 %v825
    %v2975 = vunpack.c.l.b16 %v826
    %v2976 = vunpack.c.h.b16 %v826
    %v2977 = vunpack.c.l.b16 %v827
    %v2978 = vunpack.c.h.b16 %v827
    %v2979 = vunpack.c.l.b16 %v828
    %v2980 = vunpack.c.h.b16 %v828
    %v2981 = vunpack.c.l.b16 %v829
    %v2982 = vunpack.c.h.b16 %v829
    %v2983 = vunpack.c.l.b16 %v830
    %v2984 = vunpack.c.h.b16 %v830
    %v2985 = vunpack.c.l.b16 %v831
    %v2986 = vunpack.c.h.b16 %v831
    %v2987 = vunpack.c.l.b16 %v832
    %v2988 = vunpack.c.h.b16 %v832
    %v2989 = vunpack.c.l.b16 %v833
    %v2990 = vunpack.c.h.b16 %v833
    %v2991 = vunpack.c.l.b16 %v834
    %v2992 = vunpack.c.h.b16 %v834
    %v2993 = vunpack.c.l.b16 %v835
    %v2994 = vunpack.c.h.b16 %v835
    %v2995 = vunpack.c.l.b16 %v836
    %v2996 = vunpack.c.h.b16 %v836
    %v2997 = vunpack.c.l.b16 %v837
    %v2998 = vunpack.c.h.b16 %v837
    %v2999 = vunpack.c.l.b16 %v838
    %v3000 = vunpack.c.h.b16 %v838
    %v3001 = vunpack.c.l.b16 %v839
    %v3002 = vunpack.c.h.b16 %v839
    %v3003 = vunpack.c.l.b16 %v840
    %v3004 = vunpack.c.h.b16 %v840
    %v3005 = vunpack.c.l.b16 %v841
    %v3006 = vunpack.c.h.b16 %v841
    %v3007 = vunpack.c.l.b16 %v842
    %v3008 = vunpack.c.h.b16 %v842
    %v3009 = vunpack.c.l.b16 %v843
    %v3010 = vunpack.c.h.b16 %v843
    %v3011 = vunpack.c.l.b16 %v844
    %v3012 = vunpack.c.h.b16 %v844
    %v3013 = vunpack.c.l.b16 %v845
    %v3014 = vunpack.c.h.b16 %v845
    %v3015 = vunpack.c.l.b16 %v846
    %v3016 = vunpack.c.h.b16 %v846
    %v3017 = vunpack.c.l.b16 %v847
    %v3018 = vunpack.c.h.b16 %v847
    %v3019 = vunpack.c.l.b16 %v848
    %v3020 = vunpack.c.h.b16 %v848
    %v3021 = vunpack.c.l.b16 %v849
    %v3022 = vunpack.c.h.b16 %v849
    %v3023 = vunpack.c.l.b16 %v850
    %v3024 = vunpack.c.h.b16 %v850
    %v3025 = vunpack.c.l.b16 %v851
    %v3026 = vunpack.c.h.b16 %v851
    %v3027 = vunpack.c.l.b16 %v852
    %v3028 = vunpack.c.h.b16 %v852
    %v3029 = vunpack.c.l.b16 %v853
    %v3030 = vunpack.c.h.b16 %v853
    %v3031 = vunpack.c.l.b16 %v854
    %v3032 = vunpack.c.h.b16 %v854
    %v3033 = vunpack.c.l.b16 %v855
    %v3034 = vunpack.c.h.b16 %v855
    %v3035 = vunpack.c.l.b16 %v856
    %v3036 = vunpack.c.h.b16 %v856
    %v3037 = vunpack.c.l.b16 %v857
    %v3038 = vunpack.c.h.b16 %v857
    %v3039 = vunpack.c.l.b16 %v858
    %v3040 = vunpack.c.h.b16 %v858
    %v3041 = vunpack.c.l.b16 %v859
    %v3042 = vunpack.c.h.b16 %v859
    %v3043 = vunpack.c.l.b16 %v860
    %v3044 = vunpack.c.h.b16 %v860
    %v3045 = vunpack.c.l.b16 %v861
    %v3046 = vunpack.c.h.b16 %v861
    %v3047 = vunpack.c.l.b16 %v862
    %v3048 = vunpack.c.h.b16 %v862
    %v3049 = vunpack.c.l.b16 %v863
    %v3050 = vunpack.c.h.b16 %v863
    %v3051 = vunpack.c.l.b16 %v864
    %v3052 = vunpack.c.h.b16 %v864
    %v3053 = vunpack.c.l.b16 %v865
    %v3054 = vunpack.c.h.b16 %v865
    %v3055 = vunpack.c.l.b16 %v866
    %v3056 = vunpack.c.h.b16 %v866
    %v3057 = vunpack.c.l.b16 %v867
    %v3058 = vunpack.c.h.b16 %v867
    %v3059 = vunpack.c.l.b16 %v868
    %v3060 = vunpack.c.h.b16 %v868
    %v3061 = vunpack.c.l.b16 %v869
    %v3062 = vunpack.c.h.b16 %v869
    %v3063 = vunpack.c.l.b16 %v870
    %v3064 = vunpack.c.h.b16 %v870
    %v3065 = vunpack.c.l.b16 %v871
    %v3066 = vunpack.c.h.b16 %v871
    %v3067 = vunpack.c.l.b16 %v872
    %v3068 = vunpack.c.h.b16 %v872
    %v3069 = vunpack.c.l.b16 %v873
    %v3070 = vunpack.c.h.b16 %v873
    %v3071 = vunpack.c.l.b16 %v874
    %v3072 = vunpack.c.h.b16 %v874
    %v3073 = vunpack.c.l.b16 %v875
    %v3074 = vunpack.c.h.b16 %v875
    %v3075 = vunpack.c.l.b16 %v876
    %v3076 = vunpack.c.h.b16 %v876
    %v3077 = vunpack.c.l.b16 %v877
    %v3078 = vunpack.c.h.b16 %v877
    %v3079 = vunpack.c.l.b16 %v878
    %v3080 = vunpack.c.h.b16 %v878
    %v3081 = vunpack.c.l.b16 %v879
    %v3082 = vunpack.c.h.b16 %v879
    %v3083 = vunpack.c.l.b16 %v880
    %v3084 = vunpack.c.h.b16 %v880
    %v3085 = vunpack.c.l.b16 %v881
    %v3086 = vunpack.c.h.b16 %v881
    %v3087 = vunpack.c.l.b16 %v882
    %v3088 = vunpack.c.h.b16 %v882
    %v3089 = vunpack.c.l.b16 %v883
    %v3090 = vunpack.c.h.b16 %v883
    %v3091 = vunpack.c.l.b16 %v884
    %v3092 = vunpack.c.h.b16 %v884
    %v3093 = vunpack.c.l.b16 %v885
    %v3094 = vunpack.c.h.b16 %v885
    %v3095 = vunpack.c.l.b16 %v886
    %v3096 = vunpack.c.h.b16 %v886
    %v3097 = vunpack.c.l.b16 %v887
    %v3098 = vunpack.c.h.b16 %v887
    %v3099 = vunpack.c.l.b16 %v888
    %v3100 = vunpack.c.h.b16 %v888
    %v3101 = vunpack.c.l.b16 %v889
    %v3102 = vunpack.c.h.b16 %v889
    %v3103 = vunpack.c.l.b16 %v890
    %v3104 = vunpack.c.h.b16 %v890
    %v3105 = vunpack.c.l.b16 %v891
    %v3106 = vunpack.c.h.b16 %v891
    %v3107 = vunpack.c.l.b16 %v892
    %v3108 = vunpack.c.h.b16 %v892
    %v3109 = vunpack.c.l.b16 %v893
    %v3110 = vunpack.c.h.b16 %v893
    %v3111 = vunpack.c.l.b16 %v894
    %v3112 = vunpack.c.h.b16 %v894
    %v3113 = vunpack.c.l.b16 %v895
    %v3114 = vunpack.c.h.b16 %v895
    %v3115 = vunpack.c.l.b16 %v896
    %v3116 = vunpack.c.h.b16 %v896
    %v3117 = vunpack.c.l.b16 %v897
    %v3118 = vunpack.c.h.b16 %v897
    %v3119 = vunpack.c.l.b16 %v898
    %v3120 = vunpack.c.h.b16 %v898
    %v3121 = vunpack.c.l.b16 %v899
    %v3122 = vunpack.c.h.b16 %v899
    %v3123 = vunpack.c.l.b16 %v900
    %v3124 = vunpack.c.h.b16 %v900
    %v3125 = vunpack.c.l.b16 %v901
    %v3126 = vunpack.c.h.b16 %v901
    %v3127 = vunpack.c.l.b16 %v902
    %v3128 = vunpack.c.h.b16 %v902
    %v3129 = vunpack.c.l.b16 %v903
    %v3130 = vunpack.c.h.b16 %v903
    %v3131 = vunpack.c.l.b16 %v904
    %v3132 = vunpack.c.h.b16 %v904
    %v3133 = vunpack.c.l.b16 %v905
    %v3134 = vunpack.c.h.b16 %v905
    %v3135 = vunpack.c.l.b16 %v906
    %v3136 = vunpack.c.h.b16 %v906
    %v3137 = vunpack.c.l.b16 %v907
    %v3138 = vunpack.c.h.b16 %v907
    %v3139 = vunpack.c.l.b16 %v908
    %v3140 = vunpack.c.h.b16 %v908
    %v3141 = vunpack.c.l.b16 %v909
    %v3142 = vunpack.c.h.b16 %v909
    %v3143 = vunpack.c.l.b16 %v910
    %v3144 = vunpack.c.h.b16 %v910
    %v3145 = vunpack.c.l.b16 %v911
    %v3146 = vunpack.c.h.b16 %v911
    %v3147 = vunpack.c.l.b16 %v912
    %v3148 = vunpack.c.h.b16 %v912
    %v3149 = vunpack.c.l.b16 %v913
    %v3150 = vunpack.c.h.b16 %v913
    %v3151 = vunpack.c.l.b16 %v914
    %v3152 = vunpack.c.h.b16 %v914
    %v3153 = vunpack.c.l.b16 %v915
    %v3154 = vunpack.c.h.b16 %v915
    %v3155 = vunpack.c.l.b16 %v916
    %v3156 = vunpack.c.h.b16 %v916
    %v3157 = vunpack.c.l.b16 %v917
    %v3158 = vunpack.c.h.b16 %v917
    %v3159 = vunpack.c.l.b16 %v918
    %v3160 = vunpack.c.h.b16 %v918
    %v3161 = vunpack.c.l.b16 %v919
    %v3162 = vunpack.c.h.b16 %v919
    %v3163 = vunpack.c.l.b16 %v920
    %v3164 = vunpack.c.h.b16 %v920
    %v3165 = vunpack.c.l.b16 %v921
    %v3166 = vunpack.c.h.b16 %v921
    %v3167 = vunpack.c.l.b16 %v922
    %v3168 = vunpack.c.h.b16 %v922
    %v3169 = vunpack.c.l.b16 %v923
    %v3170 = vunpack.c.h.b16 %v923
    %v3171 = vunpack.c.l.b16 %v924
    %v3172 = vunpack.c.h.b16 %v924
    %v3173 = vunpack.c.l.b16 %v925
    %v3174 = vunpack.c.h.b16 %v925
    %v3175 = vunpack.c.l.b16 %v926
    %v3176 = vunpack.c.h.b16 %v926
    %v3177 = vunpack.c.l.b16 %v927
    %v3178 = vunpack.c.h.b16 %v927
    %v3179 = vunpack.c.l.b16 %v928
    %v3180 = vunpack.c.h.b16 %v928
    %v3181 = vunpack.c.l.b16 %v929
    %v3182 = vunpack.c.h.b16 %v929
    %v3183 = vunpack.c.l.b16 %v930
    %v3184 = vunpack.c.h.b16 %v930
    %v3185 = vunpack.c.l.b16 %v931
    %v3186 = vunpack.c.h.b16 %v931
    %v3187 = vunpack.c.l.b16 %v932
    %v3188 = vunpack.c.h.b16 %v932
    %v3189 = vunpack.c.l.b16 %v933
    %v3190 = vunpack.c.h.b16 %v933
    %v3191 = vunpack.c.l.b16 %v934
    %v3192 = vunpack.c.h.b16 %v934
    %v3193 = vunpack.c.l.b16 %v935
    %v3194 = vunpack.c.h.b16 %v935
    %v3195 = vunpack.c.l.b16 %v936
    %v3196 = vunpack.c.h.b16 %v936
    %v3197 = vunpack.c.l.b16 %v937
    %v3198 = vunpack.c.h.b16 %v937
    %v3199 = vunpack.c.l.b16 %v938
    %v3200 = vunpack.c.h.b16 %v938
    %v3201 = vunpack.c.l.b16 %v939
    %v3202 = vunpack.c.h.b16 %v939
    %v3203 = vunpack.c.l.b16 %v940
    %v3204 = vunpack.c.h.b16 %v940
    %v3205 = vunpack.c.l.b16 %v941
    %v3206 = vunpack.c.h.b16 %v941
    %v3207 = vunpack.c.l.b16 %v942
    %v3208 = vunpack.c.h.b16 %v942
    %v3209 = vunpack.c.l.b16 %v943
    %v3210 = vunpack.c.h.b16 %v943
    %v3211 = vunpack.c.l.b16 %v944
    %v3212 = vunpack.c.h.b16 %v944
    %v3213 = vunpack.c.l.b16 %v945
    %v3214 = vunpack.c.h.b16 %v945
    %v3215 = vunpack.c.l.b16 %v946
    %v3216 = vunpack.c.h.b16 %v946
    %v3217 = vunpack.c.l.b16 %v947
    %v3218 = vunpack.c.h.b16 %v947
    %v3219 = vunpack.c.l.b16 %v948
    %v3220 = vunpack.c.h.b16 %v948
    %v3221 = vunpack.c.l.b16 %v949
    %v3222 = vunpack.c.h.b16 %v949
    %v3223 = vunpack.c.l.b16 %v950
    %v3224 = vunpack.c.h.b16 %v950
    %v3225 = vunpack.c.l.b16 %v951
    %v3226 = vunpack.c.h.b16 %v951
    %v3227 = vunpack.c.l.b16 %v952
    %v3228 = vunpack.c.h.b16 %v952
    %v3229 = vunpack.c.l.b16 %v953
    %v3230 = vunpack.c.h.b16 %v953
    %v3231 = vunpack.c.l.b16 %v954
    %v3232 = vunpack.c.h.b16 %v954
    %v3233 = vunpack.c.l.b16 %v955
    %v3234 = vunpack.c.h.b16 %v955
    %v3235 = vunpack.c.l.b16 %v956
    %v3236 = vunpack.c.h.b16 %v956
    %v3237 = vunpack.c.l.b16 %v957
    %v3238 = vunpack.c.h.b16 %v957
    %v3239 = vunpack.c.l.b16 %v958
    %v3240 = vunpack.c.h.b16 %v958
    %v3241 = vunpack.c.l.b16 %v959
    %v3242 = vunpack.c.h.b16 %v959
    %v3243 = vunpack.c.l.b16 %v960
    %v3244 = vunpack.c.h.b16 %v960
    %v3245 = vunpack.c.l.b16 %v961
    %v3246 = vunpack.c.h.b16 %v961
    %v3247 = vunpack.c.l.b16 %v962
    %v3248 = vunpack.c.h.b16 %v962
    %v3249 = vunpack.c.l.b16 %v963
    %v3250 = vunpack.c.h.b16 %v963
    %v3251 = vunpack.c.l.b16 %v964
    %v3252 = vunpack.c.h.b16 %v964
    %v3253 = vunpack.c.l.b16 %v965
    %v3254 = vunpack.c.h.b16 %v965
    %v3255 = vunpack.c.l.b16 %v966
    %v3256 = vunpack.c.h.b16 %v966
    %v3257 = vunpack.c.l.b16 %v967
    %v3258 = vunpack.c.h.b16 %v967
    %v3259 = vunpack.c.l.b16 %v968
    %v3260 = vunpack.c.h.b16 %v968
    %v3261 = vunpack.c.l.b16 %v969
    %v3262 = vunpack.c.h.b16 %v969
    %v3263 = vunpack.c.l.b16 %v970
    %v3264 = vunpack.c.h.b16 %v970
    %v3265 = vunpack.c.l.b16 %v971
    %v3266 = vunpack.c.h.b16 %v971
    %v3267 = vunpack.c.l.b16 %v972
    %v3268 = vunpack.c.h.b16 %v972
    %v3269 = vunpack.c.l.b16 %v973
    %v3270 = vunpack.c.h.b16 %v973
    %v3271 = vunpack.c.l.b16 %v974
    %v3272 = vunpack.c.h.b16 %v974
    %v3273 = vunpack.c.l.b16 %v975
    %v3274 = vunpack.c.h.b16 %v975
    %v3275 = vunpack.c.l.b16 %v976
    %v3276 = vunpack.c.h.b16 %v976
    %v3277 = vunpack.c.l.b16 %v977
    %v3278 = vunpack.c.h.b16 %v977
    %v3279 = vunpack.c.l.b16 %v978
    %v3280 = vunpack.c.h.b16 %v978
    %v3281 = vunpack.c.l.b16 %v979
    %v3282 = vunpack.c.h.b16 %v979
    %v3283 = vunpack.c.l.b16 %v980
    %v3284 = vunpack.c.h.b16 %v980
    %v3285 = vunpack.c.l.b16 %v981
    %v3286 = vunpack.c.h.b16 %v981
    %v3287 = vunpack.c.l.b16 %v982
    %v3288 = vunpack.c.h.b16 %v982
    %v3289 = vunpack.c.l.b16 %v983
    %v3290 = vunpack.c.h.b16 %v983
    %v3291 = vunpack.c.l.b16 %v984
    %v3292 = vunpack.c.h.b16 %v984
    %v3293 = vunpack.c.l.b16 %v985
    %v3294 = vunpack.c.h.b16 %v985
    %v3295 = vunpack.c.l.b16 %v986
    %v3296 = vunpack.c.h.b16 %v986
    %v3297 = vunpack.c.l.b16 %v987
    %v3298 = vunpack.c.h.b16 %v987
    %v3299 = vunpack.c.l.b16 %v988
    %v3300 = vunpack.c.h.b16 %v988
    %v3301 = vunpack.c.l.b16 %v989
    %v3302 = vunpack.c.h.b16 %v989
    %v3303 = vunpack.c.l.b16 %v990
    %v3304 = vunpack.c.h.b16 %v990
    %v3305 = vunpack.c.l.b16 %v991
    %v3306 = vunpack.c.h.b16 %v991
    %v3307 = vunpack.c.l.b16 %v992
    %v3308 = vunpack.c.h.b16 %v992
    %v3309 = vunpack.c.l.b16 %v993
    %v3310 = vunpack.c.h.b16 %v993
    %v3311 = vunpack.c.l.b16 %v994
    %v3312 = vunpack.c.h.b16 %v994
    %v3313 = vunpack.c.l.b16 %v995
    %v3314 = vunpack.c.h.b16 %v995
    %v3315 = vunpack.c.l.b16 %v996
    %v3316 = vunpack.c.h.b16 %v996
    %v3317 = vunpack.c.l.b16 %v997
    %v3318 = vunpack.c.h.b16 %v997
    %v3319 = vunpack.c.l.b16 %v998
    %v3320 = vunpack.c.h.b16 %v998
    %v3321 = vunpack.c.l.b16 %v999
    %v3322 = vunpack.c.h.b16 %v999
    %v3323 = vunpack.c.l.b16 %v1000
    %v3324 = vunpack.c.h.b16 %v1000
    %v3325 = vunpack.c.l.b16 %v1001
    %v3326 = vunpack.c.h.b16 %v1001
    %v3327 = vunpack.c.l.b16 %v1002
    %v3328 = vunpack.c.h.b16 %v1002
    %v3329 = vunpack.c.l.b16 %v1003
    %v3330 = vunpack.c.h.b16 %v1003
    %v3331 = vunpack.c.l.b16 %v1004
    %v3332 = vunpack.c.h.b16 %v1004
    %v3333 = vunpack.c.l.b16 %v1005
    %v3334 = vunpack.c.h.b16 %v1005
    %v3335 = vunpack.c.l.b16 %v1006
    %v3336 = vunpack.c.h.b16 %v1006
    %v3337 = vunpack.c.l.b16 %v1007
    %v3338 = vunpack.c.h.b16 %v1007
    %v3339 = vunpack.c.l.b16 %v1008
    %v3340 = vunpack.c.h.b16 %v1008
    %v3341 = vunpack.c.l.b16 %v1009
    %v3342 = vunpack.c.h.b16 %v1009
    %v3343 = vunpack.c.l.b16 %v1010
    %v3344 = vunpack.c.h.b16 %v1010
    %v3345 = vunpack.c.l.b16 %v1011
    %v3346 = vunpack.c.h.b16 %v1011
    %v3347 = vunpack.c.l.b16 %v1012
    %v3348 = vunpack.c.h.b16 %v1012
    %v3349 = vunpack.c.l.b16 %v1013
    %v3350 = vunpack.c.h.b16 %v1013
    %v3351 = vunpack.c.l.b16 %v1014
    %v3352 = vunpack.c.h.b16 %v1014
    %v3353 = vunpack.c.l.b16 %v1015
    %v3354 = vunpack.c.h.b16 %v1015
    %v3355 = vunpack.c.l.b16 %v1016
    %v3356 = vunpack.c.h.b16 %v1016
    %v3357 = vunpack.c.l.b16 %v1017
    %v3358 = vunpack.c.h.b16 %v1017
    %v3359 = vunpack.c.l.b16 %v1018
    %v3360 = vunpack.c.h.b16 %v1018
    %v3361 = vunpack.c.l.b16 %v1019
    %v3362 = vunpack.c.h.b16 %v1019
    %v3363 = vunpack.c.l.b16 %v1020
    %v3364 = vunpack.c.h.b16 %v1020
    %v3365 = vunpack.c.l.b16 %v1021
    %v3366 = vunpack.c.h.b16 %v1021
    %v3367 = vunpack.c.l.b16 %v1022
    %v3368 = vunpack.c.h.b16 %v1022
    %v3369 = vunpack.c.l.b16 %v1023
    %v3370 = vunpack.c.h.b16 %v1023
    %v3371 = vunpack.c.l.b16 %v1024
    %v3372 = vunpack.c.h.b16 %v1024
    %v3373 = vunpack.c.l.b16 %v1025
    %v3374 = vunpack.c.h.b16 %v1025
    %v3375 = vunpack.c.l.b16 %v1026
    %v3376 = vunpack.c.h.b16 %v1026
    %v3377 = vunpack.c.l.b16 %v1027
    %v3378 = vunpack.c.h.b16 %v1027
    %v3379 = vunpack.c.l.b16 %v1028
    %v3380 = vunpack.c.h.b16 %v1028
    %v3381 = vunpack.c.l.b16 %v1029
    %v3382 = vunpack.c.h.b16 %v1029
    %v3383 = vunpack.c.l.b16 %v1030
    %v3384 = vunpack.c.h.b16 %v1030
    %v3385 = vunpack.c.l.b16 %v1031
    %v3386 = vunpack.c.h.b16 %v1031
    %v3387 = vunpack.c.l.b16 %v1032
    %v3388 = vunpack.c.h.b16 %v1032
    %v3389 = vunpack.c.l.b16 %v1033
    %v3390 = vunpack.c.h.b16 %v1033
    %v3391 = vunpack.c.l.b16 %v1034
    %v3392 = vunpack.c.h.b16 %v1034
    %v3393 = vunpack.c.l.b16 %v1035
    %v3394 = vunpack.c.h.b16 %v1035
    %v3395 = vunpack.c.l.b16 %v1036
    %v3396 = vunpack.c.h.b16 %v1036
    %v3397 = vunpack.c.l.b16 %v1037
    %v3398 = vunpack.c.h.b16 %v1037
    %v3399 = vunpack.c.l.b16 %v1038
    %v3400 = vunpack.c.h.b16 %v1038
    %v3401 = vunpack.c.l.b16 %v1039
    %v3402 = vunpack.c.h.b16 %v1039
    %v3403 = vunpack.c.l.b16 %v1040
    %v3404 = vunpack.c.h.b16 %v1040
    %v3405 = vunpack.c.l.b16 %v1041
    %v3406 = vunpack.c.h.b16 %v1041
    %v3407 = vunpack.c.l.b16 %v1042
    %v3408 = vunpack.c.h.b16 %v1042
    %v3409 = vunpack.c.l.b16 %v1043
    %v3410 = vunpack.c.h.b16 %v1043
    %v3411 = vunpack.c.l.b16 %v1044
    %v3412 = vunpack.c.h.b16 %v1044
    %v3413 = vunpack.c.l.b16 %v1045
    %v3414 = vunpack.c.h.b16 %v1045
    %v3415 = vunpack.c.l.b16 %v1046
    %v3416 = vunpack.c.h.b16 %v1046
    %v3417 = vunpack.c.l.b16 %v1047
    %v3418 = vunpack.c.h.b16 %v1047
    %v3419 = vunpack.c.l.b16 %v1048
    %v3420 = vunpack.c.h.b16 %v1048
    %v3421 = vunpack.c.l.b16 %v1049
    %v3422 = vunpack.c.h.b16 %v1049
    %v3423 = vunpack.c.l.b16 %v1050
    %v3424 = vunpack.c.h.b16 %v1050
    %v3425 = vunpack.c.l.b16 %v1051
    %v3426 = vunpack.c.h.b16 %v1051
    %v3427 = vunpack.c.l.b16 %v1052
    %v3428 = vunpack.c.h.b16 %v1052
    %v3429 = vunpack.c.l.b16 %v1053
    %v3430 = vunpack.c.h.b16 %v1053
    %v3431 = vunpack.c.l.b16 %v1054
    %v3432 = vunpack.c.h.b16 %v1054
    %v3433 = vunpack.c.l.b16 %v1055
    %v3434 = vunpack.c.h.b16 %v1055
    %v3435 = vunpack.c.l.b16 %v1056
    %v3436 = vunpack.c.h.b16 %v1056
    %v3437 = vunpack.c.l.b16 %v1057
    %v3438 = vunpack.c.h.b16 %v1057
    %v3439 = vunpack.c.l.b16 %v1058
    %v3440 = vunpack.c.h.b16 %v1058
    %v3441 = vunpack.c.l.b16 %v1059
    %v3442 = vunpack.c.h.b16 %v1059
    %v3443 = vunpack.c.l.b16 %v1060
    %v3444 = vunpack.c.h.b16 %v1060
    %v3445 = vunpack.c.l.b16 %v1061
    %v3446 = vunpack.c.h.b16 %v1061
    %v3447 = vunpack.c.l.b16 %v1062
    %v3448 = vunpack.c.h.b16 %v1062
    %v3449 = vunpack.c.l.b16 %v1063
    %v3450 = vunpack.c.h.b16 %v1063
    %v3451 = vunpack.c.l.b16 %v1064
    %v3452 = vunpack.c.h.b16 %v1064
    %v3453 = vunpack.c.l.b16 %v1065
    %v3454 = vunpack.c.h.b16 %v1065
    %v3455 = vunpack.c.l.b16 %v1066
    %v3456 = vunpack.c.h.b16 %v1066
    %v3457 = vunpack.c.l.b16 %v1067
    %v3458 = vunpack.c.h.b16 %v1067
    %v3459 = vunpack.c.l.b16 %v1068
    %v3460 = vunpack.c.h.b16 %v1068
    %v3461 = vunpack.c.l.b16 %v1069
    %v3462 = vunpack.c.h.b16 %v1069
    %v3463 = vunpack.c.l.b16 %v1070
    %v3464 = vunpack.c.h.b16 %v1070
    %v3465 = vunpack.c.l.b16 %v1071
    %v3466 = vunpack.c.h.b16 %v1071
    %v3467 = vunpack.c.l.b16 %v1072
    %v3468 = vunpack.c.h.b16 %v1072
    %v3469 = vunpack.c.l.b16 %v1073
    %v3470 = vunpack.c.h.b16 %v1073
    %v3471 = vunpack.c.l.b16 %v1074
    %v3472 = vunpack.c.h.b16 %v1074
    %v3473 = vunpack.c.l.b16 %v1075
    %v3474 = vunpack.c.h.b16 %v1075
    %v3475 = vunpack.c.l.b16 %v1076
    %v3476 = vunpack.c.h.b16 %v1076
    %v3477 = vunpack.c.l.b16 %v1077
    %v3478 = vunpack.c.h.b16 %v1077
    %v3479 = vunpack.c.l.b16 %v1078
    %v3480 = vunpack.c.h.b16 %v1078
    %v3481 = vunpack.c.l.b16 %v1079
    %v3482 = vunpack.c.h.b16 %v1079
    %v3483 = vunpack.c.l.b16 %v1080
    %v3484 = vunpack.c.h.b16 %v1080
    %v3485 = vunpack.c.l.b16 %v1081
    %v3486 = vunpack.c.h.b16 %v1081
    %v3487 = vunpack.c.l.b16 %v1082
    %v3488 = vunpack.c.h.b16 %v1082
    %v3489 = vpack.c.b16 %v1891, %v1889
    %v3490 = vpack.c.b16 %v1892, %v1890
    %v3491 = vpack.c.b16 %v1895, %v1893
    %v3492 = vpack.c.b16 %v1896, %v1894
    %v3493 = vpack.c.b16 %v1899, %v1897
    %v3494 = vpack.c.b16 %v1900, %v1898
    %v3495 = vpack.c.b16 %v1903, %v1901
    %v3496 = vpack.c.b16 %v1904, %v1902
    %v3497 = vpack.c.b16 %v1907, %v1905
    %v3498 = vpack.c.b16 %v1908, %v1906
    %v3499 = vpack.c.b16 %v1911, %v1909
    %v3500 = vpack.c.b16 %v1912, %v1910
    %v3501 = vpack.c.b16 %v1915, %v1913
    %v3502 = vpack.c.b16 %v1916, %v1914
    %v3503 = vpack.c.b16 %v1919, %v1917
    %v3504 = vpack.c.b16 %v1920, %v1918
    %v3505 = vpack.c.b16 %v1923, %v1921
    %v3506 = vpack.c.b16 %v1924, %v1922
    %v3507 = vpack.c.b16 %v1927, %v1925
    %v3508 = vpack.c.b16 %v1928, %v1926
    %v3509 = vpack.c.b16 %v1931, %v1929
    %v3510 = vpack.c.b16 %v1932, %v1930
    %v3511 = vpack.c.b16 %v1935, %v1933
    %v3512 = vpack.c.b16 %v1936, %v1934
    %v3513 = vpack.c.b16 %v1939, %v1937
    %v3514 = vpack.c.b16 %v1940, %v1938
    %v3515 = vpack.c.b16 %v1943, %v1941
    %v3516 = vpack.c.b16 %v1944, %v1942
    %v3517 = vpack.c.b16 %v1947, %v1945
    %v3518 = vpack.c.b16 %v1948, %v1946
    %v3519 = vpack.c.b16 %v1951, %v1949
    %v3520 = vpack.c.b16 %v1952, %v1950
    %v3521 = vpack.c.b16 %v1955, %v1953
    %v3522 = vpack.c.b16 %v1956, %v1954
    %v3523 = vpack.c.b16 %v1959, %v1957
    %v3524 = vpack.c.b16 %v1960, %v1958
    %v3525 = vpack.c.b16 %v1963, %v1961
    %v3526 = vpack.c.b16 %v1964, %v1962
    %v3527 = vpack.c.b16 %v1967, %v1965
    %v3528 = vpack.c.b16 %v1968, %v1966
    %v3529 = vpack.c.b16 %v1971, %v1969
    %v3530 = vpack.c.b16 %v1972, %v1970
    %v3531 = vpack.c.b16 %v1975, %v1973
    %v3532 = vpack.c.b16 %v1976, %v1974
    %v3533 = vpack.c.b16 %v1979, %v1977
    %v3534 = vpack.c.b16 %v1980, %v1978
    %v3535 = vpack.c.b16 %v1983, %v1981
    %v3536 = vpack.c.b16 %v1984, %v1982
    %v3537 = vpack.c.b16 %v1987, %v1985
    %v3538 = vpack.c.b16 %v1988, %v1986
    %v3539 = vpack.c.b16 %v1991, %v1989
    %v3540 = vpack.c.b16 %v1992, %v1990
    %v3541 = vpack.c.b16 %v1995, %v1993
    %v3542 = vpack.c.b16 %v1996, %v1994
    %v3543 = vpack.c.b16 %v1999, %v1997
    %v3544 = vpack.c.b16 %v2000, %v1998
    %v3545 = vpack.c.b16 %v2003, %v2001
    %v3546 = vpack.c.b16 %v2004, %v2002
    %v3547 = vpack.c.b16 %v2007, %v2005
    %v3548 = vpack.c.b16 %v2008, %v2006
    %v3549 = vpack.c.b16 %v2011, %v2009
    %v3550 = vpack.c.b16 %v2012, %v2010
    %v3551 = vpack.c.b16 %v2015, %v2013
    %v3552 = vpack.c.b16 %v2016, %v2014
    %v3553 = vpack.c.b16 %v2019, %v2017
    %v3554 = vpack.c.b16 %v2020, %v2018
    %v3555 = vpack.c.b16 %v2023, %v2021
    %v3556 = vpack.c.b16 %v2024, %v2022
    %v3557 = vpack.c.b16 %v2027, %v2025
    %v3558 = vpack.c.b16 %v2028, %v2026
    %v3559 = vpack.c.b16 %v2031, %v2029
    %v3560 = vpack.c.b16 %v2032, %v2030
    %v3561 = vpack.c.b16 %v2035, %v2033
    %v3562 = vpack.c.b16 %v2036, %v2034
    %v3563 = vpack.c.b16 %v2039, %v2037
    %v3564 = vpack.c.b16 %v2040, %v2038
    %v3565 = vpack.c.b16 %v2043, %v2041
    %v3566 = vpack.c.b16 %v2044, %v2042
    %v3567 = vpack.c.b16 %v2047, %v2045
    %v3568 = vpack.c.b16 %v2048, %v2046
    %v3569 = vpack.c.b16 %v2051, %v2049
    %v3570 = vpack.c.b16 %v2052, %v2050
    %v3571 = vpack.c.b16 %v2055, %v2053
    %v3572 = vpack.c.b16 %v2056, %v2054
    %v3573 = vpack.c.b16 %v2059, %v2057
    %v3574 = vpack.c.b16 %v2060, %v2058
    %v3575 = vpack.c.b16 %v2063, %v2061
    %v3576 = vpack.c.b16 %v2064, %v2062
    %v3577 = vpack.c.b16 %v2067, %v2065
    %v3578 = vpack.c.b16 %v2068, %v2066
    %v3579 = vpack.c.b16 %v2071, %v2069
    %v3580 = vpack.c.b16 %v2072, %v2070
    %v3581 = vpack.c.b16 %v2075, %v2073
    %v3582 = vpack.c.b16 %v2076, %v2074
    %v3583 = vpack.c.b16 %v2079, %v2077
    %v3584 = vpack.c.b16 %v2080, %v2078
    %v3585 = vpack.c.b16 %v2083, %v2081
    %v3586 = vpack.c.b16 %v2084, %v2082
    %v3587 = vpack.c.b16 %v2087, %v2085
    %v3588 = vpack.c.b16 %v2088, %v2086
    %v3589 = vpack.c.b16 %v2091, %v2089
    %v3590 = vpack.c.b16 %v2092, %v2090
    %v3591 = vpack.c.b16 %v2095, %v2093
    %v3592 = vpack.c.b16 %v2096, %v2094
    %v3593 = vpack.c.b16 %v2099, %v2097
    %v3594 = vpack.c.b16 %v2100, %v2098
    %v3595 = vpack.c.b16 %v2103, %v2101
    %v3596 = vpack.c.b16 %v2104, %v2102
    %v3597 = vpack.c.b16 %v2107, %v2105
    %v3598 = vpack.c.b16 %v2108, %v2106
    %v3599 = vpack.c.b16 %v2111, %v2109
    %v3600 = vpack.c.b16 %v2112, %v2110
    %v3601 = vpack.c.b16 %v2115, %v2113
    %v3602 = vpack.c.b16 %v2116, %v2114
    %v3603 = vpack.c.b16 %v2119, %v2117
    %v3604 = vpack.c.b16 %v2120, %v2118
    %v3605 = vpack.c.b16 %v2123, %v2121
    %v3606 = vpack.c.b16 %v2124, %v2122
    %v3607 = vpack.c.b16 %v2127, %v2125
    %v3608 = vpack.c.b16 %v2128, %v2126
    %v3609 = vpack.c.b16 %v2131, %v2129
    %v3610 = vpack.c.b16 %v2132, %v2130
    %v3611 = vpack.c.b16 %v2135, %v2133
    %v3612 = vpack.c.b16 %v2136, %v2134
    %v3613 = vpack.c.b16 %v2139, %v2137
    %v3614 = vpack.c.b16 %v2140, %v2138
    %v3615 = vpack.c.b16 %v2143, %v2141
    %v3616 = vpack.c.b16 %v2144, %v2142
    %v3617 = vpack.c.b16 %v2147, %v2145
    %v3618 = vpack.c.b16 %v2148, %v2146
    %v3619 = vpack.c.b16 %v2151, %v2149
    %v3620 = vpack.c.b16 %v2152, %v2150
    %v3621 = vpack.c.b16 %v2155, %v2153
    %v3622 = vpack.c.b16 %v2156, %v2154
    %v3623 = vpack.c.b16 %v2159, %v2157
    %v3624 = vpack.c.b16 %v2160, %v2158
    %v3625 = vpack.c.b16 %v2163, %v2161
    %v3626 = vpack.c.b16 %v2164, %v2162
    %v3627 = vpack.c.b16 %v2167, %v2165
    %v3628 = vpack.c.b16 %v2168, %v2166
    %v3629 = vpack.c.b16 %v2171, %v2169
    %v3630 = vpack.c.b16 %v2172, %v2170
    %v3631 = vpack.c.b16 %v2175, %v2173
    %v3632 = vpack.c.b16 %v2176, %v2174
    %v3633 = vpack.c.b16 %v2179, %v2177
    %v3634 = vpack.c.b16 %v2180, %v2178
    %v3635 = vpack.c.b16 %v2183, %v2181
    %v3636 = vpack.c.b16 %v2184, %v2182
    %v3637 = vpack.c.b16 %v2187, %v2185
    %v3638 = vpack.c.b16 %v2188, %v2186
    %v3639 = vpack.c.b16 %v2191, %v2189
    %v3640 = vpack.c.b16 %v2192, %v2190
    %v3641 = vpack.c.b16 %v2195, %v2193
    %v3642 = vpack.c.b16 %v2196, %v2194
    %v3643 = vpack.c.b16 %v2199, %v2197
    %v3644 = vpack.c.b16 %v2200, %v2198
    %v3645 = vpack.c.b16 %v2203, %v2201
    %v3646 = vpack.c.b16 %v2204, %v2202
    %v3647 = vpack.c.b16 %v2207, %v2205
    %v3648 = vpack.c.b16 %v2208, %v2206
    %v3649 = vpack.c.b16 %v2211, %v2209
    %v3650 = vpack.c.b16 %v2212, %v2210
    %v3651 = vpack.c.b16 %v2215, %v2213
    %v3652 = vpack.c.b16 %v2216, %v2214
    %v3653 = vpack.c.b16 %v2219, %v2217
    %v3654 = vpack.c.b16 %v2220, %v2218
    %v3655 = vpack.c.b16 %v2223, %v2221
    %v3656 = vpack.c.b16 %v2224, %v2222
    %v3657 = vpack.c.b16 %v2227, %v2225
    %v3658 = vpack.c.b16 %v2228, %v2226
    %v3659 = vpack.c.b16 %v2231, %v2229
    %v3660 = vpack.c.b16 %v2232, %v2230
    %v3661 = vpack.c.b16 %v2235, %v2233
    %v3662 = vpack.c.b16 %v2236, %v2234
    %v3663 = vpack.c.b16 %v2239, %v2237
    %v3664 = vpack.c.b16 %v2240, %v2238
    %v3665 = vpack.c.b16 %v2243, %v2241
    %v3666 = vpack.c.b16 %v2244, %v2242
    %v3667 = vpack.c.b16 %v2247, %v2245
    %v3668 = vpack.c.b16 %v2248, %v2246
    %v3669 = vpack.c.b16 %v2251, %v2249
    %v3670 = vpack.c.b16 %v2252, %v2250
    %v3671 = vpack.c.b16 %v2255, %v2253
    %v3672 = vpack.c.b16 %v2256, %v2254
    %v3673 = vpack.c.b16 %v2259, %v2257
    %v3674 = vpack.c.b16 %v2260, %v2258
    %v3675 = vpack.c.b16 %v2263, %v2261
    %v3676 = vpack.c.b16 %v2264, %v2262
    %v3677 = vpack.c.b16 %v2267, %v2265
    %v3678 = vpack.c.b16 %v2268, %v2266
    %v3679 = vpack.c.b16 %v2271, %v2269
    %v3680 = vpack.c.b16 %v2272, %v2270
    %v3681 = vpack.c.b16 %v2275, %v2273
    %v3682 = vpack.c.b16 %v2276, %v2274
    %v3683 = vpack.c.b16 %v2279, %v2277
    %v3684 = vpack.c.b16 %v2280, %v2278
    %v3685 = vpack.c.b16 %v2283, %v2281
    %v3686 = vpack.c.b16 %v2284, %v2282
    %v3687 = vpack.c.b16 %v2287, %v2285
    %v3688 = vpack.c.b16 %v2288, %v2286
    %v3689 = vpack.c.b16 %v2291, %v2289
    %v3690 = vpack.c.b16 %v2292, %v2290
    %v3691 = vpack.c.b16 %v2295, %v2293
    %v3692 = vpack.c.b16 %v2296, %v2294
    %v3693 = vpack.c.b16 %v2299, %v2297
    %v3694 = vpack.c.b16 %v2300, %v2298
    %v3695 = vpack.c.b16 %v2303, %v2301
    %v3696 = vpack.c.b16 %v2304, %v2302
    %v3697 = vpack.c.b16 %v2307, %v2305
    %v3698 = vpack.c.b16 %v2308, %v2306
    %v3699 = vpack.c.b16 %v2311, %v2309
    %v3700 = vpack.c.b16 %v2312, %v2310
    %v3701 = vpack.c.b16 %v2315, %v2313
    %v3702 = vpack.c.b16 %v2316, %v2314
    %v3703 = vpack.c.b16 %v2319, %v2317
    %v3704 = vpack.c.b16 %v2320, %v2318
    %v3705 = vpack.c.b16 %v2323, %v2321
    %v3706 = vpack.c.b16 %v2324, %v2322
    %v3707 = vpack.c.b16 %v2327, %v2325
    %v3708 = vpack.c.b16 %v2328, %v2326
    %v3709 = vpack.c.b16 %v2331, %v2329
    %v3710 = vpack.c.b16 %v2332, %v2330
    %v3711 = vpack.c.b16 %v2335, %v2333
    %v3712 = vpack.c.b16 %v2336, %v2334
    %v3713 = vpack.c.b16 %v2339, %v2337
    %v3714 = vpack.c.b16 %v2340, %v2338
    %v3715 = vpack.c.b16 %v2343, %v2341
    %v3716 = vpack.c.b16 %v2344, %v2342
    %v3717 = vpack.c.b16 %v2347, %v2345
    %v3718 = vpack.c.b16 %v2348, %v2346
    %v3719 = vpack.c.b16 %v2351, %v2349
    %v3720 = vpack.c.b16 %v2352, %v2350
    %v3721 = vpack.c.b16 %v2355, %v2353
    %v3722 = vpack.c.b16 %v2356, %v2354
    %v3723 = vpack.c.b16 %v2359, %v2357
    %v3724 = vpack.c.b16 %v2360, %v2358
    %v3725 = vpack.c.b16 %v2363, %v2361
    %v3726 = vpack.c.b16 %v2364, %v2362
    %v3727 = vpack.c.b16 %v2367, %v2365
    %v3728 = vpack.c.b16 %v2368, %v2366
    %v3729 = vpack.c.b16 %v2371, %v2369
    %v3730 = vpack.c.b16 %v2372, %v2370
    %v3731 = vpack.c.b16 %v2375, %v2373
    %v3732 = vpack.c.b16 %v2376, %v2374
    %v3733 = vpack.c.b16 %v2379, %v2377
    %v3734 = vpack.c.b16 %v2380, %v2378
    %v3735 = vpack.c.b16 %v2383, %v2381
    %v3736 = vpack.c.b16 %v2384, %v2382
    %v3737 = vpack.c.b16 %v2387, %v2385
    %v3738 = vpack.c.b16 %v2388, %v2386
    %v3739 = vpack.c.b16 %v2391, %v2389
    %v3740 = vpack.c.b16 %v2392, %v2390
    %v3741 = vpack.c.b16 %v2395, %v2393
    %v3742 = vpack.c.b16 %v2396, %v2394
    %v3743 = vpack.c.b16 %v2399, %v2397
    %v3744 = vpack.c.b16 %v2400, %v2398
    %v3745 = vpack.c.b16 %v2403, %v2401
    %v3746 = vpack.c.b16 %v2404, %v2402
    %v3747 = vpack.c.b16 %v2407, %v2405
    %v3748 = vpack.c.b16 %v2408, %v2406
    %v3749 = vpack.c.b16 %v2411, %v2409
    %v3750 = vpack.c.b16 %v2412, %v2410
    %v3751 = vpack.c.b16 %v2415, %v2413
    %v3752 = vpack.c.b16 %v2416, %v2414
    %v3753 = vpack.c.b16 %v2419, %v2417
    %v3754 = vpack.c.b16 %v2420, %v2418
    %v3755 = vpack.c.b16 %v2423, %v2421
    %v3756 = vpack.c.b16 %v2424, %v2422
    %v3757 = vpack.c.b16 %v2427, %v2425
    %v3758 = vpack.c.b16 %v2428, %v2426
    %v3759 = vpack.c.b16 %v2431, %v2429
    %v3760 = vpack.c.b16 %v2432, %v2430
    %v3761 = vpack.c.b16 %v2435, %v2433
    %v3762 = vpack.c.b16 %v2436, %v2434
    %v3763 = vpack.c.b16 %v2439, %v2437
    %v3764 = vpack.c.b16 %v2440, %v2438
    %v3765 = vpack.c.b16 %v2443, %v2441
    %v3766 = vpack.c.b16 %v2444, %v2442
    %v3767 = vpack.c.b16 %v2447, %v2445
    %v3768 = vpack.c.b16 %v2448, %v2446
    %v3769 = vpack.c.b16 %v2451, %v2449
    %v3770 = vpack.c.b16 %v2452, %v2450
    %v3771 = vpack.c.b16 %v2455, %v2453
    %v3772 = vpack.c.b16 %v2456, %v2454
    %v3773 = vpack.c.b16 %v2459, %v2457
    %v3774 = vpack.c.b16 %v2460, %v2458
    %v3775 = vpack.c.b16 %v2463, %v2461
    %v3776 = vpack.c.b16 %v2464, %v2462
    %v3777 = vpack.c.b16 %v2467, %v2465
    %v3778 = vpack.c.b16 %v2468, %v2466
    %v3779 = vpack.c.b16 %v2471, %v2469
    %v3780 = vpack.c.b16 %v2472, %v2470
    %v3781 = vpack.c.b16 %v2475, %v2473
    %v3782 = vpack.c.b16 %v2476, %v2474
    %v3783 = vpack.c.b16 %v2479, %v2477
    %v3784 = vpack.c.b16 %v2480, %v2478
    %v3785 = vpack.c.b16 %v2483, %v2481
    %v3786 = vpack.c.b16 %v2484, %v2482
    %v3787 = vpack.c.b16 %v2487, %v2485
    %v3788 = vpack.c.b16 %v2488, %v2486
    %v3789 = vpack.c.b16 %v2491, %v2489
    %v3790 = vpack.c.b16 %v2492, %v2490
    %v3791 = vpack.c.b16 %v2495, %v2493
    %v3792 = vpack.c.b16 %v2496, %v2494
    %v3793 = vpack.c.b16 %v2499, %v2497
    %v3794 = vpack.c.b16 %v2500, %v2498
    %v3795 = vpack.c.b16 %v2503, %v2501
    %v3796 = vpack.c.b16 %v2504, %v2502
    %v3797 = vpack.c.b16 %v2507, %v2505
    %v3798 = vpack.c.b16 %v2508, %v2506
    %v3799 = vpack.c.b16 %v2511, %v2509
    %v3800 = vpack.c.b16 %v2512, %v2510
    %v3801 = vpack.c.b16 %v2515, %v2513
    %v3802 = vpack.c.b16 %v2516, %v2514
    %v3803 = vpack.c.b16 %v2519, %v2517
    %v3804 = vpack.c.b16 %v2520, %v2518
    %v3805 = vpack.c.b16 %v2523, %v2521
    %v3806 = vpack.c.b16 %v2524, %v2522
    %v3807 = vpack.c.b16 %v2527, %v2525
    %v3808 = vpack.c.b16 %v2528, %v2526
    %v3809 = vpack.c.b16 %v2531, %v2529
    %v3810 = vpack.c.b16 %v2532, %v2530
    %v3811 = vpack.c.b16 %v2535, %v2533
    %v3812 = vpack.c.b16 %v2536, %v2534
    %v3813 = vpack.c.b16 %v2539, %v2537
    %v3814 = vpack.c.b16 %v2540, %v2538
    %v3815 = vpack.c.b16 %v2543, %v2541
    %v3816 = vpack.c.b16 %v2544, %v2542
    %v3817 = vpack.c.b16 %v2547, %v2545
    %v3818 = vpack.c.b16 %v2548, %v2546
    %v3819 = vpack.c.b16 %v2551, %v2549
    %v3820 = vpack.c.b16 %v2552, %v2550
    %v3821 = vpack.c.b16 %v2555, %v2553
    %v3822 = vpack.c.b16 %v2556, %v2554
    %v3823 = vpack.c.b16 %v2559, %v2557
    %v3824 = vpack.c.b16 %v2560, %v2558
    %v3825 = vpack.c.b16 %v2563, %v2561
    %v3826 = vpack.c.b16 %v2564, %v2562
    %v3827 = vpack.c.b16 %v2567, %v2565
    %v3828 = vpack.c.b16 %v2568, %v2566
    %v3829 = vpack.c.b16 %v2571, %v2569
    %v3830 = vpack.c.b16 %v2572, %v2570
    %v3831 = vpack.c.b16 %v2575, %v2573
    %v3832 = vpack.c.b16 %v2576, %v2574
    %v3833 = vpack.c.b16 %v2579, %v2577
    %v3834 = vpack.c.b16 %v2580, %v2578
    %v3835 = vpack.c.b16 %v2583, %v2581
    %v3836 = vpack.c.b16 %v2584, %v2582
    %v3837 = vpack.c.b16 %v2587, %v2585
    %v3838 = vpack.c.b16 %v2588, %v2586
    %v3839 = vpack.c.b16 %v2591, %v2589
    %v3840 = vpack.c.b16 %v2592, %v2590
    %v3841 = vpack.c.b16 %v2595, %v2593
    %v3842 = vpack.c.b16 %v2596, %v2594
    %v3843 = vpack.c.b16 %v2599, %v2597
    %v3844 = vpack.c.b16 %v2600, %v2598
    %v3845 = vpack.c.b16 %v2603, %v2601
    %v3846 = vpack.c.b16 %v2604, %v2602
    %v3847 = vpack.c.b16 %v2607, %v2605
    %v3848 = vpack.c.b16 %v2608, %v2606
    %v3849 = vpack.c.b16 %v2611, %v2609
    %v3850 = vpack.c.b16 %v2612, %v2610
    %v3851 = vpack.c.b16 %v2615, %v2613
    %v3852 = vpack.c.b16 %v2616, %v2614
    %v3853 = vpack.c.b16 %v2619, %v2617
    %v3854 = vpack.c.b16 %v2620, %v2618
    %v3855 = vpack.c.b16 %v2623, %v2621
    %v3856 = vpack.c.b16 %v2624, %v2622
    %v3857 = vpack.c.b16 %v2627, %v2625
    %v3858 = vpack.c.b16 %v2628, %v2626
    %v3859 = vpack.c.b16 %v2631, %v2629
    %v3860 = vpack.c.b16 %v2632, %v2630
    %v3861 = vpack.c.b16 %v2635, %v2633
    %v3862 = vpack.c.b16 %v2636, %v2634
    %v3863 = vpack.c.b16 %v2639, %v2637
    %v3864 = vpack.c.b16 %v2640, %v2638
    %v3865 = vpack.c.b16 %v2643, %v2641
    %v3866 = vpack.c.b16 %v2644, %v2642
    %v3867 = vpack.c.b16 %v2647, %v2645
    %v3868 = vpack.c.b16 %v2648, %v2646
    %v3869 = vpack.c.b16 %v2651, %v2649
    %v3870 = vpack.c.b16 %v2652, %v2650
    %v3871 = vpack.c.b16 %v2655, %v2653
    %v3872 = vpack.c.b16 %v2656, %v2654
    %v3873 = vpack.c.b16 %v2659, %v2657
    %v3874 = vpack.c.b16 %v2660, %v2658
    %v3875 = vpack.c.b16 %v2663, %v2661
    %v3876 = vpack.c.b16 %v2664, %v2662
    %v3877 = vpack.c.b16 %v2667, %v2665
    %v3878 = vpack.c.b16 %v2668, %v2666
    %v3879 = vpack.c.b16 %v2671, %v2669
    %v3880 = vpack.c.b16 %v2672, %v2670
    %v3881 = vpack.c.b16 %v2675, %v2673
    %v3882 = vpack.c.b16 %v2676, %v2674
    %v3883 = vpack.c.b16 %v2679, %v2677
    %v3884 = vpack.c.b16 %v2680, %v2678
    %v3885 = vpack.c.b16 %v2683, %v2681
    %v3886 = vpack.c.b16 %v2684, %v2682
    %v3887 = vpack.c.b16 %v2687, %v2685
    %v3888 = vpack.c.b16 %v2688, %v2686
    %v3889 = vpack.c.b16 %v2691, %v2689
    %v3890 = vpack.c.b16 %v2692, %v2690
    %v3891 = vpack.c.b16 %v2695, %v2693
    %v3892 = vpack.c.b16 %v2696, %v2694
    %v3893 = vpack.c.b16 %v2699, %v2697
    %v3894 = vpack.c.b16 %v2700, %v2698
    %v3895 = vpack.c.b16 %v2703, %v2701
    %v3896 = vpack.c.b16 %v2704, %v2702
    %v3897 = vpack.c.b16 %v2707, %v2705
    %v3898 = vpack.c.b16 %v2708, %v2706
    %v3899 = vpack.c.b16 %v2711, %v2709
    %v3900 = vpack.c.b16 %v2712, %v2710
    %v3901 = vpack.c.b16 %v2715, %v2713
    %v3902 = vpack.c.b16 %v2716, %v2714
    %v3903 = vpack.c.b16 %v2719, %v2717
    %v3904 = vpack.c.b16 %v2720, %v2718
    %v3905 = vpack.c.b16 %v2723, %v2721
    %v3906 = vpack.c.b16 %v2724, %v2722
    %v3907 = vpack.c.b16 %v2727, %v2725
    %v3908 = vpack.c.b16 %v2728, %v2726
    %v3909 = vpack.c.b16 %v2731, %v2729
    %v3910 = vpack.c.b16 %v2732, %v2730
    %v3911 = vpack.c.b16 %v2735, %v2733
    %v3912 = vpack.c.b16 %v2736, %v2734
    %v3913 = vpack.c.b16 %v2739, %v2737
    %v3914 = vpack.c.b16 %v2740, %v2738
    %v3915 = vpack.c.b16 %v2743, %v2741
    %v3916 = vpack.c.b16 %v2744, %v2742
    %v3917 = vpack.c.b16 %v2747, %v2745
    %v3918 = vpack.c.b16 %v2748, %v2746
    %v3919 = vpack.c.b16 %v2751, %v2749
    %v3920 = vpack.c.b16 %v2752, %v2750
    %v3921 = vpack.c.b16 %v2755, %v2753
    %v3922 = vpack.c.b16 %v2756, %v2754
    %v3923 = vpack.c.b16 %v2759, %v2757
    %v3924 = vpack.c.b16 %v2760, %v2758
    %v3925 = vpack.c.b16 %v2763, %v2761
    %v3926 = vpack.c.b16 %v2764, %v2762
    %v3927 = vpack.c.b16 %v2767, %v2765
    %v3928 = vpack.c.b16 %v2768, %v2766
    %v3929 = vpack.c.b16 %v2771, %v2769
    %v3930 = vpack.c.b16 %v2772, %v2770
    %v3931 = vpack.c.b16 %v2775, %v2773
    %v3932 = vpack.c.b16 %v2776, %v2774
    %v3933 = vpack.c.b16 %v2779, %v2777
    %v3934 = vpack.c.b16 %v2780, %v2778
    %v3935 = vpack.c.b16 %v2783, %v2781
    %v3936 = vpack.c.b16 %v2784, %v2782
    %v3937 = vpack.c.b16 %v2787, %v2785
    %v3938 = vpack.c.b16 %v2788, %v2786
    %v3939 = vpack.c.b16 %v2791, %v2789
    %v3940 = vpack.c.b16 %v2792, %v2790
    %v3941 = vpack.c.b16 %v2795, %v2793
    %v3942 = vpack.c.b16 %v2796, %v2794
    %v3943 = vpack.c.b16 %v2799, %v2797
    %v3944 = vpack.c.b16 %v2800, %v2798
    %v3945 = vpack.c.b16 %v2803, %v2801
    %v3946 = vpack.c.b16 %v2804, %v2802
    %v3947 = vpack.c.b16 %v2807, %v2805
    %v3948 = vpack.c.b16 %v2808, %v2806
    %v3949 = vpack.c.b16 %v2811, %v2809
    %v3950 = vpack.c.b16 %v2812, %v2810
    %v3951 = vpack.c.b16 %v2815, %v2813
    %v3952 = vpack.c.b16 %v2816, %v2814
    %v3953 = vpack.c.b16 %v2819, %v2817
    %v3954 = vpack.c.b16 %v2820, %v2818
    %v3955 = vpack.c.b16 %v2823, %v2821
    %v3956 = vpack.c.b16 %v2824, %v2822
    %v3957 = vpack.c.b16 %v2827, %v2825
    %v3958 = vpack.c.b16 %v2828, %v2826
    %v3959 = vpack.c.b16 %v2831, %v2829
    %v3960 = vpack.c.b16 %v2832, %v2830
    %v3961 = vpack.c.b16 %v2835, %v2833
    %v3962 = vpack.c.b16 %v2836, %v2834
    %v3963 = vpack.c.b16 %v2839, %v2837
    %v3964 = vpack.c.b16 %v2840, %v2838
    %v3965 = vpack.c.b16 %v2843, %v2841
    %v3966 = vpack.c.b16 %v2844, %v2842
    %v3967 = vpack.c.b16 %v2847, %v2845
    %v3968 = vpack.c.b16 %v2848, %v2846
    %v3969 = vpack.c.b16 %v2851, %v2849
    %v3970 = vpack.c.b16 %v2852, %v2850
    %v3971 = vpack.c.b16 %v2855, %v2853
    %v3972 = vpack.c.b16 %v2856, %v2854
    %v3973 = vpack.c.b16 %v2859, %v2857
    %v3974 = vpack.c.b16 %v2860, %v2858
    %v3975 = vpack.c.b16 %v2863, %v2861
    %v3976 = vpack.c.b16 %v2864, %v2862
    %v3977 = vpack.c.b16 %v2867, %v2865
    %v3978 = vpack.c.b16 %v2868, %v2866
    %v3979 = vpack.c.b16 %v2871, %v2869
    %v3980 = vpack.c.b16 %v2872, %v2870
    %v3981 = vpack.c.b16 %v2875, %v2873
    %v3982 = vpack.c.b16 %v2876, %v2874
    %v3983 = vpack.c.b16 %v2879, %v2877
    %v3984 = vpack.c.b16 %v2880, %v2878
    %v3985 = vpack.c.b16 %v2883, %v2881
    %v3986 = vpack.c.b16 %v2884, %v2882
    %v3987 = vpack.c.b16 %v2887, %v2885
    %v3988 = vpack.c.b16 %v2888, %v2886
    %v3989 = vpack.c.b16 %v2891, %v2889
    %v3990 = vpack.c.b16 %v2892, %v2890
    %v3991 = vpack.c.b16 %v2895, %v2893
    %v3992 = vpack.c.b16 %v2896, %v2894
    %v3993 = vpack.c.b16 %v2899, %v2897
    %v3994 = vpack.c.b16 %v2900, %v2898
    %v3995 = vpack.c.b16 %v2903, %v2901
    %v3996 = vpack.c.b16 %v2904, %v2902
    %v3997 = vpack.c.b16 %v2907, %v2905
    %v3998 = vpack.c.b16 %v2908, %v2906
    %v3999 = vpack.c.b16 %v2911, %v2909
    %v4000 = vpack.c.b16 %v2912, %v2910
    %v4001 = vpack.c.b16 %v2915, %v2913
    %v4002 = vpack.c.b16 %v2916, %v2914
    %v4003 = vpack.c.b16 %v2919, %v2917
    %v4004 = vpack.c.b16 %v2920, %v2918
    %v4005 = vpack.c.b16 %v2923, %v2921
    %v4006 = vpack.c.b16 %v2924, %v2922
    %v4007 = vpack.c.b16 %v2927, %v2925
    %v4008 = vpack.c.b16 %v2928, %v2926
    %v4009 = vpack.c.b16 %v2931, %v2929
    %v4010 = vpack.c.b16 %v2932, %v2930
    %v4011 = vpack.c.b16 %v2935, %v2933
    %v4012 = vpack.c.b16 %v2936, %v2934
    %v4013 = vpack.c.b16 %v2939, %v2937
    %v4014 = vpack.c.b16 %v2940, %v2938
    %v4015 = vpack.c.b16 %v2943, %v2941
    %v4016 = vpack.c.b16 %v2944, %v2942
    %v4017 = vpack.c.b16 %v2947, %v2945
    %v4018 = vpack.c.b16 %v2948, %v2946
    %v4019 = vpack.c.b16 %v2951, %v2949
    %v4020 = vpack.c.b16 %v2952, %v2950
    %v4021 = vpack.c.b16 %v2955, %v2953
    %v4022 = vpack.c.b16 %v2956, %v2954
    %v4023 = vpack.c.b16 %v2959, %v2957
    %v4024 = vpack.c.b16 %v2960, %v2958
    %v4025 = vpack.c.b16 %v2963, %v2961
    %v4026 = vpack.c.b16 %v2964, %v2962
    %v4027 = vpack.c.b16 %v2967, %v2965
    %v4028 = vpack.c.b16 %v2968, %v2966
    %v4029 = vpack.c.b16 %v2971, %v2969
    %v4030 = vpack.c.b16 %v2972, %v2970
    %v4031 = vpack.c.b16 %v2975, %v2973
    %v4032 = vpack.c.b16 %v2976, %v2974
    %v4033 = vpack.c.b16 %v2979, %v2977
    %v4034 = vpack.c.b16 %v2980, %v2978
    %v4035 = vpack.c.b16 %v2983, %v2981
    %v4036 = vpack.c.b16 %v2984, %v2982
    %v4037 = vpack.c.b16 %v2987, %v2985
    %v4038 = vpack.c.b16 %v2988, %v2986
    %v4039 = vpack.c.b16 %v2991, %v2989
    %v4040 = vpack.c.b16 %v2992, %v2990
    %v4041 = vpack.c.b16 %v2995, %v2993
    %v4042 = vpack.c.b16 %v2996, %v2994
    %v4043 = vpack.c.b16 %v2999, %v2997
    %v4044 = vpack.c.b16 %v3000, %v2998
    %v4045 = vpack.c.b16 %v3003, %v3001
    %v4046 = vpack.c.b16 %v3004, %v3002
    %v4047 = vpack.c.b16 %v3007, %v3005
    %v4048 = vpack.c.b16 %v3008, %v3006
    %v4049 = vpack.c.b16 %v3011, %v3009
    %v4050 = vpack.c.b16 %v3012, %v3010
    %v4051 = vpack.c.b16 %v3015, %v3013
    %v4052 = vpack.c.b16 %v3016, %v3014
    %v4053 = vpack.c.b16 %v3019, %v3017
    %v4054 = vpack.c.b16 %v3020, %v3018
    %v4055 = vpack.c.b16 %v3023, %v3021
    %v4056 = vpack.c.b16 %v3024, %v3022
    %v4057 = vpack.c.b16 %v3027, %v3025
    %v4058 = vpack.c.b16 %v3028, %v3026
    %v4059 = vpack.c.b16 %v3031, %v3029
    %v4060 = vpack.c.b16 %v3032, %v3030
    %v4061 = vpack.c.b16 %v3035, %v3033
    %v4062 = vpack.c.b16 %v3036, %v3034
    %v4063 = vpack.c.b16 %v3039, %v3037
    %v4064 = vpack.c.b16 %v3040, %v3038
    %v4065 = vpack.c.b16 %v3043, %v3041
    %v4066 = vpack.c.b16 %v3044, %v3042
    %v4067 = vpack.c.b16 %v3047, %v3045
    %v4068 = vpack.c.b16 %v3048, %v3046
    %v4069 = vpack.c.b16 %v3051, %v3049
    %v4070 = vpack.c.b16 %v3052, %v3050
    %v4071 = vpack.c.b16 %v3055, %v3053
    %v4072 = vpack.c.b16 %v3056, %v3054
    %v4073 = vpack.c.b16 %v3059, %v3057
    %v4074 = vpack.c.b16 %v3060, %v3058
    %v4075 = vpack.c.b16 %v3063, %v3061
    %v4076 = vpack.c.b16 %v3064, %v3062
    %v4077 = vpack.c.b16 %v3067, %v3065
    %v4078 = vpack.c.b16 %v3068, %v3066
    %v4079 = vpack.c.b16 %v3071, %v3069
    %v4080 = vpack.c.b16 %v3072, %v3070
    %v4081 = vpack.c.b16 %v3075, %v3073
    %v4082 = vpack.c.b16 %v3076, %v3074
    %v4083 = vpack.c.b16 %v3079, %v3077
    %v4084 = vpack.c.b16 %v3080, %v3078
    %v4085 = vpack.c.b16 %v3083, %v3081
    %v4086 = vpack.c.b16 %v3084, %v3082
    %v4087 = vpack.c.b16 %v3087, %v3085
    %v4088 = vpack.c.b16 %v3088, %v3086
    %v4089 = vpack.c.b16 %v3091, %v3089
    %v4090 = vpack.c.b16 %v3092, %v3090
    %v4091 = vpack.c.b16 %v3095, %v3093
    %v4092 = vpack.c.b16 %v3096, %v3094
    %v4093 = vpack.c.b16 %v3099, %v3097
    %v4094 = vpack.c.b16 %v3100, %v3098
    %v4095 = vpack.c.b16 %v3103, %v3101
    %v4096 = vpack.c.b16 %v3104, %v3102
    %v4097 = vpack.c.b16 %v3107, %v3105
    %v4098 = vpack.c.b16 %v3108, %v3106
    %v4099 = vpack.c.b16 %v3111, %v3109
    %v4100 = vpack.c.b16 %v3112, %v3110
    %v4101 = vpack.c.b16 %v3115, %v3113
    %v4102 = vpack.c.b16 %v3116, %v3114
    %v4103 = vpack.c.b16 %v3119, %v3117
    %v4104 = vpack.c.b16 %v3120, %v3118
    %v4105 = vpack.c.b16 %v3123, %v3121
    %v4106 = vpack.c.b16 %v3124, %v3122
    %v4107 = vpack.c.b16 %v3127, %v3125
    %v4108 = vpack.c.b16 %v3128, %v3126
    %v4109 = vpack.c.b16 %v3131, %v3129
    %v4110 = vpack.c.b16 %v3132, %v3130
    %v4111 = vpack.c.b16 %v3135, %v3133
    %v4112 = vpack.c.b16 %v3136, %v3134
    %v4113 = vpack.c.b16 %v3139, %v3137
    %v4114 = vpack.c.b16 %v3140, %v3138
    %v4115 = vpack.c.b16 %v3143, %v3141
    %v4116 = vpack.c.b16 %v3144, %v3142
    %v4117 = vpack.c.b16 %v3147, %v3145
    %v4118 = vpack.c.b16 %v3148, %v3146
    %v4119 = vpack.c.b16 %v3151, %v3149
    %v4120 = vpack.c.b16 %v3152, %v3150
    %v4121 = vpack.c.b16 %v3155, %v3153
    %v4122 = vpack.c.b16 %v3156, %v3154
    %v4123 = vpack.c.b16 %v3159, %v3157
    %v4124 = vpack.c.b16 %v3160, %v3158
    %v4125 = vpack.c.b16 %v3163, %v3161
    %v4126 = vpack.c.b16 %v3164, %v3162
    %v4127 = vpack.c.b16 %v3167, %v3165
    %v4128 = vpack.c.b16 %v3168, %v3166
    %v4129 = vpack.c.b16 %v3171, %v3169
    %v4130 = vpack.c.b16 %v3172, %v3170
    %v4131 = vpack.c.b16 %v3175, %v3173
    %v4132 = vpack.c.b16 %v3176, %v3174
    %v4133 = vpack.c.b16 %v3179, %v3177
    %v4134 = vpack.c.b16 %v3180, %v3178
    %v4135 = vpack.c.b16 %v3183, %v3181
    %v4136 = vpack.c.b16 %v3184, %v3182
    %v4137 = vpack.c.b16 %v3187, %v3185
    %v4138 = vpack.c.b16 %v3188, %v3186
    %v4139 = vpack.c.b16 %v3191, %v3189
    %v4140 = vpack.c.b16 %v3192, %v3190
    %v4141 = vpack.c.b16 %v3195, %v3193
    %v4142 = vpack.c.b16 %v3196, %v3194
    %v4143 = vpack.c.b16 %v3199, %v3197
    %v4144 = vpack.c.b16 %v3200, %v3198
    %v4145 = vpack.c.b16 %v3203, %v3201
    %v4146 = vpack.c.b16 %v3204, %v3202
    %v4147 = vpack.c.b16 %v3207, %v3205
    %v4148 = vpack.c.b16 %v3208, %v3206
    %v4149 = vpack.c.b16 %v3211, %v3209
    %v4150 = vpack.c.b16 %v3212, %v3210
    %v4151 = vpack.c.b16 %v3215, %v3213
    %v4152 = vpack.c.b16 %v3216, %v3214
    %v4153 = vpack.c.b16 %v3219, %v3217
    %v4154 = vpack.c.b16 %v3220, %v3218
    %v4155 = vpack.c.b16 %v3223, %v3221
    %v4156 = vpack.c.b16 %v3224, %v3222
    %v4157 = vpack.c.b16 %v3227, %v3225
    %v4158 = vpack.c.b16 %v3228, %v3226
    %v4159 = vpack.c.b16 %v3231, %v3229
    %v4160 = vpack.c.b16 %v3232, %v3230
    %v4161 = vpack.c.b16 %v3235, %v3233
    %v4162 = vpack.c.b16 %v3236, %v3234
    %v4163 = vpack.c.b16 %v3239, %v3237
    %v4164 = vpack.c.b16 %v3240, %v3238
    %v4165 = vpack.c.b16 %v3243, %v3241
    %v4166 = vpack.c.b16 %v3244, %v3242
    %v4167 = vpack.c.b16 %v3247, %v3245
    %v4168 = vpack.c.b16 %v3248, %v3246
    %v4169 = vpack.c.b16 %v3251, %v3249
    %v4170 = vpack.c.b16 %v3252, %v3250
    %v4171 = vpack.c.b16 %v3255, %v3253
    %v4172 = vpack.c.b16 %v3256, %v3254
    %v4173 = vpack.c.b16 %v3259, %v3257
    %v4174 = vpack.c.b16 %v3260, %v3258
    %v4175 = vpack.c.b16 %v3263, %v3261
    %v4176 = vpack.c.b16 %v3264, %v3262
    %v4177 = vpack.c.b16 %v3267, %v3265
    %v4178 = vpack.c.b16 %v3268, %v3266
    %v4179 = vpack.c.b16 %v3271, %v3269
    %v4180 = vpack.c.b16 %v3272, %v3270
    %v4181 = vpack.c.b16 %v3275, %v3273
    %v4182 = vpack.c.b16 %v3276, %v3274
    %v4183 = vpack.c.b16 %v3279, %v3277
    %v4184 = vpack.c.b16 %v3280, %v3278
    %v4185 = vpack.c.b16 %v3283, %v3281
    %v4186 = vpack.c.b16 %v3284, %v3282
    %v4187 = vpack.c.b16 %v3287, %v3285
    %v4188 = vpack.c.b16 %v3288, %v3286
    %v4189 = vpack.c.b16 %v3291, %v3289
    %v4190 = vpack.c.b16 %v3292, %v3290
    %v4191 = vpack.c.b16 %v3295, %v3293
    %v4192 = vpack.c.b16 %v3296, %v3294
    %v4193 = vpack.c.b16 %v3299, %v3297
    %v4194 = vpack.c.b16 %v3300, %v3298
    %v4195 = vpack.c.b16 %v3303, %v3301
    %v4196 = vpack.c.b16 %v3304, %v3302
    %v4197 = vpack.c.b16 %v3307, %v3305
    %v4198 = vpack.c.b16 %v3308, %v3306
    %v4199 = vpack.c.b16 %v3311, %v3309
    %v4200 = vpack.c.b16 %v3312, %v3310
    %v4201 = vpack.c.b16 %v3315, %v3313
    %v4202 = vpack.c.b16 %v3316, %v3314
    %v4203 = vpack.c.b16 %v3319, %v3317
    %v4204 = vpack.c.b16 %v3320, %v3318
    %v4205 = vpack.c.b16 %v3323, %v3321
    %v4206 = vpack.c.b16 %v3324, %v3322
    %v4207 = vpack.c.b16 %v3327, %v3325
    %v4208 = vpack.c.b16 %v3328, %v3326
    %v4209 = vpack.c.b16 %v3331, %v3329
    %v4210 = vpack.c.b16 %v3332, %v3330
    %v4211 = vpack.c.b16 %v3335, %v3333
    %v4212 = vpack.c.b16 %v3336, %v3334
    %v4213 = vpack.c.b16 %v3339, %v3337
    %v4214 = vpack.c.b16 %v3340, %v3338
    %v4215 = vpack.c.b16 %v3343, %v3341
    %v4216 = vpack.c.b16 %v3344, %v3342
    %v4217 = vpack.c.b16 %v3347, %v3345
    %v4218 = vpack.c.b16 %v3348, %v3346
    %v4219 = vpack.c.b16 %v3351, %v3349
    %v4220 = vpack.c.b16 %v3352, %v3350
    %v4221 = vpack.c.b16 %v3355, %v3353
    %v4222 = vpack.c.b16 %v3356, %v3354
    %v4223 = vpack.c.b16 %v3359, %v3357
    %v4224 = vpack.c.b16 %v3360, %v3358
    %v4225 = vpack.c.b16 %v3363, %v3361
    %v4226 = vpack.c.b16 %v3364, %v3362
    %v4227 = vpack.c.b16 %v3367, %v3365
    %v4228 = vpack.c.b16 %v3368, %v3366
    %v4229 = vpack.c.b16 %v3371, %v3369
    %v4230 = vpack.c.b16 %v3372, %v3370
    %v4231 = vpack.c.b16 %v3375, %v3373
    %v4232 = vpack.c.b16 %v3376, %v3374
    %v4233 = vpack.c.b16 %v3379, %v3377
    %v4234 = vpack.c.b16 %v3380, %v3378
    %v4235 = vpack.c.b16 %v3383, %v3381
    %v4236 = vpack.c.b16 %v3384, %v3382
    %v4237 = vpack.c.b16 %v3387, %v3385
    %v4238 = vpack.c.b16 %v3388, %v3386
    %v4239 = vpack.c.b16 %v3391, %v3389
    %v4240 = vpack.c.b16 %v3392, %v3390
    %v4241 = vpack.c.b16 %v3395, %v3393
    %v4242 = vpack.c.b16 %v3396, %v3394
    %v4243 = vpack.c.b16 %v3399, %v3397
    %v4244 = vpack.c.b16 %v3400, %v3398
    %v4245 = vpack.c.b16 %v3403, %v3401
    %v4246 = vpack.c.b16 %v3404, %v3402
    %v4247 = vpack.c.b16 %v3407, %v3405
    %v4248 = vpack.c.b16 %v3408, %v3406
    %v4249 = vpack.c.b16 %v3411, %v3409
    %v4250 = vpack.c.b16 %v3412, %v3410
    %v4251 = vpack.c.b16 %v3415, %v3413
    %v4252 = vpack.c.b16 %v3416, %v3414
    %v4253 = vpack.c.b16 %v3419, %v3417
    %v4254 = vpack.c.b16 %v3420, %v3418
    %v4255 = vpack.c.b16 %v3423, %v3421
    %v4256 = vpack.c.b16 %v3424, %v3422
    %v4257 = vpack.c.b16 %v3427, %v3425
    %v4258 = vpack.c.b16 %v3428, %v3426
    %v4259 = vpack.c.b16 %v3431, %v3429
    %v4260 = vpack.c.b16 %v3432, %v3430
    %v4261 = vpack.c.b16 %v3435, %v3433
    %v4262 = vpack.c.b16 %v3436, %v3434
    %v4263 = vpack.c.b16 %v3439, %v3437
    %v4264 = vpack.c.b16 %v3440, %v3438
    %v4265 = vpack.c.b16 %v3443, %v3441
    %v4266 = vpack.c.b16 %v3444, %v3442
    %v4267 = vpack.c.b16 %v3447, %v3445
    %v4268 = vpack.c.b16 %v3448, %v3446
    %v4269 = vpack.c.b16 %v3451, %v3449
    %v4270 = vpack.c.b16 %v3452, %v3450
    %v4271 = vpack.c.b16 %v3455, %v3453
    %v4272 = vpack.c.b16 %v3456, %v3454
    %v4273 = vpack.c.b16 %v3459, %v3457
    %v4274 = vpack.c.b16 %v3460, %v3458
    %v4275 = vpack.c.b16 %v3463, %v3461
    %v4276 = vpack.c.b16 %v3464, %v3462
    %v4277 = vpack.c.b16 %v3467, %v3465
    %v4278 = vpack.c.b16 %v3468, %v3466
    %v4279 = vpack.c.b16 %v3471, %v3469
    %v4280 = vpack.c.b16 %v3472, %v3470
    %v4281 = vpack.c.b16 %v3475, %v3473
    %v4282 = vpack.c.b16 %v3476, %v3474
    %v4283 = vpack.c.b16 %v3479, %v3477
    %v4284 = vpack.c.b16 %v3480, %v3478
    %v4285 = vpack.c.b16 %v3483, %v3481
    %v4286 = vpack.c.b16 %v3484, %v3482
    %v4287 = vpack.c.b16 %v3487, %v3485
    %v4288 = vpack.c.b16 %v3488, %v3486
    %5089 = vmatpush.bf16.msra.mxu0 %v3503
    %5090 = vmatpush.bf16.msra.mxu0 %v3501
    %5091 = vmatpush.bf16.msra.mxu0 %v3499
    %5092 = vmatpush.bf16.msra.mxu0 %v3497
    %5093 = vmatpush.bf16.msra.mxu0 %v3495
    %5094 = vmatpush.bf16.msra.mxu0 %v3493
    %5095 = vmatpush.bf16.msra.mxu0 %v3491
    %5096 = vmatpush.bf16.msra.mxu0 %v3489
    %5097 = vmatmul.bf16.gmra.mxu0 %v233
    %v5098 = vpop.f32.mrf.mxu0
    %v5099 = vadd.f32 %v1085, %v5098
    %v5100 = vpop.f32.mrf.mxu0
    %5101 = vdwg.mxu0
    %5102 = vmatpush.bf16.msra.mxu0 %v3519
    %5103 = vmatpush.bf16.msra.mxu0 %v3517
    %5104 = vmatpush.bf16.msra.mxu0 %v3515
    %5105 = vmatpush.bf16.msra.mxu0 %v3513
    %5106 = vmatpush.bf16.msra.mxu0 %v3511
    %5107 = vmatpush.bf16.msra.mxu0 %v3509
    %5108 = vmatpush.bf16.msra.mxu0 %v3507
    %5109 = vmatpush.bf16.msra.mxu0 %v3505
    %5110 = vmatmul.bf16.gmra.mxu0 %v234
    %v5111 = vpop.f32.mrf.mxu0
    %v5112 = vadd.f32 %v5099, %v5111
    %v5113 = vpop.f32.mrf.mxu0
    %5114 = vdwg.mxu0
    %5115 = vmatpush.bf16.msra.mxu0 %v3535
    %5116 = vmatpush.bf16.msra.mxu0 %v3533
    %5117 = vmatpush.bf16.msra.mxu0 %v3531
    %5118 = vmatpush.bf16.msra.mxu0 %v3529
    %5119 = vmatpush.bf16.msra.mxu0 %v3527
    %5120 = vmatpush.bf16.msra.mxu0 %v3525
    %5121 = vmatpush.bf16.msra.mxu0 %v3523
    %5122 = vmatpush.bf16.msra.mxu0 %v3521
    %5123 = vmatmul.bf16.gmra.mxu0 %v235
    %v5124 = vpop.f32.mrf.mxu0
    %v5125 = vadd.f32 %v5112, %v5124
    %v5126 = vpop.f32.mrf.mxu0
    %5127 = vdwg.mxu0
    %5128 = vmatpush.bf16.msra.mxu0 %v3551
    %5129 = vmatpush.bf16.msra.mxu0 %v3549
    %5130 = vmatpush.bf16.msra.mxu0 %v3547
    %5131 = vmatpush.bf16.msra.mxu0 %v3545
    %5132 = vmatpush.bf16.msra.mxu0 %v3543
    %5133 = vmatpush.bf16.msra.mxu0 %v3541
    %5134 = vmatpush.bf16.msra.mxu0 %v3539
    %5135 = vmatpush.bf16.msra.mxu0 %v3537
    %5136 = vmatmul.bf16.gmra.mxu0 %v236
    %v5137 = vpop.f32.mrf.mxu0
    %v5138 = vadd.f32 %v5125, %v5137
    %v5139 = vpop.f32.mrf.mxu0
    %5140 = vdwg.mxu0
    %5141 = vmatpush.bf16.msra.mxu0 %v3567
    %5142 = vmatpush.bf16.msra.mxu0 %v3565
    %5143 = vmatpush.bf16.msra.mxu0 %v3563
    %5144 = vmatpush.bf16.msra.mxu0 %v3561
    %5145 = vmatpush.bf16.msra.mxu0 %v3559
    %5146 = vmatpush.bf16.msra.mxu0 %v3557
    %5147 = vmatpush.bf16.msra.mxu0 %v3555
    %5148 = vmatpush.bf16.msra.mxu0 %v3553
    %5149 = vmatmul.bf16.gmra.mxu0 %v237
    %v5150 = vpop.f32.mrf.mxu0
    %v5151 = vadd.f32 %v5138, %v5150
    %v5152 = vpop.f32.mrf.mxu0
    %5153 = vdwg.mxu0
    %5154 = vmatpush.bf16.msra.mxu0 %v3583
    %5155 = vmatpush.bf16.msra.mxu0 %v3581
    %5156 = vmatpush.bf16.msra.mxu0 %v3579
    %5157 = vmatpush.bf16.msra.mxu0 %v3577
    %5158 = vmatpush.bf16.msra.mxu0 %v3575
    %5159 = vmatpush.bf16.msra.mxu0 %v3573
    %5160 = vmatpush.bf16.msra.mxu0 %v3571
    %5161 = vmatpush.bf16.msra.mxu0 %v3569
    %5162 = vmatmul.bf16.gmra.mxu0 %v238
    %v5163 = vpop.f32.mrf.mxu0
    %v5164 = vadd.f32 %v5151, %v5163
    %v5165 = vpop.f32.mrf.mxu0
    %5166 = vdwg.mxu0
    %5167 = vmatpush.bf16.msra.mxu0 %v3599
    %5168 = vmatpush.bf16.msra.mxu0 %v3597
    %5169 = vmatpush.bf16.msra.mxu0 %v3595
    %5170 = vmatpush.bf16.msra.mxu0 %v3593
    %5171 = vmatpush.bf16.msra.mxu0 %v3591
    %5172 = vmatpush.bf16.msra.mxu0 %v3589
    %5173 = vmatpush.bf16.msra.mxu0 %v3587
    %5174 = vmatpush.bf16.msra.mxu0 %v3585
    %5175 = vmatmul.bf16.gmra.mxu0 %v239
    %v5176 = vpop.f32.mrf.mxu0
    %v5177 = vadd.f32 %v5164, %v5176
    %v5178 = vpop.f32.mrf.mxu0
    %5179 = vdwg.mxu0
    %5180 = vmatpush.bf16.msra.mxu0 %v3615
    %5181 = vmatpush.bf16.msra.mxu0 %v3613
    %5182 = vmatpush.bf16.msra.mxu0 %v3611
    %5183 = vmatpush.bf16.msra.mxu0 %v3609
    %5184 = vmatpush.bf16.msra.mxu0 %v3607
    %5185 = vmatpush.bf16.msra.mxu0 %v3605
    %5186 = vmatpush.bf16.msra.mxu0 %v3603
    %5187 = vmatpush.bf16.msra.mxu0 %v3601
    %5188 = vmatmul.bf16.gmra.mxu0 %v240
    %v5189 = vpop.f32.mrf.mxu0
    %v5190 = vadd.f32 %v5177, %v5189
    %v5191 = vpop.f32.mrf.mxu0
    %5192 = vdwg.mxu0
    %5193 = vmatpush.bf16.msra.mxu0 %v3631
    %5194 = vmatpush.bf16.msra.mxu0 %v3629
    %5195 = vmatpush.bf16.msra.mxu0 %v3627
    %5196 = vmatpush.bf16.msra.mxu0 %v3625
    %5197 = vmatpush.bf16.msra.mxu0 %v3623
    %5198 = vmatpush.bf16.msra.mxu0 %v3621
    %5199 = vmatpush.bf16.msra.mxu0 %v3619
    %5200 = vmatpush.bf16.msra.mxu0 %v3617
    %5201 = vmatmul.bf16.gmra.mxu0 %v241
    %v5202 = vpop.f32.mrf.mxu0
    %v5203 = vadd.f32 %v5190, %v5202
    %v5204 = vpop.f32.mrf.mxu0
    %5205 = vdwg.mxu0
    %5206 = vmatpush.bf16.msra.mxu0 %v3647
    %5207 = vmatpush.bf16.msra.mxu0 %v3645
    %5208 = vmatpush.bf16.msra.mxu0 %v3643
    %5209 = vmatpush.bf16.msra.mxu0 %v3641
    %5210 = vmatpush.bf16.msra.mxu0 %v3639
    %5211 = vmatpush.bf16.msra.mxu0 %v3637
    %5212 = vmatpush.bf16.msra.mxu0 %v3635
    %5213 = vmatpush.bf16.msra.mxu0 %v3633
    %5214 = vmatmul.bf16.gmra.mxu0 %v242
    %v5215 = vpop.f32.mrf.mxu0
    %v5216 = vadd.f32 %v5203, %v5215
    %v5217 = vpop.f32.mrf.mxu0
    %5218 = vdwg.mxu0
    %5219 = vmatpush.bf16.msra.mxu0 %v3663
    %5220 = vmatpush.bf16.msra.mxu0 %v3661
    %5221 = vmatpush.bf16.msra.mxu0 %v3659
    %5222 = vmatpush.bf16.msra.mxu0 %v3657
    %5223 = vmatpush.bf16.msra.mxu0 %v3655
    %5224 = vmatpush.bf16.msra.mxu0 %v3653
    %5225 = vmatpush.bf16.msra.mxu0 %v3651
    %5226 = vmatpush.bf16.msra.mxu0 %v3649
    %5227 = vmatmul.bf16.gmra.mxu0 %v243
    %v5228 = vpop.f32.mrf.mxu0
    %v5229 = vadd.f32 %v5216, %v5228
    %v5230 = vpop.f32.mrf.mxu0
    %5231 = vdwg.mxu0
    %5232 = vmatpush.bf16.msra.mxu0 %v3679
    %5233 = vmatpush.bf16.msra.mxu0 %v3677
    %5234 = vmatpush.bf16.msra.mxu0 %v3675
    %5235 = vmatpush.bf16.msra.mxu0 %v3673
    %5236 = vmatpush.bf16.msra.mxu0 %v3671
    %5237 = vmatpush.bf16.msra.mxu0 %v3669
    %5238 = vmatpush.bf16.msra.mxu0 %v3667
    %5239 = vmatpush.bf16.msra.mxu0 %v3665
    %5240 = vmatmul.bf16.gmra.mxu0 %v244
    %v5241 = vpop.f32.mrf.mxu0
    %v5242 = vadd.f32 %v5229, %v5241
    %v5243 = vpop.f32.mrf.mxu0
    %5244 = vdwg.mxu0
    %5245 = vmatpush.bf16.msra.mxu0 %v3695
    %5246 = vmatpush.bf16.msra.mxu0 %v3693
    %5247 = vmatpush.bf16.msra.mxu0 %v3691
    %5248 = vmatpush.bf16.msra.mxu0 %v3689
    %5249 = vmatpush.bf16.msra.mxu0 %v3687
    %5250 = vmatpush.bf16.msra.mxu0 %v3685
    %5251 = vmatpush.bf16.msra.mxu0 %v3683
    %5252 = vmatpush.bf16.msra.mxu0 %v3681
    %5253 = vmatmul.bf16.gmra.mxu0 %v245
    %v5254 = vpop.f32.mrf.mxu0
    %v5255 = vadd.f32 %v5242, %v5254
    %v5256 = vpop.f32.mrf.mxu0
    %5257 = vdwg.mxu0
    %5258 = vmatpush.bf16.msra.mxu0 %v3711
    %5259 = vmatpush.bf16.msra.mxu0 %v3709
    %5260 = vmatpush.bf16.msra.mxu0 %v3707
    %5261 = vmatpush.bf16.msra.mxu0 %v3705
    %5262 = vmatpush.bf16.msra.mxu0 %v3703
    %5263 = vmatpush.bf16.msra.mxu0 %v3701
    %5264 = vmatpush.bf16.msra.mxu0 %v3699
    %5265 = vmatpush.bf16.msra.mxu0 %v3697
    %5266 = vmatmul.bf16.gmra.mxu0 %v246
    %v5267 = vpop.f32.mrf.mxu0
    %v5268 = vadd.f32 %v5255, %v5267
    %v5269 = vpop.f32.mrf.mxu0
    %5270 = vdwg.mxu0
    %5271 = vmatpush.bf16.msra.mxu0 %v3727
    %5272 = vmatpush.bf16.msra.mxu0 %v3725
    %5273 = vmatpush.bf16.msra.mxu0 %v3723
    %5274 = vmatpush.bf16.msra.mxu0 %v3721
    %5275 = vmatpush.bf16.msra.mxu0 %v3719
    %5276 = vmatpush.bf16.msra.mxu0 %v3717
    %5277 = vmatpush.bf16.msra.mxu0 %v3715
    %5278 = vmatpush.bf16.msra.mxu0 %v3713
    %5279 = vmatmul.bf16.gmra.mxu0 %v247
    %v5280 = vpop.f32.mrf.mxu0
    %v5281 = vadd.f32 %v5268, %v5280
    %v5282 = vpop.f32.mrf.mxu0
    %5283 = vdwg.mxu0
    %5284 = vmatpush.bf16.msra.mxu0 %v3743
    %5285 = vmatpush.bf16.msra.mxu0 %v3741
    %5286 = vmatpush.bf16.msra.mxu0 %v3739
    %5287 = vmatpush.bf16.msra.mxu0 %v3737
    %5288 = vmatpush.bf16.msra.mxu0 %v3735
    %5289 = vmatpush.bf16.msra.mxu0 %v3733
    %5290 = vmatpush.bf16.msra.mxu0 %v3731
    %5291 = vmatpush.bf16.msra.mxu0 %v3729
    %5292 = vmatmul.bf16.gmra.mxu0 %v248
    %v5293 = vpop.f32.mrf.mxu0
    %v5294 = vadd.f32 %v5281, %v5293
    %v5295 = vpop.f32.mrf.mxu0
    %5296 = vdwg.mxu0
    %5297 = vmatpush.bf16.msra.mxu0 %v3759
    %5298 = vmatpush.bf16.msra.mxu0 %v3757
    %5299 = vmatpush.bf16.msra.mxu0 %v3755
    %5300 = vmatpush.bf16.msra.mxu0 %v3753
    %5301 = vmatpush.bf16.msra.mxu0 %v3751
    %5302 = vmatpush.bf16.msra.mxu0 %v3749
    %5303 = vmatpush.bf16.msra.mxu0 %v3747
    %5304 = vmatpush.bf16.msra.mxu0 %v3745
    %5305 = vmatmul.bf16.gmra.mxu0 %v249
    %v5306 = vpop.f32.mrf.mxu0
    %v5307 = vadd.f32 %v5294, %v5306
    %v5308 = vpop.f32.mrf.mxu0
    %5309 = vdwg.mxu0
    %5310 = vmatpush.bf16.msra.mxu0 %v3775
    %5311 = vmatpush.bf16.msra.mxu0 %v3773
    %5312 = vmatpush.bf16.msra.mxu0 %v3771
    %5313 = vmatpush.bf16.msra.mxu0 %v3769
    %5314 = vmatpush.bf16.msra.mxu0 %v3767
    %5315 = vmatpush.bf16.msra.mxu0 %v3765
    %5316 = vmatpush.bf16.msra.mxu0 %v3763
    %5317 = vmatpush.bf16.msra.mxu0 %v3761
    %5318 = vmatmul.bf16.gmra.mxu0 %v250
    %v5319 = vpop.f32.mrf.mxu0
    %v5320 = vadd.f32 %v5307, %v5319
    %v5321 = vpop.f32.mrf.mxu0
    %5322 = vdwg.mxu0
    %5323 = vmatpush.bf16.msra.mxu0 %v3791
    %5324 = vmatpush.bf16.msra.mxu0 %v3789
    %5325 = vmatpush.bf16.msra.mxu0 %v3787
    %5326 = vmatpush.bf16.msra.mxu0 %v3785
    %5327 = vmatpush.bf16.msra.mxu0 %v3783
    %5328 = vmatpush.bf16.msra.mxu0 %v3781
    %5329 = vmatpush.bf16.msra.mxu0 %v3779
    %5330 = vmatpush.bf16.msra.mxu0 %v3777
    %5331 = vmatmul.bf16.gmra.mxu0 %v251
    %v5332 = vpop.f32.mrf.mxu0
    %v5333 = vadd.f32 %v5320, %v5332
    %v5334 = vpop.f32.mrf.mxu0
    %5335 = vdwg.mxu0
    %5336 = vmatpush.bf16.msra.mxu0 %v3807
    %5337 = vmatpush.bf16.msra.mxu0 %v3805
    %5338 = vmatpush.bf16.msra.mxu0 %v3803
    %5339 = vmatpush.bf16.msra.mxu0 %v3801
    %5340 = vmatpush.bf16.msra.mxu0 %v3799
    %5341 = vmatpush.bf16.msra.mxu0 %v3797
    %5342 = vmatpush.bf16.msra.mxu0 %v3795
    %5343 = vmatpush.bf16.msra.mxu0 %v3793
    %5344 = vmatmul.bf16.gmra.mxu0 %v252
    %v5345 = vpop.f32.mrf.mxu0
    %v5346 = vadd.f32 %v5333, %v5345
    %v5347 = vpop.f32.mrf.mxu0
    %5348 = vdwg.mxu0
    %5349 = vmatpush.bf16.msra.mxu0 %v3823
    %5350 = vmatpush.bf16.msra.mxu0 %v3821
    %5351 = vmatpush.bf16.msra.mxu0 %v3819
    %5352 = vmatpush.bf16.msra.mxu0 %v3817
    %5353 = vmatpush.bf16.msra.mxu0 %v3815
    %5354 = vmatpush.bf16.msra.mxu0 %v3813
    %5355 = vmatpush.bf16.msra.mxu0 %v3811
    %5356 = vmatpush.bf16.msra.mxu0 %v3809
    %5357 = vmatmul.bf16.gmra.mxu0 %v253
    %v5358 = vpop.f32.mrf.mxu0
    %v5359 = vadd.f32 %v5346, %v5358
    %v5360 = vpop.f32.mrf.mxu0
    %5361 = vdwg.mxu0
    %5362 = vmatpush.bf16.msra.mxu0 %v3839
    %5363 = vmatpush.bf16.msra.mxu0 %v3837
    %5364 = vmatpush.bf16.msra.mxu0 %v3835
    %5365 = vmatpush.bf16.msra.mxu0 %v3833
    %5366 = vmatpush.bf16.msra.mxu0 %v3831
    %5367 = vmatpush.bf16.msra.mxu0 %v3829
    %5368 = vmatpush.bf16.msra.mxu0 %v3827
    %5369 = vmatpush.bf16.msra.mxu0 %v3825
    %5370 = vmatmul.bf16.gmra.mxu0 %v254
    %v5371 = vpop.f32.mrf.mxu0
    %v5372 = vadd.f32 %v5359, %v5371
    %v5373 = vpop.f32.mrf.mxu0
    %5374 = vdwg.mxu0
    %5375 = vmatpush.bf16.msra.mxu0 %v3855
    %5376 = vmatpush.bf16.msra.mxu0 %v3853
    %5377 = vmatpush.bf16.msra.mxu0 %v3851
    %5378 = vmatpush.bf16.msra.mxu0 %v3849
    %5379 = vmatpush.bf16.msra.mxu0 %v3847
    %5380 = vmatpush.bf16.msra.mxu0 %v3845
    %5381 = vmatpush.bf16.msra.mxu0 %v3843
    %5382 = vmatpush.bf16.msra.mxu0 %v3841
    %5383 = vmatmul.bf16.gmra.mxu0 %v255
    %v5384 = vpop.f32.mrf.mxu0
    %v5385 = vadd.f32 %v5372, %v5384
    %v5386 = vpop.f32.mrf.mxu0
    %5387 = vdwg.mxu0
    %5388 = vmatpush.bf16.msra.mxu0 %v3871
    %5389 = vmatpush.bf16.msra.mxu0 %v3869
    %5390 = vmatpush.bf16.msra.mxu0 %v3867
    %5391 = vmatpush.bf16.msra.mxu0 %v3865
    %5392 = vmatpush.bf16.msra.mxu0 %v3863
    %5393 = vmatpush.bf16.msra.mxu0 %v3861
    %5394 = vmatpush.bf16.msra.mxu0 %v3859
    %5395 = vmatpush.bf16.msra.mxu0 %v3857
    %5396 = vmatmul.bf16.gmra.mxu0 %v256
    %v5397 = vpop.f32.mrf.mxu0
    %v5398 = vadd.f32 %v5385, %v5397
    %v5399 = vpop.f32.mrf.mxu0
    %5400 = vdwg.mxu0
    %5401 = vmatpush.bf16.msra.mxu0 %v3887
    %5402 = vmatpush.bf16.msra.mxu0 %v3885
    %5403 = vmatpush.bf16.msra.mxu0 %v3883
    %5404 = vmatpush.bf16.msra.mxu0 %v3881
    %5405 = vmatpush.bf16.msra.mxu0 %v3879
    %5406 = vmatpush.bf16.msra.mxu0 %v3877
    %5407 = vmatpush.bf16.msra.mxu0 %v3875
    %5408 = vmatpush.bf16.msra.mxu0 %v3873
    %5409 = vmatmul.bf16.gmra.mxu0 %v257
    %v5410 = vpop.f32.mrf.mxu0
    %v5411 = vadd.f32 %v5398, %v5410
    %v5412 = vpop.f32.mrf.mxu0
    %5413 = vdwg.mxu0
    %5414 = vmatpush.bf16.msra.mxu0 %v3903
    %5415 = vmatpush.bf16.msra.mxu0 %v3901
    %5416 = vmatpush.bf16.msra.mxu0 %v3899
    %5417 = vmatpush.bf16.msra.mxu0 %v3897
    %5418 = vmatpush.bf16.msra.mxu0 %v3895
    %5419 = vmatpush.bf16.msra.mxu0 %v3893
    %5420 = vmatpush.bf16.msra.mxu0 %v3891
    %5421 = vmatpush.bf16.msra.mxu0 %v3889
    %5422 = vmatmul.bf16.gmra.mxu0 %v258
    %v5423 = vpop.f32.mrf.mxu0
    %v5424 = vadd.f32 %v5411, %v5423
    %v5425 = vpop.f32.mrf.mxu0
    %5426 = vdwg.mxu0
    %5427 = vmatpush.bf16.msra.mxu0 %v3919
    %5428 = vmatpush.bf16.msra.mxu0 %v3917
    %5429 = vmatpush.bf16.msra.mxu0 %v3915
    %5430 = vmatpush.bf16.msra.mxu0 %v3913
    %5431 = vmatpush.bf16.msra.mxu0 %v3911
    %5432 = vmatpush.bf16.msra.mxu0 %v3909
    %5433 = vmatpush.bf16.msra.mxu0 %v3907
    %5434 = vmatpush.bf16.msra.mxu0 %v3905
    %5435 = vmatmul.bf16.gmra.mxu0 %v259
    %v5436 = vpop.f32.mrf.mxu0
    %v5437 = vadd.f32 %v5424, %v5436
    %v5438 = vpop.f32.mrf.mxu0
    %5439 = vdwg.mxu0
    %5440 = vmatpush.bf16.msra.mxu0 %v3935
    %5441 = vmatpush.bf16.msra.mxu0 %v3933
    %5442 = vmatpush.bf16.msra.mxu0 %v3931
    %5443 = vmatpush.bf16.msra.mxu0 %v3929
    %5444 = vmatpush.bf16.msra.mxu0 %v3927
    %5445 = vmatpush.bf16.msra.mxu0 %v3925
    %5446 = vmatpush.bf16.msra.mxu0 %v3923
    %5447 = vmatpush.bf16.msra.mxu0 %v3921
    %5448 = vmatmul.bf16.gmra.mxu0 %v260
    %v5449 = vpop.f32.mrf.mxu0
    %v5450 = vadd.f32 %v5437, %v5449
    %v5451 = vpop.f32.mrf.mxu0
    %5452 = vdwg.mxu0
    %5453 = vmatpush.bf16.msra.mxu0 %v3951
    %5454 = vmatpush.bf16.msra.mxu0 %v3949
    %5455 = vmatpush.bf16.msra.mxu0 %v3947
    %5456 = vmatpush.bf16.msra.mxu0 %v3945
    %5457 = vmatpush.bf16.msra.mxu0 %v3943
    %5458 = vmatpush.bf16.msra.mxu0 %v3941
    %5459 = vmatpush.bf16.msra.mxu0 %v3939
    %5460 = vmatpush.bf16.msra.mxu0 %v3937
    %5461 = vmatmul.bf16.gmra.mxu0 %v261
    %v5462 = vpop.f32.mrf.mxu0
    %v5463 = vadd.f32 %v5450, %v5462
    %v5464 = vpop.f32.mrf.mxu0
    %5465 = vdwg.mxu0
    %5466 = vmatpush.bf16.msra.mxu0 %v3967
    %5467 = vmatpush.bf16.msra.mxu0 %v3965
    %5468 = vmatpush.bf16.msra.mxu0 %v3963
    %5469 = vmatpush.bf16.msra.mxu0 %v3961
    %5470 = vmatpush.bf16.msra.mxu0 %v3959
    %5471 = vmatpush.bf16.msra.mxu0 %v3957
    %5472 = vmatpush.bf16.msra.mxu0 %v3955
    %5473 = vmatpush.bf16.msra.mxu0 %v3953
    %5474 = vmatmul.bf16.gmra.mxu0 %v262
    %v5475 = vpop.f32.mrf.mxu0
    %v5476 = vadd.f32 %v5463, %v5475
    %v5477 = vpop.f32.mrf.mxu0
    %5478 = vdwg.mxu0
    %5479 = vmatpush.bf16.msra.mxu0 %v3983
    %5480 = vmatpush.bf16.msra.mxu0 %v3981
    %5481 = vmatpush.bf16.msra.mxu0 %v3979
    %5482 = vmatpush.bf16.msra.mxu0 %v3977
    %5483 = vmatpush.bf16.msra.mxu0 %v3975
    %5484 = vmatpush.bf16.msra.mxu0 %v3973
    %5485 = vmatpush.bf16.msra.mxu0 %v3971
    %5486 = vmatpush.bf16.msra.mxu0 %v3969
    %5487 = vmatmul.bf16.gmra.mxu0 %v263
    %v5488 = vpop.f32.mrf.mxu0
    %v5489 = vadd.f32 %v5476, %v5488
    %v5490 = vpop.f32.mrf.mxu0
    %5491 = vdwg.mxu0
    %5492 = vmatpush.bf16.msra.mxu0 %v3999
    %5493 = vmatpush.bf16.msra.mxu0 %v3997
    %5494 = vmatpush.bf16.msra.mxu0 %v3995
    %5495 = vmatpush.bf16.msra.mxu0 %v3993
    %5496 = vmatpush.bf16.msra.mxu0 %v3991
    %5497 = vmatpush.bf16.msra.mxu0 %v3989
    %5498 = vmatpush.bf16.msra.mxu0 %v3987
    %5499 = vmatpush.bf16.msra.mxu0 %v3985
    %5500 = vmatmul.bf16.gmra.mxu0 %v264
    %v5501 = vpop.f32.mrf.mxu0
    %v5502 = vadd.f32 %v5489, %v5501
    %v5503 = vpop.f32.mrf.mxu0
    %5504 = vdwg.mxu0
    %5505 = vmatpush.bf16.msra.mxu0 %v4015
    %5506 = vmatpush.bf16.msra.mxu0 %v4013
    %5507 = vmatpush.bf16.msra.mxu0 %v4011
    %5508 = vmatpush.bf16.msra.mxu0 %v4009
    %5509 = vmatpush.bf16.msra.mxu0 %v4007
    %5510 = vmatpush.bf16.msra.mxu0 %v4005
    %5511 = vmatpush.bf16.msra.mxu0 %v4003
    %5512 = vmatpush.bf16.msra.mxu0 %v4001
    %5513 = vmatmul.bf16.gmra.mxu0 %v265
    %v5514 = vpop.f32.mrf.mxu0
    %v5515 = vadd.f32 %v5502, %v5514
    %v5516 = vpop.f32.mrf.mxu0
    %5517 = vdwg.mxu0
    %5518 = vmatpush.bf16.msra.mxu0 %v4031
    %5519 = vmatpush.bf16.msra.mxu0 %v4029
    %5520 = vmatpush.bf16.msra.mxu0 %v4027
    %5521 = vmatpush.bf16.msra.mxu0 %v4025
    %5522 = vmatpush.bf16.msra.mxu0 %v4023
    %5523 = vmatpush.bf16.msra.mxu0 %v4021
    %5524 = vmatpush.bf16.msra.mxu0 %v4019
    %5525 = vmatpush.bf16.msra.mxu0 %v4017
    %5526 = vmatmul.bf16.gmra.mxu0 %v266
    %v5527 = vpop.f32.mrf.mxu0
    %v5528 = vadd.f32 %v5515, %v5527
    %v5529 = vpop.f32.mrf.mxu0
    %5530 = vdwg.mxu0
    %5531 = vmatpush.bf16.msra.mxu0 %v4047
    %5532 = vmatpush.bf16.msra.mxu0 %v4045
    %5533 = vmatpush.bf16.msra.mxu0 %v4043
    %5534 = vmatpush.bf16.msra.mxu0 %v4041
    %5535 = vmatpush.bf16.msra.mxu0 %v4039
    %5536 = vmatpush.bf16.msra.mxu0 %v4037
    %5537 = vmatpush.bf16.msra.mxu0 %v4035
    %5538 = vmatpush.bf16.msra.mxu0 %v4033
    %5539 = vmatmul.bf16.gmra.mxu0 %v267
    %v5540 = vpop.f32.mrf.mxu0
    %v5541 = vadd.f32 %v5528, %v5540
    %v5542 = vpop.f32.mrf.mxu0
    %5543 = vdwg.mxu0
    %5544 = vmatpush.bf16.msra.mxu0 %v4063
    %5545 = vmatpush.bf16.msra.mxu0 %v4061
    %5546 = vmatpush.bf16.msra.mxu0 %v4059
    %5547 = vmatpush.bf16.msra.mxu0 %v4057
    %5548 = vmatpush.bf16.msra.mxu0 %v4055
    %5549 = vmatpush.bf16.msra.mxu0 %v4053
    %5550 = vmatpush.bf16.msra.mxu0 %v4051
    %5551 = vmatpush.bf16.msra.mxu0 %v4049
    %5552 = vmatmul.bf16.gmra.mxu0 %v268
    %v5553 = vpop.f32.mrf.mxu0
    %v5554 = vadd.f32 %v5541, %v5553
    %v5555 = vpop.f32.mrf.mxu0
    %5556 = vdwg.mxu0
    %5557 = vmatpush.bf16.msra.mxu0 %v4079
    %5558 = vmatpush.bf16.msra.mxu0 %v4077
    %5559 = vmatpush.bf16.msra.mxu0 %v4075
    %5560 = vmatpush.bf16.msra.mxu0 %v4073
    %5561 = vmatpush.bf16.msra.mxu0 %v4071
    %5562 = vmatpush.bf16.msra.mxu0 %v4069
    %5563 = vmatpush.bf16.msra.mxu0 %v4067
    %5564 = vmatpush.bf16.msra.mxu0 %v4065
    %5565 = vmatmul.bf16.gmra.mxu0 %v269
    %v5566 = vpop.f32.mrf.mxu0
    %v5567 = vadd.f32 %v5554, %v5566
    %v5568 = vpop.f32.mrf.mxu0
    %5569 = vdwg.mxu0
    %5570 = vmatpush.bf16.msra.mxu0 %v4095
    %5571 = vmatpush.bf16.msra.mxu0 %v4093
    %5572 = vmatpush.bf16.msra.mxu0 %v4091
    %5573 = vmatpush.bf16.msra.mxu0 %v4089
    %5574 = vmatpush.bf16.msra.mxu0 %v4087
    %5575 = vmatpush.bf16.msra.mxu0 %v4085
    %5576 = vmatpush.bf16.msra.mxu0 %v4083
    %5577 = vmatpush.bf16.msra.mxu0 %v4081
    %5578 = vmatmul.bf16.gmra.mxu0 %v270
    %v5579 = vpop.f32.mrf.mxu0
    %v5580 = vadd.f32 %v5567, %v5579
    %v5581 = vpop.f32.mrf.mxu0
    %5582 = vdwg.mxu0
    %5583 = vmatpush.bf16.msra.mxu0 %v4111
    %5584 = vmatpush.bf16.msra.mxu0 %v4109
    %5585 = vmatpush.bf16.msra.mxu0 %v4107
    %5586 = vmatpush.bf16.msra.mxu0 %v4105
    %5587 = vmatpush.bf16.msra.mxu0 %v4103
    %5588 = vmatpush.bf16.msra.mxu0 %v4101
    %5589 = vmatpush.bf16.msra.mxu0 %v4099
    %5590 = vmatpush.bf16.msra.mxu0 %v4097
    %5591 = vmatmul.bf16.gmra.mxu0 %v271
    %v5592 = vpop.f32.mrf.mxu0
    %v5593 = vadd.f32 %v5580, %v5592
    %v5594 = vpop.f32.mrf.mxu0
    %5595 = vdwg.mxu0
    %5596 = vmatpush.bf16.msra.mxu0 %v4127
    %5597 = vmatpush.bf16.msra.mxu0 %v4125
    %5598 = vmatpush.bf16.msra.mxu0 %v4123
    %5599 = vmatpush.bf16.msra.mxu0 %v4121
    %5600 = vmatpush.bf16.msra.mxu0 %v4119
    %5601 = vmatpush.bf16.msra.mxu0 %v4117
    %5602 = vmatpush.bf16.msra.mxu0 %v4115
    %5603 = vmatpush.bf16.msra.mxu0 %v4113
    %5604 = vmatmul.bf16.gmra.mxu0 %v272
    %v5605 = vpop.f32.mrf.mxu0
    %v5606 = vadd.f32 %v5593, %v5605
    %v5607 = vpop.f32.mrf.mxu0
    %5608 = vdwg.mxu0
    %5609 = vmatpush.bf16.msra.mxu0 %v4143
    %5610 = vmatpush.bf16.msra.mxu0 %v4141
    %5611 = vmatpush.bf16.msra.mxu0 %v4139
    %5612 = vmatpush.bf16.msra.mxu0 %v4137
    %5613 = vmatpush.bf16.msra.mxu0 %v4135
    %5614 = vmatpush.bf16.msra.mxu0 %v4133
    %5615 = vmatpush.bf16.msra.mxu0 %v4131
    %5616 = vmatpush.bf16.msra.mxu0 %v4129
    %5617 = vmatmul.bf16.gmra.mxu0 %v273
    %v5618 = vpop.f32.mrf.mxu0
    %v5619 = vadd.f32 %v5606, %v5618
    %v5620 = vpop.f32.mrf.mxu0
    %5621 = vdwg.mxu0
    %5622 = vmatpush.bf16.msra.mxu0 %v4159
    %5623 = vmatpush.bf16.msra.mxu0 %v4157
    %5624 = vmatpush.bf16.msra.mxu0 %v4155
    %5625 = vmatpush.bf16.msra.mxu0 %v4153
    %5626 = vmatpush.bf16.msra.mxu0 %v4151
    %5627 = vmatpush.bf16.msra.mxu0 %v4149
    %5628 = vmatpush.bf16.msra.mxu0 %v4147
    %5629 = vmatpush.bf16.msra.mxu0 %v4145
    %5630 = vmatmul.bf16.gmra.mxu0 %v274
    %v5631 = vpop.f32.mrf.mxu0
    %v5632 = vadd.f32 %v5619, %v5631
    %v5633 = vpop.f32.mrf.mxu0
    %5634 = vdwg.mxu0
    %5635 = vmatpush.bf16.msra.mxu0 %v4175
    %5636 = vmatpush.bf16.msra.mxu0 %v4173
    %5637 = vmatpush.bf16.msra.mxu0 %v4171
    %5638 = vmatpush.bf16.msra.mxu0 %v4169
    %5639 = vmatpush.bf16.msra.mxu0 %v4167
    %5640 = vmatpush.bf16.msra.mxu0 %v4165
    %5641 = vmatpush.bf16.msra.mxu0 %v4163
    %5642 = vmatpush.bf16.msra.mxu0 %v4161
    %5643 = vmatmul.bf16.gmra.mxu0 %v275
    %v5644 = vpop.f32.mrf.mxu0
    %v5645 = vadd.f32 %v5632, %v5644
    %v5646 = vpop.f32.mrf.mxu0
    %5647 = vdwg.mxu0
    %5648 = vmatpush.bf16.msra.mxu0 %v4191
    %5649 = vmatpush.bf16.msra.mxu0 %v4189
    %5650 = vmatpush.bf16.msra.mxu0 %v4187
    %5651 = vmatpush.bf16.msra.mxu0 %v4185
    %5652 = vmatpush.bf16.msra.mxu0 %v4183
    %5653 = vmatpush.bf16.msra.mxu0 %v4181
    %5654 = vmatpush.bf16.msra.mxu0 %v4179
    %5655 = vmatpush.bf16.msra.mxu0 %v4177
    %5656 = vmatmul.bf16.gmra.mxu0 %v276
    %v5657 = vpop.f32.mrf.mxu0
    %v5658 = vadd.f32 %v5645, %v5657
    %v5659 = vpop.f32.mrf.mxu0
    %5660 = vdwg.mxu0
    %5661 = vmatpush.bf16.msra.mxu0 %v4207
    %5662 = vmatpush.bf16.msra.mxu0 %v4205
    %5663 = vmatpush.bf16.msra.mxu0 %v4203
    %5664 = vmatpush.bf16.msra.mxu0 %v4201
    %5665 = vmatpush.bf16.msra.mxu0 %v4199
    %5666 = vmatpush.bf16.msra.mxu0 %v4197
    %5667 = vmatpush.bf16.msra.mxu0 %v4195
    %5668 = vmatpush.bf16.msra.mxu0 %v4193
    %5669 = vmatmul.bf16.gmra.mxu0 %v277
    %v5670 = vpop.f32.mrf.mxu0
    %v5671 = vadd.f32 %v5658, %v5670
    %v5672 = vpop.f32.mrf.mxu0
    %5673 = vdwg.mxu0
    %5674 = vmatpush.bf16.msra.mxu0 %v4223
    %5675 = vmatpush.bf16.msra.mxu0 %v4221
    %5676 = vmatpush.bf16.msra.mxu0 %v4219
    %5677 = vmatpush.bf16.msra.mxu0 %v4217
    %5678 = vmatpush.bf16.msra.mxu0 %v4215
    %5679 = vmatpush.bf16.msra.mxu0 %v4213
    %5680 = vmatpush.bf16.msra.mxu0 %v4211
    %5681 = vmatpush.bf16.msra.mxu0 %v4209
    %5682 = vmatmul.bf16.gmra.mxu0 %v278
    %v5683 = vpop.f32.mrf.mxu0
    %v5684 = vadd.f32 %v5671, %v5683
    %v5685 = vpop.f32.mrf.mxu0
    %5686 = vdwg.mxu0
    %5687 = vmatpush.bf16.msra.mxu0 %v4239
    %5688 = vmatpush.bf16.msra.mxu0 %v4237
    %5689 = vmatpush.bf16.msra.mxu0 %v4235
    %5690 = vmatpush.bf16.msra.mxu0 %v4233
    %5691 = vmatpush.bf16.msra.mxu0 %v4231
    %5692 = vmatpush.bf16.msra.mxu0 %v4229
    %5693 = vmatpush.bf16.msra.mxu0 %v4227
    %5694 = vmatpush.bf16.msra.mxu0 %v4225
    %5695 = vmatmul.bf16.gmra.mxu0 %v279
    %v5696 = vpop.f32.mrf.mxu0
    %v5697 = vadd.f32 %v5684, %v5696
    %v5698 = vpop.f32.mrf.mxu0
    %5699 = vdwg.mxu0
    %5700 = vmatpush.bf16.msra.mxu0 %v4255
    %5701 = vmatpush.bf16.msra.mxu0 %v4253
    %5702 = vmatpush.bf16.msra.mxu0 %v4251
    %5703 = vmatpush.bf16.msra.mxu0 %v4249
    %5704 = vmatpush.bf16.msra.mxu0 %v4247
    %5705 = vmatpush.bf16.msra.mxu0 %v4245
    %5706 = vmatpush.bf16.msra.mxu0 %v4243
    %5707 = vmatpush.bf16.msra.mxu0 %v4241
    %5708 = vmatmul.bf16.gmra.mxu0 %v280
    %v5709 = vpop.f32.mrf.mxu0
    %v5710 = vadd.f32 %v5697, %v5709
    %v5711 = vpop.f32.mrf.mxu0
    %5712 = vdwg.mxu0
    %5713 = vmatpush.bf16.msra.mxu0 %v4271
    %5714 = vmatpush.bf16.msra.mxu0 %v4269
    %5715 = vmatpush.bf16.msra.mxu0 %v4267
    %5716 = vmatpush.bf16.msra.mxu0 %v4265
    %5717 = vmatpush.bf16.msra.mxu0 %v4263
    %5718 = vmatpush.bf16.msra.mxu0 %v4261
    %5719 = vmatpush.bf16.msra.mxu0 %v4259
    %5720 = vmatpush.bf16.msra.mxu0 %v4257
    %5721 = vmatmul.bf16.gmra.mxu0 %v281
    %v5722 = vpop.f32.mrf.mxu0
    %v5723 = vadd.f32 %v5710, %v5722
    %v5724 = vpop.f32.mrf.mxu0
    %5725 = vdwg.mxu0
    %5726 = vmatpush.bf16.msra.mxu0 %v4287
    %5727 = vmatpush.bf16.msra.mxu0 %v4285
    %5728 = vmatpush.bf16.msra.mxu0 %v4283
    %5729 = vmatpush.bf16.msra.mxu0 %v4281
    %5730 = vmatpush.bf16.msra.mxu0 %v4279
    %5731 = vmatpush.bf16.msra.mxu0 %v4277
    %5732 = vmatpush.bf16.msra.mxu0 %v4275
    %5733 = vmatpush.bf16.msra.mxu0 %v4273
    %5734 = vmatmul.bf16.gmra.mxu0 %v282
    %v5735 = vpop.f32.mrf.mxu0
    %v5736 = vadd.f32 %v5723, %v5735
    %v5737 = vpop.f32.mrf.mxu0
    %5738 = vdwg.mxu0
    %5739 = vmatpush.bf16.msra.mxu0 %v3504
    %5740 = vmatpush.bf16.msra.mxu0 %v3502
    %5741 = vmatpush.bf16.msra.mxu0 %v3500
    %5742 = vmatpush.bf16.msra.mxu0 %v3498
    %5743 = vmatpush.bf16.msra.mxu0 %v3496
    %5744 = vmatpush.bf16.msra.mxu0 %v3494
    %5745 = vmatpush.bf16.msra.mxu0 %v3492
    %5746 = vmatpush.bf16.msra.mxu0 %v3490
    %5747 = vmatmul.bf16.gmra.mxu0 %v233
    %v5748 = vpop.f32.mrf.mxu0
    %v5749 = vadd.f32 %v1086, %v5748
    %v5750 = vpop.f32.mrf.mxu0
    %5751 = vdwg.mxu0
    %5752 = vmatpush.bf16.msra.mxu0 %v3520
    %5753 = vmatpush.bf16.msra.mxu0 %v3518
    %5754 = vmatpush.bf16.msra.mxu0 %v3516
    %5755 = vmatpush.bf16.msra.mxu0 %v3514
    %5756 = vmatpush.bf16.msra.mxu0 %v3512
    %5757 = vmatpush.bf16.msra.mxu0 %v3510
    %5758 = vmatpush.bf16.msra.mxu0 %v3508
    %5759 = vmatpush.bf16.msra.mxu0 %v3506
    %5760 = vmatmul.bf16.gmra.mxu0 %v234
    %v5761 = vpop.f32.mrf.mxu0
    %v5762 = vadd.f32 %v5749, %v5761
    %v5763 = vpop.f32.mrf.mxu0
    %5764 = vdwg.mxu0
    %5765 = vmatpush.bf16.msra.mxu0 %v3536
    %5766 = vmatpush.bf16.msra.mxu0 %v3534
    %5767 = vmatpush.bf16.msra.mxu0 %v3532
    %5768 = vmatpush.bf16.msra.mxu0 %v3530
    %5769 = vmatpush.bf16.msra.mxu0 %v3528
    %5770 = vmatpush.bf16.msra.mxu0 %v3526
    %5771 = vmatpush.bf16.msra.mxu0 %v3524
    %5772 = vmatpush.bf16.msra.mxu0 %v3522
    %5773 = vmatmul.bf16.gmra.mxu0 %v235
    %v5774 = vpop.f32.mrf.mxu0
    %v5775 = vadd.f32 %v5762, %v5774
    %v5776 = vpop.f32.mrf.mxu0
    %5777 = vdwg.mxu0
    %5778 = vmatpush.bf16.msra.mxu0 %v3552
    %5779 = vmatpush.bf16.msra.mxu0 %v3550
    %5780 = vmatpush.bf16.msra.mxu0 %v3548
    %5781 = vmatpush.bf16.msra.mxu0 %v3546
    %5782 = vmatpush.bf16.msra.mxu0 %v3544
    %5783 = vmatpush.bf16.msra.mxu0 %v3542
    %5784 = vmatpush.bf16.msra.mxu0 %v3540
    %5785 = vmatpush.bf16.msra.mxu0 %v3538
    %5786 = vmatmul.bf16.gmra.mxu0 %v236
    %v5787 = vpop.f32.mrf.mxu0
    %v5788 = vadd.f32 %v5775, %v5787
    %v5789 = vpop.f32.mrf.mxu0
    %5790 = vdwg.mxu0
    %5791 = vmatpush.bf16.msra.mxu0 %v3568
    %5792 = vmatpush.bf16.msra.mxu0 %v3566
    %5793 = vmatpush.bf16.msra.mxu0 %v3564
    %5794 = vmatpush.bf16.msra.mxu0 %v3562
    %5795 = vmatpush.bf16.msra.mxu0 %v3560
    %5796 = vmatpush.bf16.msra.mxu0 %v3558
    %5797 = vmatpush.bf16.msra.mxu0 %v3556
    %5798 = vmatpush.bf16.msra.mxu0 %v3554
    %5799 = vmatmul.bf16.gmra.mxu0 %v237
    %v5800 = vpop.f32.mrf.mxu0
    %v5801 = vadd.f32 %v5788, %v5800
    %v5802 = vpop.f32.mrf.mxu0
    %5803 = vdwg.mxu0
    %5804 = vmatpush.bf16.msra.mxu0 %v3584
    %5805 = vmatpush.bf16.msra.mxu0 %v3582
    %5806 = vmatpush.bf16.msra.mxu0 %v3580
    %5807 = vmatpush.bf16.msra.mxu0 %v3578
    %5808 = vmatpush.bf16.msra.mxu0 %v3576
    %5809 = vmatpush.bf16.msra.mxu0 %v3574
    %5810 = vmatpush.bf16.msra.mxu0 %v3572
    %5811 = vmatpush.bf16.msra.mxu0 %v3570
    %5812 = vmatmul.bf16.gmra.mxu0 %v238
    %v5813 = vpop.f32.mrf.mxu0
    %v5814 = vadd.f32 %v5801, %v5813
    %v5815 = vpop.f32.mrf.mxu0
    %5816 = vdwg.mxu0
    %5817 = vmatpush.bf16.msra.mxu0 %v3600
    %5818 = vmatpush.bf16.msra.mxu0 %v3598
    %5819 = vmatpush.bf16.msra.mxu0 %v3596
    %5820 = vmatpush.bf16.msra.mxu0 %v3594
    %5821 = vmatpush.bf16.msra.mxu0 %v3592
    %5822 = vmatpush.bf16.msra.mxu0 %v3590
    %5823 = vmatpush.bf16.msra.mxu0 %v3588
    %5824 = vmatpush.bf16.msra.mxu0 %v3586
    %5825 = vmatmul.bf16.gmra.mxu0 %v239
    %v5826 = vpop.f32.mrf.mxu0
    %v5827 = vadd.f32 %v5814, %v5826
    %v5828 = vpop.f32.mrf.mxu0
    %5829 = vdwg.mxu0
    %5830 = vmatpush.bf16.msra.mxu0 %v3616
    %5831 = vmatpush.bf16.msra.mxu0 %v3614
    %5832 = vmatpush.bf16.msra.mxu0 %v3612
    %5833 = vmatpush.bf16.msra.mxu0 %v3610
    %5834 = vmatpush.bf16.msra.mxu0 %v3608
    %5835 = vmatpush.bf16.msra.mxu0 %v3606
    %5836 = vmatpush.bf16.msra.mxu0 %v3604
    %5837 = vmatpush.bf16.msra.mxu0 %v3602
    %5838 = vmatmul.bf16.gmra.mxu0 %v240
    %v5839 = vpop.f32.mrf.mxu0
    %v5840 = vadd.f32 %v5827, %v5839
    %v5841 = vpop.f32.mrf.mxu0
    %5842 = vdwg.mxu0
    %5843 = vmatpush.bf16.msra.mxu0 %v3632
    %5844 = vmatpush.bf16.msra.mxu0 %v3630
    %5845 = vmatpush.bf16.msra.mxu0 %v3628
    %5846 = vmatpush.bf16.msra.mxu0 %v3626
    %5847 = vmatpush.bf16.msra.mxu0 %v3624
    %5848 = vmatpush.bf16.msra.mxu0 %v3622
    %5849 = vmatpush.bf16.msra.mxu0 %v3620
    %5850 = vmatpush.bf16.msra.mxu0 %v3618
    %5851 = vmatmul.bf16.gmra.mxu0 %v241
    %v5852 = vpop.f32.mrf.mxu0
    %v5853 = vadd.f32 %v5840, %v5852
    %v5854 = vpop.f32.mrf.mxu0
    %5855 = vdwg.mxu0
    %5856 = vmatpush.bf16.msra.mxu0 %v3648
    %5857 = vmatpush.bf16.msra.mxu0 %v3646
    %5858 = vmatpush.bf16.msra.mxu0 %v3644
    %5859 = vmatpush.bf16.msra.mxu0 %v3642
    %5860 = vmatpush.bf16.msra.mxu0 %v3640
    %5861 = vmatpush.bf16.msra.mxu0 %v3638
    %5862 = vmatpush.bf16.msra.mxu0 %v3636
    %5863 = vmatpush.bf16.msra.mxu0 %v3634
    %5864 = vmatmul.bf16.gmra.mxu0 %v242
    %v5865 = vpop.f32.mrf.mxu0
    %v5866 = vadd.f32 %v5853, %v5865
    %v5867 = vpop.f32.mrf.mxu0
    %5868 = vdwg.mxu0
    %5869 = vmatpush.bf16.msra.mxu0 %v3664
    %5870 = vmatpush.bf16.msra.mxu0 %v3662
    %5871 = vmatpush.bf16.msra.mxu0 %v3660
    %5872 = vmatpush.bf16.msra.mxu0 %v3658
    %5873 = vmatpush.bf16.msra.mxu0 %v3656
    %5874 = vmatpush.bf16.msra.mxu0 %v3654
    %5875 = vmatpush.bf16.msra.mxu0 %v3652
    %5876 = vmatpush.bf16.msra.mxu0 %v3650
    %5877 = vmatmul.bf16.gmra.mxu0 %v243
    %v5878 = vpop.f32.mrf.mxu0
    %v5879 = vadd.f32 %v5866, %v5878
    %v5880 = vpop.f32.mrf.mxu0
    %5881 = vdwg.mxu0
    %5882 = vmatpush.bf16.msra.mxu0 %v3680
    %5883 = vmatpush.bf16.msra.mxu0 %v3678
    %5884 = vmatpush.bf16.msra.mxu0 %v3676
    %5885 = vmatpush.bf16.msra.mxu0 %v3674
    %5886 = vmatpush.bf16.msra.mxu0 %v3672
    %5887 = vmatpush.bf16.msra.mxu0 %v3670
    %5888 = vmatpush.bf16.msra.mxu0 %v3668
    %5889 = vmatpush.bf16.msra.mxu0 %v3666
    %5890 = vmatmul.bf16.gmra.mxu0 %v244
    %v5891 = vpop.f32.mrf.mxu0
    %v5892 = vadd.f32 %v5879, %v5891
    %v5893 = vpop.f32.mrf.mxu0
    %5894 = vdwg.mxu0
    %5895 = vmatpush.bf16.msra.mxu0 %v3696
    %5896 = vmatpush.bf16.msra.mxu0 %v3694
    %5897 = vmatpush.bf16.msra.mxu0 %v3692
    %5898 = vmatpush.bf16.msra.mxu0 %v3690
    %5899 = vmatpush.bf16.msra.mxu0 %v3688
    %5900 = vmatpush.bf16.msra.mxu0 %v3686
    %5901 = vmatpush.bf16.msra.mxu0 %v3684
    %5902 = vmatpush.bf16.msra.mxu0 %v3682
    %5903 = vmatmul.bf16.gmra.mxu0 %v245
    %v5904 = vpop.f32.mrf.mxu0
    %v5905 = vadd.f32 %v5892, %v5904
    %v5906 = vpop.f32.mrf.mxu0
    %5907 = vdwg.mxu0
    %5908 = vmatpush.bf16.msra.mxu0 %v3712
    %5909 = vmatpush.bf16.msra.mxu0 %v3710
    %5910 = vmatpush.bf16.msra.mxu0 %v3708
    %5911 = vmatpush.bf16.msra.mxu0 %v3706
    %5912 = vmatpush.bf16.msra.mxu0 %v3704
    %5913 = vmatpush.bf16.msra.mxu0 %v3702
    %5914 = vmatpush.bf16.msra.mxu0 %v3700
    %5915 = vmatpush.bf16.msra.mxu0 %v3698
    %5916 = vmatmul.bf16.gmra.mxu0 %v246
    %v5917 = vpop.f32.mrf.mxu0
    %v5918 = vadd.f32 %v5905, %v5917
    %v5919 = vpop.f32.mrf.mxu0
    %5920 = vdwg.mxu0
    %5921 = vmatpush.bf16.msra.mxu0 %v3728
    %5922 = vmatpush.bf16.msra.mxu0 %v3726
    %5923 = vmatpush.bf16.msra.mxu0 %v3724
    %5924 = vmatpush.bf16.msra.mxu0 %v3722
    %5925 = vmatpush.bf16.msra.mxu0 %v3720
    %5926 = vmatpush.bf16.msra.mxu0 %v3718
    %5927 = vmatpush.bf16.msra.mxu0 %v3716
    %5928 = vmatpush.bf16.msra.mxu0 %v3714
    %5929 = vmatmul.bf16.gmra.mxu0 %v247
    %v5930 = vpop.f32.mrf.mxu0
    %v5931 = vadd.f32 %v5918, %v5930
    %v5932 = vpop.f32.mrf.mxu0
    %5933 = vdwg.mxu0
    %5934 = vmatpush.bf16.msra.mxu0 %v3744
    %5935 = vmatpush.bf16.msra.mxu0 %v3742
    %5936 = vmatpush.bf16.msra.mxu0 %v3740
    %5937 = vmatpush.bf16.msra.mxu0 %v3738
    %5938 = vmatpush.bf16.msra.mxu0 %v3736
    %5939 = vmatpush.bf16.msra.mxu0 %v3734
    %5940 = vmatpush.bf16.msra.mxu0 %v3732
    %5941 = vmatpush.bf16.msra.mxu0 %v3730
    %5942 = vmatmul.bf16.gmra.mxu0 %v248
    %v5943 = vpop.f32.mrf.mxu0
    %v5944 = vadd.f32 %v5931, %v5943
    %v5945 = vpop.f32.mrf.mxu0
    %5946 = vdwg.mxu0
    %5947 = vmatpush.bf16.msra.mxu0 %v3760
    %5948 = vmatpush.bf16.msra.mxu0 %v3758
    %5949 = vmatpush.bf16.msra.mxu0 %v3756
    %5950 = vmatpush.bf16.msra.mxu0 %v3754
    %5951 = vmatpush.bf16.msra.mxu0 %v3752
    %5952 = vmatpush.bf16.msra.mxu0 %v3750
    %5953 = vmatpush.bf16.msra.mxu0 %v3748
    %5954 = vmatpush.bf16.msra.mxu0 %v3746
    %5955 = vmatmul.bf16.gmra.mxu0 %v249
    %v5956 = vpop.f32.mrf.mxu0
    %v5957 = vadd.f32 %v5944, %v5956
    %v5958 = vpop.f32.mrf.mxu0
    %5959 = vdwg.mxu0
    %5960 = vmatpush.bf16.msra.mxu0 %v3776
    %5961 = vmatpush.bf16.msra.mxu0 %v3774
    %5962 = vmatpush.bf16.msra.mxu0 %v3772
    %5963 = vmatpush.bf16.msra.mxu0 %v3770
    %5964 = vmatpush.bf16.msra.mxu0 %v3768
    %5965 = vmatpush.bf16.msra.mxu0 %v3766
    %5966 = vmatpush.bf16.msra.mxu0 %v3764
    %5967 = vmatpush.bf16.msra.mxu0 %v3762
    %5968 = vmatmul.bf16.gmra.mxu0 %v250
    %v5969 = vpop.f32.mrf.mxu0
    %v5970 = vadd.f32 %v5957, %v5969
    %v5971 = vpop.f32.mrf.mxu0
    %5972 = vdwg.mxu0
    %5973 = vmatpush.bf16.msra.mxu0 %v3792
    %5974 = vmatpush.bf16.msra.mxu0 %v3790
    %5975 = vmatpush.bf16.msra.mxu0 %v3788
    %5976 = vmatpush.bf16.msra.mxu0 %v3786
    %5977 = vmatpush.bf16.msra.mxu0 %v3784
    %5978 = vmatpush.bf16.msra.mxu0 %v3782
    %5979 = vmatpush.bf16.msra.mxu0 %v3780
    %5980 = vmatpush.bf16.msra.mxu0 %v3778
    %5981 = vmatmul.bf16.gmra.mxu0 %v251
    %v5982 = vpop.f32.mrf.mxu0
    %v5983 = vadd.f32 %v5970, %v5982
    %v5984 = vpop.f32.mrf.mxu0
    %5985 = vdwg.mxu0
    %5986 = vmatpush.bf16.msra.mxu0 %v3808
    %5987 = vmatpush.bf16.msra.mxu0 %v3806
    %5988 = vmatpush.bf16.msra.mxu0 %v3804
    %5989 = vmatpush.bf16.msra.mxu0 %v3802
    %5990 = vmatpush.bf16.msra.mxu0 %v3800
    %5991 = vmatpush.bf16.msra.mxu0 %v3798
    %5992 = vmatpush.bf16.msra.mxu0 %v3796
    %5993 = vmatpush.bf16.msra.mxu0 %v3794
    %5994 = vmatmul.bf16.gmra.mxu0 %v252
    %v5995 = vpop.f32.mrf.mxu0
    %v5996 = vadd.f32 %v5983, %v5995
    %v5997 = vpop.f32.mrf.mxu0
    %5998 = vdwg.mxu0
    %5999 = vmatpush.bf16.msra.mxu0 %v3824
    %6000 = vmatpush.bf16.msra.mxu0 %v3822
    %6001 = vmatpush.bf16.msra.mxu0 %v3820
    %6002 = vmatpush.bf16.msra.mxu0 %v3818
    %6003 = vmatpush.bf16.msra.mxu0 %v3816
    %6004 = vmatpush.bf16.msra.mxu0 %v3814
    %6005 = vmatpush.bf16.msra.mxu0 %v3812
    %6006 = vmatpush.bf16.msra.mxu0 %v3810
    %6007 = vmatmul.bf16.gmra.mxu0 %v253
    %v6008 = vpop.f32.mrf.mxu0
    %v6009 = vadd.f32 %v5996, %v6008
    %v6010 = vpop.f32.mrf.mxu0
    %6011 = vdwg.mxu0
    %6012 = vmatpush.bf16.msra.mxu0 %v3840
    %6013 = vmatpush.bf16.msra.mxu0 %v3838
    %6014 = vmatpush.bf16.msra.mxu0 %v3836
    %6015 = vmatpush.bf16.msra.mxu0 %v3834
    %6016 = vmatpush.bf16.msra.mxu0 %v3832
    %6017 = vmatpush.bf16.msra.mxu0 %v3830
    %6018 = vmatpush.bf16.msra.mxu0 %v3828
    %6019 = vmatpush.bf16.msra.mxu0 %v3826
    %6020 = vmatmul.bf16.gmra.mxu0 %v254
    %v6021 = vpop.f32.mrf.mxu0
    %v6022 = vadd.f32 %v6009, %v6021
    %v6023 = vpop.f32.mrf.mxu0
    %6024 = vdwg.mxu0
    %6025 = vmatpush.bf16.msra.mxu0 %v3856
    %6026 = vmatpush.bf16.msra.mxu0 %v3854
    %6027 = vmatpush.bf16.msra.mxu0 %v3852
    %6028 = vmatpush.bf16.msra.mxu0 %v3850
    %6029 = vmatpush.bf16.msra.mxu0 %v3848
    %6030 = vmatpush.bf16.msra.mxu0 %v3846
    %6031 = vmatpush.bf16.msra.mxu0 %v3844
    %6032 = vmatpush.bf16.msra.mxu0 %v3842
    %6033 = vmatmul.bf16.gmra.mxu0 %v255
    %v6034 = vpop.f32.mrf.mxu0
    %v6035 = vadd.f32 %v6022, %v6034
    %v6036 = vpop.f32.mrf.mxu0
    %6037 = vdwg.mxu0
    %6038 = vmatpush.bf16.msra.mxu0 %v3872
    %6039 = vmatpush.bf16.msra.mxu0 %v3870
    %6040 = vmatpush.bf16.msra.mxu0 %v3868
    %6041 = vmatpush.bf16.msra.mxu0 %v3866
    %6042 = vmatpush.bf16.msra.mxu0 %v3864
    %6043 = vmatpush.bf16.msra.mxu0 %v3862
    %6044 = vmatpush.bf16.msra.mxu0 %v3860
    %6045 = vmatpush.bf16.msra.mxu0 %v3858
    %6046 = vmatmul.bf16.gmra.mxu0 %v256
    %v6047 = vpop.f32.mrf.mxu0
    %v6048 = vadd.f32 %v6035, %v6047
    %v6049 = vpop.f32.mrf.mxu0
    %6050 = vdwg.mxu0
    %6051 = vmatpush.bf16.msra.mxu0 %v3888
    %6052 = vmatpush.bf16.msra.mxu0 %v3886
    %6053 = vmatpush.bf16.msra.mxu0 %v3884
    %6054 = vmatpush.bf16.msra.mxu0 %v3882
    %6055 = vmatpush.bf16.msra.mxu0 %v3880
    %6056 = vmatpush.bf16.msra.mxu0 %v3878
    %6057 = vmatpush.bf16.msra.mxu0 %v3876
    %6058 = vmatpush.bf16.msra.mxu0 %v3874
    %6059 = vmatmul.bf16.gmra.mxu0 %v257
    %v6060 = vpop.f32.mrf.mxu0
    %v6061 = vadd.f32 %v6048, %v6060
    %v6062 = vpop.f32.mrf.mxu0
    %6063 = vdwg.mxu0
    %6064 = vmatpush.bf16.msra.mxu0 %v3904
    %6065 = vmatpush.bf16.msra.mxu0 %v3902
    %6066 = vmatpush.bf16.msra.mxu0 %v3900
    %6067 = vmatpush.bf16.msra.mxu0 %v3898
    %6068 = vmatpush.bf16.msra.mxu0 %v3896
    %6069 = vmatpush.bf16.msra.mxu0 %v3894
    %6070 = vmatpush.bf16.msra.mxu0 %v3892
    %6071 = vmatpush.bf16.msra.mxu0 %v3890
    %6072 = vmatmul.bf16.gmra.mxu0 %v258
    %v6073 = vpop.f32.mrf.mxu0
    %v6074 = vadd.f32 %v6061, %v6073
    %v6075 = vpop.f32.mrf.mxu0
    %6076 = vdwg.mxu0
    %6077 = vmatpush.bf16.msra.mxu0 %v3920
    %6078 = vmatpush.bf16.msra.mxu0 %v3918
    %6079 = vmatpush.bf16.msra.mxu0 %v3916
    %6080 = vmatpush.bf16.msra.mxu0 %v3914
    %6081 = vmatpush.bf16.msra.mxu0 %v3912
    %6082 = vmatpush.bf16.msra.mxu0 %v3910
    %6083 = vmatpush.bf16.msra.mxu0 %v3908
    %6084 = vmatpush.bf16.msra.mxu0 %v3906
    %6085 = vmatmul.bf16.gmra.mxu0 %v259
    %v6086 = vpop.f32.mrf.mxu0
    %v6087 = vadd.f32 %v6074, %v6086
    %v6088 = vpop.f32.mrf.mxu0
    %6089 = vdwg.mxu0
    %6090 = vmatpush.bf16.msra.mxu0 %v3936
    %6091 = vmatpush.bf16.msra.mxu0 %v3934
    %6092 = vmatpush.bf16.msra.mxu0 %v3932
    %6093 = vmatpush.bf16.msra.mxu0 %v3930
    %6094 = vmatpush.bf16.msra.mxu0 %v3928
    %6095 = vmatpush.bf16.msra.mxu0 %v3926
    %6096 = vmatpush.bf16.msra.mxu0 %v3924
    %6097 = vmatpush.bf16.msra.mxu0 %v3922
    %6098 = vmatmul.bf16.gmra.mxu0 %v260
    %v6099 = vpop.f32.mrf.mxu0
    %v6100 = vadd.f32 %v6087, %v6099
    %v6101 = vpop.f32.mrf.mxu0
    %6102 = vdwg.mxu0
    %6103 = vmatpush.bf16.msra.mxu0 %v3952
    %6104 = vmatpush.bf16.msra.mxu0 %v3950
    %6105 = vmatpush.bf16.msra.mxu0 %v3948
    %6106 = vmatpush.bf16.msra.mxu0 %v3946
    %6107 = vmatpush.bf16.msra.mxu0 %v3944
    %6108 = vmatpush.bf16.msra.mxu0 %v3942
    %6109 = vmatpush.bf16.msra.mxu0 %v3940
    %6110 = vmatpush.bf16.msra.mxu0 %v3938
    %6111 = vmatmul.bf16.gmra.mxu0 %v261
    %v6112 = vpop.f32.mrf.mxu0
    %v6113 = vadd.f32 %v6100, %v6112
    %v6114 = vpop.f32.mrf.mxu0
    %6115 = vdwg.mxu0
    %6116 = vmatpush.bf16.msra.mxu0 %v3968
    %6117 = vmatpush.bf16.msra.mxu0 %v3966
    %6118 = vmatpush.bf16.msra.mxu0 %v3964
    %6119 = vmatpush.bf16.msra.mxu0 %v3962
    %6120 = vmatpush.bf16.msra.mxu0 %v3960
    %6121 = vmatpush.bf16.msra.mxu0 %v3958
    %6122 = vmatpush.bf16.msra.mxu0 %v3956
    %6123 = vmatpush.bf16.msra.mxu0 %v3954
    %6124 = vmatmul.bf16.gmra.mxu0 %v262
    %v6125 = vpop.f32.mrf.mxu0
    %v6126 = vadd.f32 %v6113, %v6125
    %v6127 = vpop.f32.mrf.mxu0
    %6128 = vdwg.mxu0
    %6129 = vmatpush.bf16.msra.mxu0 %v3984
    %6130 = vmatpush.bf16.msra.mxu0 %v3982
    %6131 = vmatpush.bf16.msra.mxu0 %v3980
    %6132 = vmatpush.bf16.msra.mxu0 %v3978
    %6133 = vmatpush.bf16.msra.mxu0 %v3976
    %6134 = vmatpush.bf16.msra.mxu0 %v3974
    %6135 = vmatpush.bf16.msra.mxu0 %v3972
    %6136 = vmatpush.bf16.msra.mxu0 %v3970
    %6137 = vmatmul.bf16.gmra.mxu0 %v263
    %v6138 = vpop.f32.mrf.mxu0
    %v6139 = vadd.f32 %v6126, %v6138
    %v6140 = vpop.f32.mrf.mxu0
    %6141 = vdwg.mxu0
    %6142 = vmatpush.bf16.msra.mxu0 %v4000
    %6143 = vmatpush.bf16.msra.mxu0 %v3998
    %6144 = vmatpush.bf16.msra.mxu0 %v3996
    %6145 = vmatpush.bf16.msra.mxu0 %v3994
    %6146 = vmatpush.bf16.msra.mxu0 %v3992
    %6147 = vmatpush.bf16.msra.mxu0 %v3990
    %6148 = vmatpush.bf16.msra.mxu0 %v3988
    %6149 = vmatpush.bf16.msra.mxu0 %v3986
    %6150 = vmatmul.bf16.gmra.mxu0 %v264
    %v6151 = vpop.f32.mrf.mxu0
    %v6152 = vadd.f32 %v6139, %v6151
    %v6153 = vpop.f32.mrf.mxu0
    %6154 = vdwg.mxu0
    %6155 = vmatpush.bf16.msra.mxu0 %v4016
    %6156 = vmatpush.bf16.msra.mxu0 %v4014
    %6157 = vmatpush.bf16.msra.mxu0 %v4012
    %6158 = vmatpush.bf16.msra.mxu0 %v4010
    %6159 = vmatpush.bf16.msra.mxu0 %v4008
    %6160 = vmatpush.bf16.msra.mxu0 %v4006
    %6161 = vmatpush.bf16.msra.mxu0 %v4004
    %6162 = vmatpush.bf16.msra.mxu0 %v4002
    %6163 = vmatmul.bf16.gmra.mxu0 %v265
    %v6164 = vpop.f32.mrf.mxu0
    %v6165 = vadd.f32 %v6152, %v6164
    %v6166 = vpop.f32.mrf.mxu0
    %6167 = vdwg.mxu0
    %6168 = vmatpush.bf16.msra.mxu0 %v4032
    %6169 = vmatpush.bf16.msra.mxu0 %v4030
    %6170 = vmatpush.bf16.msra.mxu0 %v4028
    %6171 = vmatpush.bf16.msra.mxu0 %v4026
    %6172 = vmatpush.bf16.msra.mxu0 %v4024
    %6173 = vmatpush.bf16.msra.mxu0 %v4022
    %6174 = vmatpush.bf16.msra.mxu0 %v4020
    %6175 = vmatpush.bf16.msra.mxu0 %v4018
    %6176 = vmatmul.bf16.gmra.mxu0 %v266
    %v6177 = vpop.f32.mrf.mxu0
    %v6178 = vadd.f32 %v6165, %v6177
    %v6179 = vpop.f32.mrf.mxu0
    %6180 = vdwg.mxu0
    %6181 = vmatpush.bf16.msra.mxu0 %v4048
    %6182 = vmatpush.bf16.msra.mxu0 %v4046
    %6183 = vmatpush.bf16.msra.mxu0 %v4044
    %6184 = vmatpush.bf16.msra.mxu0 %v4042
    %6185 = vmatpush.bf16.msra.mxu0 %v4040
    %6186 = vmatpush.bf16.msra.mxu0 %v4038
    %6187 = vmatpush.bf16.msra.mxu0 %v4036
    %6188 = vmatpush.bf16.msra.mxu0 %v4034
    %6189 = vmatmul.bf16.gmra.mxu0 %v267
    %v6190 = vpop.f32.mrf.mxu0
    %v6191 = vadd.f32 %v6178, %v6190
    %v6192 = vpop.f32.mrf.mxu0
    %6193 = vdwg.mxu0
    %6194 = vmatpush.bf16.msra.mxu0 %v4064
    %6195 = vmatpush.bf16.msra.mxu0 %v4062
    %6196 = vmatpush.bf16.msra.mxu0 %v4060
    %6197 = vmatpush.bf16.msra.mxu0 %v4058
    %6198 = vmatpush.bf16.msra.mxu0 %v4056
    %6199 = vmatpush.bf16.msra.mxu0 %v4054
    %6200 = vmatpush.bf16.msra.mxu0 %v4052
    %6201 = vmatpush.bf16.msra.mxu0 %v4050
    %6202 = vmatmul.bf16.gmra.mxu0 %v268
    %v6203 = vpop.f32.mrf.mxu0
    %v6204 = vadd.f32 %v6191, %v6203
    %v6205 = vpop.f32.mrf.mxu0
    %6206 = vdwg.mxu0
    %6207 = vmatpush.bf16.msra.mxu0 %v4080
    %6208 = vmatpush.bf16.msra.mxu0 %v4078
    %6209 = vmatpush.bf16.msra.mxu0 %v4076
    %6210 = vmatpush.bf16.msra.mxu0 %v4074
    %6211 = vmatpush.bf16.msra.mxu0 %v4072
    %6212 = vmatpush.bf16.msra.mxu0 %v4070
    %6213 = vmatpush.bf16.msra.mxu0 %v4068
    %6214 = vmatpush.bf16.msra.mxu0 %v4066
    %6215 = vmatmul.bf16.gmra.mxu0 %v269
    %v6216 = vpop.f32.mrf.mxu0
    %v6217 = vadd.f32 %v6204, %v6216
    %v6218 = vpop.f32.mrf.mxu0
    %6219 = vdwg.mxu0
    %6220 = vmatpush.bf16.msra.mxu0 %v4096
    %6221 = vmatpush.bf16.msra.mxu0 %v4094
    %6222 = vmatpush.bf16.msra.mxu0 %v4092
    %6223 = vmatpush.bf16.msra.mxu0 %v4090
    %6224 = vmatpush.bf16.msra.mxu0 %v4088
    %6225 = vmatpush.bf16.msra.mxu0 %v4086
    %6226 = vmatpush.bf16.msra.mxu0 %v4084
    %6227 = vmatpush.bf16.msra.mxu0 %v4082
    %6228 = vmatmul.bf16.gmra.mxu0 %v270
    %v6229 = vpop.f32.mrf.mxu0
    %v6230 = vadd.f32 %v6217, %v6229
    %v6231 = vpop.f32.mrf.mxu0
    %6232 = vdwg.mxu0
    %6233 = vmatpush.bf16.msra.mxu0 %v4112
    %6234 = vmatpush.bf16.msra.mxu0 %v4110
    %6235 = vmatpush.bf16.msra.mxu0 %v4108
    %6236 = vmatpush.bf16.msra.mxu0 %v4106
    %6237 = vmatpush.bf16.msra.mxu0 %v4104
    %6238 = vmatpush.bf16.msra.mxu0 %v4102
    %6239 = vmatpush.bf16.msra.mxu0 %v4100
    %6240 = vmatpush.bf16.msra.mxu0 %v4098
    %6241 = vmatmul.bf16.gmra.mxu0 %v271
    %v6242 = vpop.f32.mrf.mxu0
    %v6243 = vadd.f32 %v6230, %v6242
    %v6244 = vpop.f32.mrf.mxu0
    %6245 = vdwg.mxu0
    %6246 = vmatpush.bf16.msra.mxu0 %v4128
    %6247 = vmatpush.bf16.msra.mxu0 %v4126
    %6248 = vmatpush.bf16.msra.mxu0 %v4124
    %6249 = vmatpush.bf16.msra.mxu0 %v4122
    %6250 = vmatpush.bf16.msra.mxu0 %v4120
    %6251 = vmatpush.bf16.msra.mxu0 %v4118
    %6252 = vmatpush.bf16.msra.mxu0 %v4116
    %6253 = vmatpush.bf16.msra.mxu0 %v4114
    %6254 = vmatmul.bf16.gmra.mxu0 %v272
    %v6255 = vpop.f32.mrf.mxu0
    %v6256 = vadd.f32 %v6243, %v6255
    %v6257 = vpop.f32.mrf.mxu0
    %6258 = vdwg.mxu0
    %6259 = vmatpush.bf16.msra.mxu0 %v4144
    %6260 = vmatpush.bf16.msra.mxu0 %v4142
    %6261 = vmatpush.bf16.msra.mxu0 %v4140
    %6262 = vmatpush.bf16.msra.mxu0 %v4138
    %6263 = vmatpush.bf16.msra.mxu0 %v4136
    %6264 = vmatpush.bf16.msra.mxu0 %v4134
    %6265 = vmatpush.bf16.msra.mxu0 %v4132
    %6266 = vmatpush.bf16.msra.mxu0 %v4130
    %6267 = vmatmul.bf16.gmra.mxu0 %v273
    %v6268 = vpop.f32.mrf.mxu0
    %v6269 = vadd.f32 %v6256, %v6268
    %v6270 = vpop.f32.mrf.mxu0
    %6271 = vdwg.mxu0
    %6272 = vmatpush.bf16.msra.mxu0 %v4160
    %6273 = vmatpush.bf16.msra.mxu0 %v4158
    %6274 = vmatpush.bf16.msra.mxu0 %v4156
    %6275 = vmatpush.bf16.msra.mxu0 %v4154
    %6276 = vmatpush.bf16.msra.mxu0 %v4152
    %6277 = vmatpush.bf16.msra.mxu0 %v4150
    %6278 = vmatpush.bf16.msra.mxu0 %v4148
    %6279 = vmatpush.bf16.msra.mxu0 %v4146
    %6280 = vmatmul.bf16.gmra.mxu0 %v274
    %v6281 = vpop.f32.mrf.mxu0
    %v6282 = vadd.f32 %v6269, %v6281
    %v6283 = vpop.f32.mrf.mxu0
    %6284 = vdwg.mxu0
    %6285 = vmatpush.bf16.msra.mxu0 %v4176
    %6286 = vmatpush.bf16.msra.mxu0 %v4174
    %6287 = vmatpush.bf16.msra.mxu0 %v4172
    %6288 = vmatpush.bf16.msra.mxu0 %v4170
    %6289 = vmatpush.bf16.msra.mxu0 %v4168
    %6290 = vmatpush.bf16.msra.mxu0 %v4166
    %6291 = vmatpush.bf16.msra.mxu0 %v4164
    %6292 = vmatpush.bf16.msra.mxu0 %v4162
    %6293 = vmatmul.bf16.gmra.mxu0 %v275
    %v6294 = vpop.f32.mrf.mxu0
    %v6295 = vadd.f32 %v6282, %v6294
    %v6296 = vpop.f32.mrf.mxu0
    %6297 = vdwg.mxu0
    %6298 = vmatpush.bf16.msra.mxu0 %v4192
    %6299 = vmatpush.bf16.msra.mxu0 %v4190
    %6300 = vmatpush.bf16.msra.mxu0 %v4188
    %6301 = vmatpush.bf16.msra.mxu0 %v4186
    %6302 = vmatpush.bf16.msra.mxu0 %v4184
    %6303 = vmatpush.bf16.msra.mxu0 %v4182
    %6304 = vmatpush.bf16.msra.mxu0 %v4180
    %6305 = vmatpush.bf16.msra.mxu0 %v4178
    %6306 = vmatmul.bf16.gmra.mxu0 %v276
    %v6307 = vpop.f32.mrf.mxu0
    %v6308 = vadd.f32 %v6295, %v6307
    %v6309 = vpop.f32.mrf.mxu0
    %6310 = vdwg.mxu0
    %6311 = vmatpush.bf16.msra.mxu0 %v4208
    %6312 = vmatpush.bf16.msra.mxu0 %v4206
    %6313 = vmatpush.bf16.msra.mxu0 %v4204
    %6314 = vmatpush.bf16.msra.mxu0 %v4202
    %6315 = vmatpush.bf16.msra.mxu0 %v4200
    %6316 = vmatpush.bf16.msra.mxu0 %v4198
    %6317 = vmatpush.bf16.msra.mxu0 %v4196
    %6318 = vmatpush.bf16.msra.mxu0 %v4194
    %6319 = vmatmul.bf16.gmra.mxu0 %v277
    %v6320 = vpop.f32.mrf.mxu0
    %v6321 = vadd.f32 %v6308, %v6320
    %v6322 = vpop.f32.mrf.mxu0
    %6323 = vdwg.mxu0
    %6324 = vmatpush.bf16.msra.mxu0 %v4224
    %6325 = vmatpush.bf16.msra.mxu0 %v4222
    %6326 = vmatpush.bf16.msra.mxu0 %v4220
    %6327 = vmatpush.bf16.msra.mxu0 %v4218
    %6328 = vmatpush.bf16.msra.mxu0 %v4216
    %6329 = vmatpush.bf16.msra.mxu0 %v4214
    %6330 = vmatpush.bf16.msra.mxu0 %v4212
    %6331 = vmatpush.bf16.msra.mxu0 %v4210
    %6332 = vmatmul.bf16.gmra.mxu0 %v278
    %v6333 = vpop.f32.mrf.mxu0
    %v6334 = vadd.f32 %v6321, %v6333
    %v6335 = vpop.f32.mrf.mxu0
    %6336 = vdwg.mxu0
    %6337 = vmatpush.bf16.msra.mxu0 %v4240
    %6338 = vmatpush.bf16.msra.mxu0 %v4238
    %6339 = vmatpush.bf16.msra.mxu0 %v4236
    %6340 = vmatpush.bf16.msra.mxu0 %v4234
    %6341 = vmatpush.bf16.msra.mxu0 %v4232
    %6342 = vmatpush.bf16.msra.mxu0 %v4230
    %6343 = vmatpush.bf16.msra.mxu0 %v4228
    %6344 = vmatpush.bf16.msra.mxu0 %v4226
    %6345 = vmatmul.bf16.gmra.mxu0 %v279
    %v6346 = vpop.f32.mrf.mxu0
    %v6347 = vadd.f32 %v6334, %v6346
    %v6348 = vpop.f32.mrf.mxu0
    %6349 = vdwg.mxu0
    %6350 = vmatpush.bf16.msra.mxu0 %v4256
    %6351 = vmatpush.bf16.msra.mxu0 %v4254
    %6352 = vmatpush.bf16.msra.mxu0 %v4252
    %6353 = vmatpush.bf16.msra.mxu0 %v4250
    %6354 = vmatpush.bf16.msra.mxu0 %v4248
    %6355 = vmatpush.bf16.msra.mxu0 %v4246
    %6356 = vmatpush.bf16.msra.mxu0 %v4244
    %6357 = vmatpush.bf16.msra.mxu0 %v4242
    %6358 = vmatmul.bf16.gmra.mxu0 %v280
    %v6359 = vpop.f32.mrf.mxu0
    %v6360 = vadd.f32 %v6347, %v6359
    %v6361 = vpop.f32.mrf.mxu0
    %6362 = vdwg.mxu0
    %6363 = vmatpush.bf16.msra.mxu0 %v4272
    %6364 = vmatpush.bf16.msra.mxu0 %v4270
    %6365 = vmatpush.bf16.msra.mxu0 %v4268
    %6366 = vmatpush.bf16.msra.mxu0 %v4266
    %6367 = vmatpush.bf16.msra.mxu0 %v4264
    %6368 = vmatpush.bf16.msra.mxu0 %v4262
    %6369 = vmatpush.bf16.msra.mxu0 %v4260
    %6370 = vmatpush.bf16.msra.mxu0 %v4258
    %6371 = vmatmul.bf16.gmra.mxu0 %v281
    %v6372 = vpop.f32.mrf.mxu0
    %v6373 = vadd.f32 %v6360, %v6372
    %v6374 = vpop.f32.mrf.mxu0
    %6375 = vdwg.mxu0
    %6376 = vmatpush.bf16.msra.mxu0 %v4288
    %6377 = vmatpush.bf16.msra.mxu0 %v4286
    %6378 = vmatpush.bf16.msra.mxu0 %v4284
    %6379 = vmatpush.bf16.msra.mxu0 %v4282
    %6380 = vmatpush.bf16.msra.mxu0 %v4280
    %6381 = vmatpush.bf16.msra.mxu0 %v4278
    %6382 = vmatpush.bf16.msra.mxu0 %v4276
    %6383 = vmatpush.bf16.msra.mxu0 %v4274
    %6384 = vmatmul.bf16.gmra.mxu0 %v282
    %v6385 = vpop.f32.mrf.mxu0
    %v6386 = vadd.f32 %v6373, %v6385
    %v6387 = vpop.f32.mrf.mxu0
    %6388 = vdwg.mxu0
    %v6389 = vmax.f32 %v5736, 0.0
    %v6390 = vmax.f32 %v6386, 0.0
    %v6391 = vpack.c.bf16 %v6389, %v6389
    %v6392 = vpack.c.bf16 %v6390, %v6390
    %v6393 = vld [vmem:[#allocation8] sm:$0xf]
    %v6394 = vld [vmem:[#allocation8 + $0x4] sm:$0xf]
    %v6395 = vld [vmem:[#allocation8 + $0x8] sm:$0xf]
    %v6396 = vld [vmem:[#allocation8 + $0xc] sm:$0xf]
    %v6397 = vld [vmem:[#allocation8 + $0x10] sm:$0xf]
    %v6398 = vld [vmem:[#allocation8 + $0x14] sm:$0xf]
    %v6399 = vld [vmem:[#allocation8 + $0x18] sm:$0xf]
    %v6400 = vld [vmem:[#allocation8 + $0x1c] sm:$0xf]
    %v6401 = vld [vmem:[#allocation8 + $0x20] sm:$0xf]
    %v6402 = vld [vmem:[#allocation8 + $0x24] sm:$0xf]
    %v6403 = vld [vmem:[#allocation8 + $0x28] sm:$0xf]
    %v6404 = vld [vmem:[#allocation8 + $0x2c] sm:$0xf]
    %v6405 = vld [vmem:[#allocation8 + $0x30] sm:$0xf]
    %v6406 = vld [vmem:[#allocation8 + $0x34] sm:$0xf]
    %v6407 = vld [vmem:[#allocation8 + $0x38] sm:$0xf]
    %v6408 = vld [vmem:[#allocation8 + $0x3c] sm:$0xf]
    %v6409 = vld [vmem:[#allocation8 + $0x40] sm:$0xf]
    %v6410 = vld [vmem:[#allocation8 + $0x44] sm:$0xf]
    %v6411 = vld [vmem:[#allocation8 + $0x48] sm:$0xf]
    %v6412 = vld [vmem:[#allocation8 + $0x4c] sm:$0xf]
    %v6413 = vld [vmem:[#allocation8 + $0x50] sm:$0xf]
    %v6414 = vld [vmem:[#allocation8 + $0x54] sm:$0xf]
    %v6415 = vld [vmem:[#allocation8 + $0x58] sm:$0xf]
    %v6416 = vld [vmem:[#allocation8 + $0x5c] sm:$0xf]
    %v6417 = vld [vmem:[#allocation8 + $0x60] sm:$0xf]
    %v6418 = vld [vmem:[#allocation8 + $0x64] sm:$0xf]
    %v6419 = vld [vmem:[#allocation8 + $0x68] sm:$0xf]
    %v6420 = vld [vmem:[#allocation8 + $0x6c] sm:$0xf]
    %v6421 = vld [vmem:[#allocation8 + $0x70] sm:$0xf]
    %v6422 = vld [vmem:[#allocation8 + $0x74] sm:$0xf]
    %v6423 = vld [vmem:[#allocation8 + $0x78] sm:$0xf]
    %v6424 = vld [vmem:[#allocation8 + $0x7c] sm:$0xf]
    %v6425 = vld [vmem:[#allocation10] sm:$0x1]
    %v6427 = vperm.slane %v6425, 0
    %v6461 = vunpack.c.l.b16 %v6393
    %v6462 = vunpack.c.l.b16 %v6394
    %v6463 = vunpack.c.l.b16 %v6395
    %v6464 = vunpack.c.l.b16 %v6396
    %v6465 = vunpack.c.l.b16 %v6397
    %v6466 = vunpack.c.l.b16 %v6398
    %v6467 = vunpack.c.l.b16 %v6399
    %v6468 = vunpack.c.l.b16 %v6400
    %v6469 = vunpack.c.l.b16 %v6401
    %v6470 = vunpack.c.l.b16 %v6402
    %v6471 = vunpack.c.l.b16 %v6403
    %v6472 = vunpack.c.l.b16 %v6404
    %v6473 = vunpack.c.l.b16 %v6405
    %v6474 = vunpack.c.l.b16 %v6406
    %v6475 = vunpack.c.l.b16 %v6407
    %v6476 = vunpack.c.l.b16 %v6408
    %v6477 = vunpack.c.l.b16 %v6409
    %v6478 = vunpack.c.l.b16 %v6410
    %v6479 = vunpack.c.l.b16 %v6411
    %v6480 = vunpack.c.l.b16 %v6412
    %v6481 = vunpack.c.l.b16 %v6413
    %v6482 = vunpack.c.l.b16 %v6414
    %v6483 = vunpack.c.l.b16 %v6415
    %v6484 = vunpack.c.l.b16 %v6416
    %v6485 = vunpack.c.l.b16 %v6417
    %v6486 = vunpack.c.l.b16 %v6418
    %v6487 = vunpack.c.l.b16 %v6419
    %v6488 = vunpack.c.l.b16 %v6420
    %v6489 = vunpack.c.l.b16 %v6421
    %v6490 = vunpack.c.l.b16 %v6422
    %v6491 = vunpack.c.l.b16 %v6423
    %v6492 = vunpack.c.l.b16 %v6424
    %v6493 = vpack.c.b16 %v6462, %v6461
    %v6494 = vpack.c.b16 %v6464, %v6463
    %v6495 = vpack.c.b16 %v6466, %v6465
    %v6496 = vpack.c.b16 %v6468, %v6467
    %v6497 = vpack.c.b16 %v6470, %v6469
    %v6498 = vpack.c.b16 %v6472, %v6471
    %v6499 = vpack.c.b16 %v6474, %v6473
    %v6500 = vpack.c.b16 %v6476, %v6475
    %v6501 = vpack.c.b16 %v6478, %v6477
    %v6502 = vpack.c.b16 %v6480, %v6479
    %v6503 = vpack.c.b16 %v6482, %v6481
    %v6504 = vpack.c.b16 %v6484, %v6483
    %v6505 = vpack.c.b16 %v6486, %v6485
    %v6506 = vpack.c.b16 %v6488, %v6487
    %v6507 = vpack.c.b16 %v6490, %v6489
    %v6508 = vpack.c.b16 %v6492, %v6491
    %6525 = vmatpush.bf16.msra.mxu0 %v6500
    %6526 = vmatpush.bf16.msra.mxu0 %v6499
    %6527 = vmatpush.bf16.msra.mxu0 %v6498
    %6528 = vmatpush.bf16.msra.mxu0 %v6497
    %6529 = vmatpush.bf16.msra.mxu0 %v6496
    %6530 = vmatpush.bf16.msra.mxu0 %v6495
    %6531 = vmatpush.bf16.msra.mxu0 %v6494
    %6532 = vmatpush.bf16.msra.mxu0 %v6493
    %6533 = vmatmul.bf16.gmra.mxu0 %v6391
    %v6534 = vpop.f32.mrf.mxu0
    %v6535 = vadd.f32 %v6427, %v6534
    %v6536 = vpop.f32.mrf.mxu0
    %6537 = vdwg.mxu0
    %6538 = vmatpush.bf16.msra.mxu0 %v6508
    %6539 = vmatpush.bf16.msra.mxu0 %v6507
    %6540 = vmatpush.bf16.msra.mxu0 %v6506
    %6541 = vmatpush.bf16.msra.mxu0 %v6505
    %6542 = vmatpush.bf16.msra.mxu0 %v6504
    %6543 = vmatpush.bf16.msra.mxu0 %v6503
    %6544 = vmatpush.bf16.msra.mxu0 %v6502
    %6545 = vmatpush.bf16.msra.mxu0 %v6501
    %6546 = vmatmul.bf16.gmra.mxu0 %v6392
    %v6547 = vpop.f32.mrf.mxu0
    %v6548 = vadd.f32 %v6535, %v6547
    %v6549 = vpop.f32.mrf.mxu0
    %6550 = vdwg.mxu0
    %v6551 = vlaneseq
    %v6552 = vand.u32 %v6551, 127
    %v6553 = vlaneseq
    %v6554 = vshrl.u32 %v6553, 7
    %s6555 = smul.u32 0, 2
    %v6556 = vstv %s6555
    %v6557 = vadd.s32 %v6554, %v6556
    %vm6558 = vcmp.lt.s32.totalorder %v6552, 3
    %vm6559 = vcmp.lt.s32.totalorder %v6557, 2
    %vm6560 = vmand %vm6558, %vm6559
    %v6561 = vsel %vm6560, %v6548, -1e+30
    %vm6562 = vcmask 1041408
    %v6563 = vsel %vm6562, %v6561, -inf
    %6564 = vmax.xlane.f32.xlu0 %v6563
    %v6565 = vpop.xlane.xlu0 %6564
    %v6566 = vsub.f32 %v6561, %v6565
    %v6567 = vmul.f32 %v6566, 1.442695
    %v6568 = vpow.pop %v6567
    %v6569 = vsel %vm6562, %v6568, 0.0
    %6570 = vadd.xlane.f32.xlu0 %v6569
    %v6571 = vpop.xlane.xlu0 %6570
    %v6572 = vrcp.pop %v6571
    %v6573 = vmul.f32 %v6568, %v6572
    %6574 = vst [vmem:[#allocation11] sm:$0x3] %v6573
    // Predicated region
    $region42: #{tpu_custom_call.1} parent=1 // pred_check
      _
    $region43: #{tpu_custom_call.1} parent=1 // pred_check_branch
      %6576 = sbr.rel (0) target = $region45
    $region44: #{tpu_custom_call.1} parent=1 // pred_region
      %6578 = vsyncadd [#allocation4], 0
      %s6580 = sshll.u32 [#allocation11], 4
      %s6581 = int_to_ptr.vmem [resolvable:$true] %s6580
      %s6582 = sshll.u32 %s5, 4
      %s6583 = int_to_ptr.hbm [resolvable:$true] %s6582
      %6585 = dma.vmem_to_hbm [thread:$0]  %s6581, 32, %s6583, [#allocation4]
    $region45: #{tpu_custom_call.1} parent=1 // pred_fallthru
      _
    // Predicated region
    $region46: #{tpu_custom_call.1} parent=1 // pred_check
      _
    $region47: #{tpu_custom_call.1} parent=1 // pred_check_branch
      %6587 = sbr.rel (0) target = $region49
    $region48: #{tpu_custom_call.1} parent=1 // pred_region
      %6589 = dma.done [#allocation4], 32
    $region49: #{tpu_custom_call.1} parent=1 // pred_fallthru
      _
    %6590 = vsyncpa [#allocation3], 1
    %6591 = vsyncpa [#allocation6], 1
    %6592 = vsyncpa [#allocation9], 1
    %6593 = vsyncpa [#allocation4], 1

</llo_original>
